<compile_context>
chip_gen: v6e
topology: v6e:2x2x1
jax: 0.10.0
libtpu: 0.0.40
codegen_flags: <defaults>
</compile_context>

<pallas_src>
import functools

import jax
import jax.numpy as jnp
import numpy as np
from jax.experimental import pallas as pl
from jax.experimental.pallas import tpu as pltpu


def _attention_kernel(x_ref, wqkv_ref, wproj_ref, bproj_ref, o_ref, *,
                      num_heads, head_dim):
    C = num_heads * head_dim
    x = x_ref[0]                                                   # (C, N) bf16

    # Fused qkv 1x1 conv: ONE (3C, C) x (C, N) bf16 MXU matmul, f32 accumulate.
    # Rows are [q heads | k heads | v heads], head-major, with the qk scale
    # already folded into the q rows by fuse_attention_params().
    qkv = jnp.dot(wqkv_ref[...], x, preferred_element_type=jnp.float32)  # (3C, N) f32

    # Per-head attention. head_dim == 8 == the f32 sublane tile, so every row
    # slice below is tile-aligned (a free view).  The static nh-way unroll
    # issues the same vmatmul stream a batched dot_general would while keeping
    # every matmul in a canonical 2-D form.
    head_outs = []
    for h in range(num_heads):
        lo = h * head_dim
        q_h = qkv[lo:lo + head_dim]                        # (hd, Nq) f32, pre-scaled
        k_h = qkv[C + lo:C + lo + head_dim]                # (hd, Nk) f32
        v_h = qkv[2 * C + lo:2 * C + lo + head_dim]        # (hd, Nk) f32

        # logits[i, j] = sum_d k[d, i] * q[d, j]  == torch attn[i, j]
        # (TN dot_general: contract the head_dim sublane axis of both; no
        #  explicit transpose, no narrow lane slicing).
        logits = jax.lax.dot_general(
            k_h, q_h, (((0,), (0,)), ((), ())),
            preferred_element_type=jnp.float32)            # (Nk, Nq) f32

        # torch softmax(dim=-2) is over the key index i == sublane axis here.
        m = jnp.max(logits, axis=0, keepdims=True)         # (1, Nq)
        e = jnp.exp(logits - m)                            # f32 exp (v5e-safe)
        s = jnp.sum(e, axis=0, keepdims=True)              # (1, Nq)

        # out[d, j] = sum_i v[d, i] * softmax[i, j]; bf16 operands on the MXU,
        # normalization deferred to the small (hd, Nq) result (EUP reciprocal,
        # broadcasts over the hd sublanes).
        u = jnp.dot(v_h.astype(jnp.bfloat16), e.astype(jnp.bfloat16),
                    preferred_element_type=jnp.float32)    # (hd, Nq) f32
        head_outs.append(u * pl.reciprocal(s, approx=True))

    # Head-major concat along sublanes == original channel order (c = h*hd+d).
    attn_out = jnp.concatenate(head_outs, axis=0)          # (C, N) f32

    # Fused proj 1x1 conv: ONE (C, C) x (C, N) bf16 matmul + per-channel bias,
    # single (C, N) store per batch element.
    y = jnp.dot(wproj_ref[...], attn_out.astype(jnp.bfloat16),
                preferred_element_type=jnp.float32)        # (C, N) f32
    o_ref[0] = (y + bproj_ref[...]).astype(o_ref.dtype)


def fuse_attention_params(w_qkv, w_proj, b_proj, *, num_heads):
    """One-time weight fusion (call at model init, NOT per forward).

    Reproduces torch's reshape(B, nh, 3*hd, N).chunk(3, dim=2) channel
    grouping, reorders the qkv output rows head-major as [q_all|k_all|v_all],
    folds the qk scale into the q rows, and casts the MXU weights to bf16.
    """
    three_c, C = w_qkv.shape
    hd = C // num_heads
    scale = hd ** (-0.5)
    w = w_qkv.reshape(num_heads, 3 * hd, C)
    wq = (w[:, :hd] * scale).reshape(C, C)                 # fold qk scale into q
    wk = w[:, hd:2 * hd].reshape(C, C)
    wv = w[:, 2 * hd:].reshape(C, C)
    wqkv_fused = jnp.concatenate([wq, wk, wv], axis=0).astype(jnp.bfloat16)  # (3C, C)
    wproj = w_proj.astype(jnp.bfloat16)                    # (C, C), channel order preserved
    bproj = b_proj.reshape(C, 1).astype(jnp.float32)       # broadcasts over N lanes
    return wqkv_fused, wproj, bproj


def attention_forward(x, fused_params, *, num_heads):
    """x: (B, C, H, W) float32; fused_params from fuse_attention_params()."""
    wqkv_fused, wproj, bproj = fused_params
    B, C, H, W = x.shape
    N = H * W
    hd = C // num_heads

    # NCHW -> (B, C, N) is a free reshape (no HBM transpose); bf16 halves the
    # activation-tile HBM/VMEM traffic on the kernel boundary.
    x_cn = x.reshape(B, C, N).astype(jnp.bfloat16)

    kernel = functools.partial(_attention_kernel, num_heads=num_heads, head_dim=hd)
    out = pl.pallas_call(
        kernel,
        out_shape=jax.ShapeDtypeStruct((B, C, N), jnp.float32),
        grid_spec=pltpu.PrefetchScalarGridSpec(
            num_scalar_prefetch=0,
            grid=(B,),
            in_specs=[
                pl.BlockSpec((1, C, N), lambda b: (b, 0, 0)),     # x tokens (C, N)
                pl.BlockSpec((3 * C, C), lambda b: (0, 0)),       # fused Wqkv (bf16)
                pl.BlockSpec((C, C), lambda b: (0, 0)),           # Wproj (bf16)
                pl.BlockSpec((C, 1), lambda b: (0, 0)),           # proj bias (f32)
            ],
            out_specs=pl.BlockSpec((1, C, N), lambda b: (b, 0, 0)),
        ),
        compiler_params=pltpu.CompilerParams(
            dimension_semantics=("parallel",)),     # B blocks -> both TCs on v7x
    )(x_cn, wqkv_fused, wproj, bproj)

    return out.reshape(B, C, H, W)                  # free: (B, C, N) -> NCHW


def attention_reference(x, w_qkv, w_proj, b_proj, *, num_heads):
    """Pure-JAX f32 transliteration of the PyTorch forward (verification)."""
    B, C, H, W = x.shape
    N = H * W
    hd = C // num_heads
    scale = hd ** (-0.5)
    qkv = jnp.einsum('oc,bchw->bohw', w_qkv, x).reshape(B, num_heads, 3 * hd, N)
    q, k, v = qkv[:, :, :hd], qkv[:, :, hd:2 * hd], qkv[:, :, 2 * hd:]
    attn = jnp.einsum('bhdi,bhdj->bhij', k, q) * scale
    attn = jax.nn.softmax(attn, axis=-2)
    out = jnp.einsum('bhdi,bhij->bhdj', v, attn).reshape(B, C, H, W)
    out = jnp.einsum('oc,bchw->bohw', w_proj, out) + b_proj[None, :, None, None]
    return out


if __name__ == "__main__":
    B, C, H, W = 2, 32, 16, 16           # N = H*W = 256 tokens, head_dim = 8
    num_heads = 4

    key = jax.random.PRNGKey(0)
    k1, k2, k3, k4 = jax.random.split(key, 4)
    x = jax.random.normal(k1, (B, C, H, W), dtype=jnp.float32)
    # Conv2d 1x1 == dense over channels; qkv_bias=False, proj has bias.
    w_qkv = jax.random.normal(k2, (3 * C, C), dtype=jnp.float32) * 0.2
    w_proj = jax.random.normal(k3, (C, C), dtype=jnp.float32) * 0.1
    b_proj = jax.random.normal(k4, (C,), dtype=jnp.float32) * 0.1

    fused = fuse_attention_params(w_qkv, w_proj, b_proj, num_heads=num_heads)
    fwd = jax.jit(functools.partial(attention_forward, num_heads=num_heads))

    y = jax.block_until_ready(fwd(x, fused))

    y_ref = attention_reference(x, w_qkv, w_proj, b_proj, num_heads=num_heads)
    # bf16 MXU operands (f32 accumulation) + approx softmax reciprocal ->
    # ~1e-2-level absolute agreement vs the full-f32 reference.
    np.testing.assert_allclose(np.asarray(y), np.asarray(y_ref), rtol=2e-2, atol=2e-2)

    print("KERNEL_OK")
</pallas_src>

<mosaic_0001>
module attributes {stable_mosaic.version = 11 : i64} {
  func.func @_attention_kernel(%arg0: i32, %arg1: memref<1x32x256xbf16, #tpu.memory_space<vmem>>, %arg2: memref<96x32xbf16, #tpu.memory_space<vmem>>, %arg3: memref<32x32xbf16, #tpu.memory_space<vmem>>, %arg4: memref<32x1xf32, #tpu.memory_space<vmem>>, %arg5: memref<1x32x256xf32, #tpu.memory_space<vmem>>) attributes {dimension_semantics = [#tpu.dimension_semantics<parallel>], iteration_bounds = array<i64: 2>, scalar_prefetch = 0 : i64, scratch_operands = 0 : i64, tpu.core_type = #tpu.core_type<tc>, window_params = [{transform_indices = @transform_0, window_bounds = array<i64: 1, 32, 256>}, {pipeline_mode = #tpu.pipeline_mode<synchronous>, transform_indices = @transform_1, window_bounds = array<i64: 96, 32>}, {pipeline_mode = #tpu.pipeline_mode<synchronous>, transform_indices = @transform_2, window_bounds = array<i64: 32, 32>}, {pipeline_mode = #tpu.pipeline_mode<synchronous>, transform_indices = @transform_3, window_bounds = array<i64: 32, 1>}, {transform_indices = @transform_4, window_bounds = array<i64: 1, 32, 256>}]} {
    %c0 = arith.constant 0 : index
    %c0_0 = arith.constant 0 : index
    %c0_1 = arith.constant 0 : index
    %0 = vector.load %arg1[%c0, %c0_0, %c0_1] : memref<1x32x256xbf16, #tpu.memory_space<vmem>>, vector<1x32x256xbf16>
    %1 = vector.shape_cast %0 : vector<1x32x256xbf16> to vector<32x256xbf16>
    %c0_2 = arith.constant 0 : index
    %c0_3 = arith.constant 0 : index
    %2 = vector.load %arg2[%c0_2, %c0_3] : memref<96x32xbf16, #tpu.memory_space<vmem>>, vector<96x32xbf16>
    %cst = arith.constant dense<0.000000e+00> : vector<96x256xf32>
    %3 = tpu.matmul %2, %1, %cst {dimension_numbers = #tpu.dot_dimension_numbers<[1], [0], [0], [1], [0, 0, 1, 1], [], []>} : vector<96x32xbf16>, vector<32x256xbf16>, vector<96x256xf32> -> vector<96x256xf32>
    %4 = vector.extract_strided_slice %3 {offsets = [0, 0], sizes = [8, 256], strides = [1, 1]} : vector<96x256xf32> to vector<8x256xf32>
    %5 = vector.extract_strided_slice %3 {offsets = [32, 0], sizes = [8, 256], strides = [1, 1]} : vector<96x256xf32> to vector<8x256xf32>
    %6 = vector.extract_strided_slice %3 {offsets = [64, 0], sizes = [8, 256], strides = [1, 1]} : vector<96x256xf32> to vector<8x256xf32>
    %cst_4 = arith.constant dense<0.000000e+00> : vector<256x256xf32>
    %7 = tpu.matmul %5, %4, %cst_4 {dimension_numbers = #tpu.dot_dimension_numbers<[0], [0], [1], [1], [0, 1, 1, 1], [], []>} : vector<8x256xf32>, vector<8x256xf32>, vector<256x256xf32> -> vector<256x256xf32>
    %cst_5 = arith.constant dense<0xFF800000> : vector<256xf32>
    %8 = vector.multi_reduction <maximumf>, %7, %cst_5 [0] : vector<256x256xf32> to vector<256xf32>
    %9 = vector.shape_cast %8 : vector<256xf32> to vector<1x256xf32>
    %10 = vector.broadcast %9 : vector<1x256xf32> to vector<256x256xf32>
    %11 = arith.subf %7, %10 : vector<256x256xf32>
    %12 = math.exp %11 : vector<256x256xf32>
    %cst_6 = arith.constant dense<0.000000e+00> : vector<256xf32>
    %13 = vector.multi_reduction <add>, %12, %cst_6 [0] : vector<256x256xf32> to vector<256xf32>
    %14 = vector.shape_cast %13 : vector<256xf32> to vector<1x256xf32>
    %15 = arith.truncf %6 : vector<8x256xf32> to vector<8x256xbf16>
    %16 = arith.truncf %12 : vector<256x256xf32> to vector<256x256xbf16>
    %cst_7 = arith.constant dense<0.000000e+00> : vector<8x256xf32>
    %17 = tpu.matmul %15, %16, %cst_7 {dimension_numbers = #tpu.dot_dimension_numbers<[1], [0], [0], [1], [0, 0, 1, 1], [], []>} : vector<8x256xbf16>, vector<256x256xbf16>, vector<8x256xf32> -> vector<8x256xf32>
    %18 = tpu.reciprocal %14 {approx = true} : vector<1x256xf32> -> vector<1x256xf32>
    %19 = vector.broadcast %18 : vector<1x256xf32> to vector<8x256xf32>
    %20 = arith.mulf %17, %19 : vector<8x256xf32>
    %21 = vector.extract_strided_slice %3 {offsets = [8, 0], sizes = [8, 256], strides = [1, 1]} : vector<96x256xf32> to vector<8x256xf32>
    %22 = vector.extract_strided_slice %3 {offsets = [40, 0], sizes = [8, 256], strides = [1, 1]} : vector<96x256xf32> to vector<8x256xf32>
    %23 = vector.extract_strided_slice %3 {offsets = [72, 0], sizes = [8, 256], strides = [1, 1]} : vector<96x256xf32> to vector<8x256xf32>
    %cst_8 = arith.constant dense<0.000000e+00> : vector<256x256xf32>
    %24 = tpu.matmul %22, %21, %cst_8 {dimension_numbers = #tpu.dot_dimension_numbers<[0], [0], [1], [1], [0, 1, 1, 1], [], []>} : vector<8x256xf32>, vector<8x256xf32>, vector<256x256xf32> -> vector<256x256xf32>
    %cst_9 = arith.constant dense<0xFF800000> : vector<256xf32>
    %25 = vector.multi_reduction <maximumf>, %24, %cst_9 [0] : vector<256x256xf32> to vector<256xf32>
    %26 = vector.shape_cast %25 : vector<256xf32> to vector<1x256xf32>
    %27 = vector.broadcast %26 : vector<1x256xf32> to vector<256x256xf32>
    %28 = arith.subf %24, %27 : vector<256x256xf32>
    %29 = math.exp %28 : vector<256x256xf32>
    %cst_10 = arith.constant dense<0.000000e+00> : vector<256xf32>
    %30 = vector.multi_reduction <add>, %29, %cst_10 [0] : vector<256x256xf32> to vector<256xf32>
    %31 = vector.shape_cast %30 : vector<256xf32> to vector<1x256xf32>
    %32 = arith.truncf %23 : vector<8x256xf32> to vector<8x256xbf16>
    %33 = arith.truncf %29 : vector<256x256xf32> to vector<256x256xbf16>
    %cst_11 = arith.constant dense<0.000000e+00> : vector<8x256xf32>
    %34 = tpu.matmul %32, %33, %cst_11 {dimension_numbers = #tpu.dot_dimension_numbers<[1], [0], [0], [1], [0, 0, 1, 1], [], []>} : vector<8x256xbf16>, vector<256x256xbf16>, vector<8x256xf32> -> vector<8x256xf32>
    %35 = tpu.reciprocal %31 {approx = true} : vector<1x256xf32> -> vector<1x256xf32>
    %36 = vector.broadcast %35 : vector<1x256xf32> to vector<8x256xf32>
    %37 = arith.mulf %34, %36 : vector<8x256xf32>
    %38 = vector.extract_strided_slice %3 {offsets = [16, 0], sizes = [8, 256], strides = [1, 1]} : vector<96x256xf32> to vector<8x256xf32>
    %39 = vector.extract_strided_slice %3 {offsets = [48, 0], sizes = [8, 256], strides = [1, 1]} : vector<96x256xf32> to vector<8x256xf32>
    %40 = vector.extract_strided_slice %3 {offsets = [80, 0], sizes = [8, 256], strides = [1, 1]} : vector<96x256xf32> to vector<8x256xf32>
    %cst_12 = arith.constant dense<0.000000e+00> : vector<256x256xf32>
    %41 = tpu.matmul %39, %38, %cst_12 {dimension_numbers = #tpu.dot_dimension_numbers<[0], [0], [1], [1], [0, 1, 1, 1], [], []>} : vector<8x256xf32>, vector<8x256xf32>, vector<256x256xf32> -> vector<256x256xf32>
    %cst_13 = arith.constant dense<0xFF800000> : vector<256xf32>
    %42 = vector.multi_reduction <maximumf>, %41, %cst_13 [0] : vector<256x256xf32> to vector<256xf32>
    %43 = vector.shape_cast %42 : vector<256xf32> to vector<1x256xf32>
    %44 = vector.broadcast %43 : vector<1x256xf32> to vector<256x256xf32>
    %45 = arith.subf %41, %44 : vector<256x256xf32>
    %46 = math.exp %45 : vector<256x256xf32>
    %cst_14 = arith.constant dense<0.000000e+00> : vector<256xf32>
    %47 = vector.multi_reduction <add>, %46, %cst_14 [0] : vector<256x256xf32> to vector<256xf32>
    %48 = vector.shape_cast %47 : vector<256xf32> to vector<1x256xf32>
    %49 = arith.truncf %40 : vector<8x256xf32> to vector<8x256xbf16>
    %50 = arith.truncf %46 : vector<256x256xf32> to vector<256x256xbf16>
    %cst_15 = arith.constant dense<0.000000e+00> : vector<8x256xf32>
    %51 = tpu.matmul %49, %50, %cst_15 {dimension_numbers = #tpu.dot_dimension_numbers<[1], [0], [0], [1], [0, 0, 1, 1], [], []>} : vector<8x256xbf16>, vector<256x256xbf16>, vector<8x256xf32> -> vector<8x256xf32>
    %52 = tpu.reciprocal %48 {approx = true} : vector<1x256xf32> -> vector<1x256xf32>
    %53 = vector.broadcast %52 : vector<1x256xf32> to vector<8x256xf32>
    %54 = arith.mulf %51, %53 : vector<8x256xf32>
    %55 = vector.extract_strided_slice %3 {offsets = [24, 0], sizes = [8, 256], strides = [1, 1]} : vector<96x256xf32> to vector<8x256xf32>
    %56 = vector.extract_strided_slice %3 {offsets = [56, 0], sizes = [8, 256], strides = [1, 1]} : vector<96x256xf32> to vector<8x256xf32>
    %57 = vector.extract_strided_slice %3 {offsets = [88, 0], sizes = [8, 256], strides = [1, 1]} : vector<96x256xf32> to vector<8x256xf32>
    %cst_16 = arith.constant dense<0.000000e+00> : vector<256x256xf32>
    %58 = tpu.matmul %56, %55, %cst_16 {dimension_numbers = #tpu.dot_dimension_numbers<[0], [0], [1], [1], [0, 1, 1, 1], [], []>} : vector<8x256xf32>, vector<8x256xf32>, vector<256x256xf32> -> vector<256x256xf32>
    %cst_17 = arith.constant dense<0xFF800000> : vector<256xf32>
    %59 = vector.multi_reduction <maximumf>, %58, %cst_17 [0] : vector<256x256xf32> to vector<256xf32>
    %60 = vector.shape_cast %59 : vector<256xf32> to vector<1x256xf32>
    %61 = vector.broadcast %60 : vector<1x256xf32> to vector<256x256xf32>
    %62 = arith.subf %58, %61 : vector<256x256xf32>
    %63 = math.exp %62 : vector<256x256xf32>
    %cst_18 = arith.constant dense<0.000000e+00> : vector<256xf32>
    %64 = vector.multi_reduction <add>, %63, %cst_18 [0] : vector<256x256xf32> to vector<256xf32>
    %65 = vector.shape_cast %64 : vector<256xf32> to vector<1x256xf32>
    %66 = arith.truncf %57 : vector<8x256xf32> to vector<8x256xbf16>
    %67 = arith.truncf %63 : vector<256x256xf32> to vector<256x256xbf16>
    %cst_19 = arith.constant dense<0.000000e+00> : vector<8x256xf32>
    %68 = tpu.matmul %66, %67, %cst_19 {dimension_numbers = #tpu.dot_dimension_numbers<[1], [0], [0], [1], [0, 0, 1, 1], [], []>} : vector<8x256xbf16>, vector<256x256xbf16>, vector<8x256xf32> -> vector<8x256xf32>
    %69 = tpu.reciprocal %65 {approx = true} : vector<1x256xf32> -> vector<1x256xf32>
    %70 = vector.broadcast %69 : vector<1x256xf32> to vector<8x256xf32>
    %71 = arith.mulf %68, %70 : vector<8x256xf32>
    %72 = tpu.concatenate %20, %37, %54, %71 in 0 : vector<8x256xf32>, vector<8x256xf32>, vector<8x256xf32>, vector<8x256xf32> -> vector<32x256xf32>
    %c0_20 = arith.constant 0 : index
    %c0_21 = arith.constant 0 : index
    %73 = vector.load %arg3[%c0_20, %c0_21] : memref<32x32xbf16, #tpu.memory_space<vmem>>, vector<32x32xbf16>
    %74 = arith.truncf %72 : vector<32x256xf32> to vector<32x256xbf16>
    %cst_22 = arith.constant dense<0.000000e+00> : vector<32x256xf32>
    %75 = tpu.matmul %73, %74, %cst_22 {dimension_numbers = #tpu.dot_dimension_numbers<[1], [0], [0], [1], [0, 0, 1, 1], [], []>} : vector<32x32xbf16>, vector<32x256xbf16>, vector<32x256xf32> -> vector<32x256xf32>
    %c0_23 = arith.constant 0 : index
    %c0_24 = arith.constant 0 : index
    %76 = vector.load %arg4[%c0_23, %c0_24] : memref<32x1xf32, #tpu.memory_space<vmem>>, vector<32x1xf32>
    %77 = vector.broadcast %76 : vector<32x1xf32> to vector<32x256xf32>
    %78 = arith.addf %75, %77 : vector<32x256xf32>
    %c0_25 = arith.constant 0 : index
    %c0_26 = arith.constant 0 : index
    %c0_27 = arith.constant 0 : index
    %79 = vector.load %arg5[%c0_25, %c0_26, %c0_27] : memref<1x32x256xf32, #tpu.memory_space<vmem>>, vector<1x32x256xf32>
    %80 = vector.shape_cast %79 : vector<1x32x256xf32> to vector<32x256xf32>
    %81 = vector.shape_cast %78 : vector<32x256xf32> to vector<1x32x256xf32>
    tpu.vector_store %arg5[%c0_25, %c0_26, %c0_27], %81 {strides = array<i32>} : memref<1x32x256xf32, #tpu.memory_space<vmem>>, vector<1x32x256xf32>,
    return
  }
  func.func @transform_0(%arg0: i32) -> (i32, i32, i32) {
    %c0_i32 = arith.constant 0 : i32
    %c0_i32_0 = arith.constant 0 : i32
    %c0_i32_1 = arith.constant 0 : i32
    return %arg0, %c0_i32, %c0_i32_0 : i32, i32, i32
  }
  func.func @transform_1(%arg0: i32) -> (i32, i32) {
    %c0_i32 = arith.constant 0 : i32
    %c0_i32_0 = arith.constant 0 : i32
    %c0_i32_1 = arith.constant 0 : i32
    return %c0_i32, %c0_i32_0 : i32, i32
  }
  func.func @transform_2(%arg0: i32) -> (i32, i32) {
    %c0_i32 = arith.constant 0 : i32
    %c0_i32_0 = arith.constant 0 : i32
    %c0_i32_1 = arith.constant 0 : i32
    return %c0_i32, %c0_i32_0 : i32, i32
  }
  func.func @transform_3(%arg0: i32) -> (i32, i32) {
    %c0_i32 = arith.constant 0 : i32
    %c0_i32_0 = arith.constant 0 : i32
    %c0_i32_1 = arith.constant 0 : i32
    return %c0_i32, %c0_i32_0 : i32, i32
  }
  func.func @transform_4(%arg0: i32) -> (i32, i32, i32) {
    %c0_i32 = arith.constant 0 : i32
    %c0_i32_0 = arith.constant 0 : i32
    %c0_i32_1 = arith.constant 0 : i32
    return %arg0, %c0_i32, %c0_i32_0 : i32, i32, i32
  }
}

</mosaic_0001>

<llo_original>
// kernel: attention_forward.1
$region0: #{attention_forward.1}
  #allocation0 [shape = 'u32[]', space=smem, size = 0x4, offset = 0x4, fixed_abs, tag = 'smem constant byte address 0x4 - core index']
  #allocation1 [shape = 'u32[144,128]{1,0:T(1,128)}', space=vmem, size = 0x12000, scoped, tag = 'internal scratch']
  %s0 = inlined_call_operand.vmem [shape: bf16[2,32,256], index: 0, kind: input, shape index: {}]
  %s1 = inlined_call_operand.vmem [shape: bf16[96,32], index: 1, kind: input, shape index: {}]
  %s2 = inlined_call_operand.vmem [shape: bf16[32,32], index: 2, kind: input, shape index: {}]
  %s3 = inlined_call_operand.vmem [shape: f32[32,1], index: 3, kind: input, shape index: {}]
  %s4 = inlined_call_operand.vmem [shape: f32[2,32,256], index: 4, kind: output, shape index: {}]
  %s5 = sld [smem:[#allocation0]]
  $region49: #{attention_forward.1} parent=0
    _
  %s7 = ssub.s32 1, %s5
  %s8 = scalar_select 0, %s7, %s5
  loop: start=0, step=1, limit=4
  $region2: #{attention_forward.1} parent=0 // loop_pre_header
    _
  $region3: #{attention_forward.1} parent=0 // loop_header
    %s10 = sphi 0, %s14
    %p11 = scmp.ge.s32.totalorder %s10, 4
    %s20 = sphi 0, %s22
    %s23 = sphi 0, %s20
    %s24 = sphi 0, %s23
    %s40 = sphi 0, %s24
    %s44 = sphi 0, %s44
    %s46 = sphi 0, %s44
    %s47 = sphi 0, %s46
    %s61 = sphi 0, %s47
    %s65 = sphi 0, %s65
    %s67 = sphi 0, %s65
    %s68 = sphi 0, %s67
    %s82 = sphi 0, %s68
    %s86 = sphi 0, %s86
    %s88 = sphi 0, %s86
    %s89 = sphi 0, %s88
    %s103 = sphi 0, %s89
    %s109 = sphi 0, %s111
    %s112 = sphi 0, %s109
    %s113 = sphi 0, %s112
    %s129 = sphi 0, %s113
  $region4: #{attention_forward.1} parent=0 // loop_header_branch
    %13 = sbr.rel (%p11) target = $region8
  $region5: #{attention_forward.1} parent=0 // loop_body
    %s15 = ssub.s32 %s10, 1
    %s16 = ssub.s32 %s10, 2
    %s17 = sadd.s32 %s10, 1
    %s18 = ssub.s32 %s10, %s17
    %p19 = scmp.eq.s32.totalorder %s18, 0
    %s21 = sadd.s32 %s20, 1
    %s22 = scalar_select %p19, %s20, %s21
    %p25 = pneg %p19
    %p26 = scmp.eq.s32.totalorder %s10, 1
    %p27 = por %p25, %p26
    %p28 = scmp.ne.s32.totalorder %s20, %s23
    %p29 = scmp.eq.s32.totalorder %s10, 0
    %p30 = por %p28, %p29
    %p31 = scmp.ne.s32.totalorder %s20, %s23
    %p32 = scmp.eq.s32.totalorder %s15, 1
    %p33 = por %p31, %p32
    %p34 = scmp.ne.s32.totalorder %s23, %s24
    %p35 = scmp.eq.s32.totalorder %s15, 0
    %p36 = por %p34, %p35
    %p37 = scmp.ne.s32.totalorder %s23, %s24
    %p38 = scmp.eq.s32.totalorder %s16, 1
    %p39 = por %p37, %p38
    %p41 = scmp.ne.s32.totalorder %s24, %s40
    %p42 = scmp.eq.s32.totalorder %s16, 0
    %p43 = por %p41, %p42
    %s45 = sadd.s32 %s44, 1
    %p48 = scmp.eq.s32.totalorder %s10, 1
    %p49 = scmp.ne.s32.totalorder %s44, %s46
    %p50 = scmp.eq.s32.totalorder %s10, 0
    %p51 = por %p49, %p50
    %p52 = scmp.ne.s32.totalorder %s44, %s46
    %p53 = scmp.eq.s32.totalorder %s15, 1
    %p54 = por %p52, %p53
    %p55 = scmp.ne.s32.totalorder %s46, %s47
    %p56 = scmp.eq.s32.totalorder %s15, 0
    %p57 = por %p55, %p56
    %p58 = scmp.ne.s32.totalorder %s46, %s47
    %p59 = scmp.eq.s32.totalorder %s16, 1
    %p60 = por %p58, %p59
    %p62 = scmp.ne.s32.totalorder %s47, %s61
    %p63 = scmp.eq.s32.totalorder %s16, 0
    %p64 = por %p62, %p63
    %s66 = sadd.s32 %s65, 1
    %p69 = scmp.eq.s32.totalorder %s10, 1
    %p70 = scmp.ne.s32.totalorder %s65, %s67
    %p71 = scmp.eq.s32.totalorder %s10, 0
    %p72 = por %p70, %p71
    %p73 = scmp.ne.s32.totalorder %s65, %s67
    %p74 = scmp.eq.s32.totalorder %s15, 1
    %p75 = por %p73, %p74
    %p76 = scmp.ne.s32.totalorder %s67, %s68
    %p77 = scmp.eq.s32.totalorder %s15, 0
    %p78 = por %p76, %p77
    %p79 = scmp.ne.s32.totalorder %s67, %s68
    %p80 = scmp.eq.s32.totalorder %s16, 1
    %p81 = por %p79, %p80
    %p83 = scmp.ne.s32.totalorder %s68, %s82
    %p84 = scmp.eq.s32.totalorder %s16, 0
    %p85 = por %p83, %p84
    %s87 = sadd.s32 %s86, 1
    %p90 = scmp.eq.s32.totalorder %s10, 1
    %p91 = scmp.ne.s32.totalorder %s86, %s88
    %p92 = scmp.eq.s32.totalorder %s10, 0
    %p93 = por %p91, %p92
    %p94 = scmp.ne.s32.totalorder %s86, %s88
    %p95 = scmp.eq.s32.totalorder %s15, 1
    %p96 = por %p94, %p95
    %p97 = scmp.ne.s32.totalorder %s88, %s89
    %p98 = scmp.eq.s32.totalorder %s15, 0
    %p99 = por %p97, %p98
    %p100 = scmp.ne.s32.totalorder %s88, %s89
    %p101 = scmp.eq.s32.totalorder %s16, 1
    %p102 = por %p100, %p101
    %p104 = scmp.ne.s32.totalorder %s89, %s103
    %p105 = scmp.eq.s32.totalorder %s16, 0
    %p106 = por %p104, %p105
    %s107 = ssub.s32 %s10, %s17
    %p108 = scmp.eq.s32.totalorder %s107, 0
    %s110 = sadd.s32 %s109, 1
    %s111 = scalar_select %p108, %s109, %s110
    %p114 = pneg %p108
    %p115 = scmp.eq.s32.totalorder %s10, 1
    %p116 = por %p114, %p115
    %p117 = scmp.ne.s32.totalorder %s109, %s112
    %p118 = scmp.eq.s32.totalorder %s10, 0
    %p119 = por %p117, %p118
    %p120 = scmp.ne.s32.totalorder %s109, %s112
    %p121 = scmp.eq.s32.totalorder %s15, 1
    %p122 = por %p120, %p121
    %p123 = scmp.ne.s32.totalorder %s112, %s113
    %p124 = scmp.eq.s32.totalorder %s15, 0
    %p125 = por %p123, %p124
    %p126 = scmp.ne.s32.totalorder %s112, %s113
    %p127 = scmp.eq.s32.totalorder %s16, 1
    %p128 = por %p126, %p127
    %p130 = scmp.ne.s32.totalorder %s113, %s129
    %p131 = scmp.eq.s32.totalorder %s16, 0
    %p132 = por %p130, %p131
    %p133 = scmp.le.s32.totalorder 1, %s10
    %p134 = scmp.lt.s32.totalorder %s10, 3
    %p135 = pnand %p133, %p134
    %p136 = pneg %p135
    // Predicated region
    $region9: #{attention_forward.1} parent=5 // pred_check
      _
    $region10: #{attention_forward.1} parent=5 // pred_check_branch
      %138 = sbr.rel (%p135) target = $region12
    $region11: #{attention_forward.1} parent=5 // pred_region
      %s139 = ssub.s32 %s10, 1
      // Predicated region
      $region13: #{attention_forward.1} parent=11 // pred_check
        %p140 = pneg %p57
      $region14: #{attention_forward.1} parent=11 // pred_check_branch
        %142 = sbr.rel (%p140) target = $region16
      $region15: #{attention_forward.1} parent=11 // pred_region
        _
      $region16: #{attention_forward.1} parent=11 // pred_fallthru
        _
      // Predicated region
      $region17: #{attention_forward.1} parent=11 // pred_check
        %p143 = pneg %p78
      $region18: #{attention_forward.1} parent=11 // pred_check_branch
        %145 = sbr.rel (%p143) target = $region20
      $region19: #{attention_forward.1} parent=11 // pred_region
        _
      $region20: #{attention_forward.1} parent=11 // pred_fallthru
        _
      // Predicated region
      $region21: #{attention_forward.1} parent=11 // pred_check
        %p146 = pneg %p99
      $region22: #{attention_forward.1} parent=11 // pred_check_branch
        %148 = sbr.rel (%p146) target = $region24
      $region23: #{attention_forward.1} parent=11 // pred_region
        _
      $region24: #{attention_forward.1} parent=11 // pred_fallthru
        _
    $region12: #{attention_forward.1} parent=5 // pred_fallthru
      _
    %p149 = scmp.lt.s32.totalorder %s10, 2
    // Predicated region
    $region25: #{attention_forward.1} parent=5 // pred_check
      %p150 = pneg %p149
    $region26: #{attention_forward.1} parent=5 // pred_check_branch
      %152 = sbr.rel (%p150) target = $region28
    $region27: #{attention_forward.1} parent=5 // pred_region
      // Predicated region
      $region29: #{attention_forward.1} parent=27 // pred_check
        %p153 = pneg %p30
      $region30: #{attention_forward.1} parent=27 // pred_check_branch
        %155 = sbr.rel (%p153) target = $region32
      $region31: #{attention_forward.1} parent=27 // pred_region
        %p156 = scmp.lt.s32.totalorder %s10, 1
        %s157 = scalar_select %p156, %s10, 1
        %s158 = smul.addr %s157, 8
        %s159 = smul.addr %s158, 4
        %s160 = scalar_lea.vmem %s0, %s159
      $region32: #{attention_forward.1} parent=27 // pred_fallthru
        _
    $region28: #{attention_forward.1} parent=5 // pred_fallthru
      _
    %p161 = scmp.le.s32.totalorder 1, %s10
    %p162 = scmp.lt.s32.totalorder %s10, 3
    %p163 = pnand %p161, %p162
    %p164 = pneg %p163
    // Predicated region
    $region33: #{attention_forward.1} parent=5 // pred_check
      _
    $region34: #{attention_forward.1} parent=5 // pred_check_branch
      %166 = sbr.rel (%p163) target = $region36
    $region35: #{attention_forward.1} parent=5 // pred_region
      %s167 = ssub.s32 %s10, 1
      %p168 = scmp.lt.s32.totalorder %s15, 1
      %s169 = scalar_select %p168, %s15, 1
      %s170 = smul.addr %s169, 8
      %s171 = smul.addr %s170, 4
      %s172 = scalar_lea.vmem %s0, %s171
      %p173 = pneg %p36
      %p174 = pneg %p33
      %p175 = pneg %p57
      %p176 = pneg %p54
      %p177 = pneg %p78
      %p178 = pneg %p75
      %p179 = pneg %p99
      %p180 = pneg %p96
      %p181 = pneg %p125
      %p182 = pneg %p122
      %p183 = scmp.lt.s32.totalorder %s15, 1
      %s184 = scalar_select %p183, %s15, 1
      %s185 = smul.addr %s184, 8
      %s186 = smul.addr %s185, 8
      %s187 = scalar_lea.vmem %s4, %s186
      %p188 = scmp.lt.s32.totalorder %s15, 1
      %s189 = scalar_select %p188, %s15, 1
      %s190 = smul.addr %s189, 8
      %s191 = smul.addr %s190, 4
      %s192 = scalar_lea.vmem %s0, %s191
      %p193 = scmp.lt.s32.totalorder %s15, 1
      %s194 = scalar_select %p193, %s15, 1
      %s195 = smul.addr %s194, 8
      %s196 = smul.addr %s195, 8
      %s197 = scalar_lea.vmem %s4, %s196
      %v199 = vld [vmem:[%s192] sm:$0xff]
      %v200 = vld [vmem:[%s192 + $0x8] sm:$0xff]
      %v201 = vld [vmem:[%s192 + $0x10] sm:$0xff]
      %v202 = vld [vmem:[%s192 + $0x18] sm:$0xff]
      %v203 = vld [vmem:[%s1] sm:$0xf]
      %v204 = vld [vmem:[%s1 + $0x4] sm:$0xf]
      %v205 = vld [vmem:[%s1 + $0x8] sm:$0xf]
      %v206 = vld [vmem:[%s1 + $0xc] sm:$0xf]
      %v207 = vld [vmem:[%s1 + $0x10] sm:$0xf]
      %v208 = vld [vmem:[%s1 + $0x14] sm:$0xf]
      %v209 = vld [vmem:[%s1 + $0x18] sm:$0xf]
      %v210 = vld [vmem:[%s1 + $0x1c] sm:$0xf]
      %v211 = vld [vmem:[%s1 + $0x20] sm:$0xf]
      %v212 = vld [vmem:[%s1 + $0x24] sm:$0xf]
      %v213 = vld [vmem:[%s1 + $0x28] sm:$0xf]
      %v214 = vld [vmem:[%s1 + $0x2c] sm:$0xf]
      %v227 = vunpack.c.l.b16 %v203
      %v228 = vunpack.c.l.b16 %v204
      %v229 = vunpack.c.l.b16 %v205
      %v230 = vunpack.c.l.b16 %v206
      %v231 = vunpack.c.l.b16 %v207
      %v232 = vunpack.c.l.b16 %v208
      %v233 = vunpack.c.l.b16 %v209
      %v234 = vunpack.c.l.b16 %v210
      %v235 = vunpack.c.l.b16 %v211
      %v236 = vunpack.c.l.b16 %v212
      %v237 = vunpack.c.l.b16 %v213
      %v238 = vunpack.c.l.b16 %v214
      %v239 = vpack.c.b16 %v228, %v227
      %v240 = vpack.c.b16 %v230, %v229
      %v241 = vpack.c.b16 %v232, %v231
      %v242 = vpack.c.b16 %v234, %v233
      %v243 = vpack.c.b16 %v236, %v235
      %v244 = vpack.c.b16 %v238, %v237
      %v249 = vunpack.c.l.b16 %v199
      %v250 = vunpack.c.h.b16 %v199
      %v251 = vunpack.c.l.b16 %v200
      %v252 = vunpack.c.h.b16 %v200
      %v253 = vunpack.c.l.b16 %v201
      %v254 = vunpack.c.h.b16 %v201
      %v255 = vunpack.c.l.b16 %v202
      %v256 = vunpack.c.h.b16 %v202
      %v257 = vpack.c.b16 %v251, %v249
      %v258 = vpack.c.b16 %v252, %v250
      %v259 = vpack.c.b16 %v255, %v253
      %v260 = vpack.c.b16 %v256, %v254
      %vm265 = vcmask 261120
      %v267 = vsel %vm265, %v239, 0
      %v270 = vsel %vm265, %v240, 0
      %v273 = vsel %vm265, %v241, 0
      %v276 = vsel %vm265, %v242, 0
      %v279 = vsel %vm265, %v243, 0
      %v282 = vsel %vm265, %v244, 0
      %284 = vmatprep.subr.bf16.mxu0 0
      %285 = vmatpush1.bf16.msra.mxu0 0
      %286 = vmatprep.subr.bf16.mxu0 0
      %287 = vmatpush1.bf16.msra.mxu0 0
      %288 = vmatprep.subr.bf16.mxu0 0
      %289 = vmatpush1.bf16.msra.mxu0 0
      %290 = vmatprep.subr.bf16.mxu0 0
      %291 = vmatpush1.bf16.msra.mxu0 0
      %292 = vmatprep.subr.bf16.mxu0 0
      %293 = vmatpush1.bf16.msra.mxu0 0
      %294 = vmatprep.subr.bf16.mxu0 0
      %295 = vmatpush1.bf16.msra.mxu0 0
      %296 = vmatprep.subr.bf16.mxu0 %v260
      %297 = vmatpush1.bf16.msra.mxu0 %v259
      %298 = vmatprep.subr.bf16.mxu0 %v258
      %299 = vmatpush1.bf16.msra.mxu0 %v257
      %300 = vmatprep.subr.bf16.mxu0 0
      %301 = vmatpush2.bf16.msra.mxu0 0
      %302 = vmatprep.subr.bf16.mxu0 0
      %303 = vmatpush2.bf16.msra.mxu0 0
      %304 = vmatprep.subr.bf16.mxu0 0
      %305 = vmatpush2.bf16.msra.mxu0 0
      %306 = vmatprep.subr.bf16.mxu0 0
      %307 = vmatpush2.bf16.msra.mxu0 0
      %308 = vmatprep.subr.bf16.mxu0 0
      %309 = vmatpush2.bf16.msra.mxu0 0
      %310 = vmatprep.subr.bf16.mxu0 0
      %311 = vmatpush2.bf16.msra.mxu0 0
      %312 = vmatprep.subr.bf16.mxu0 0
      %313 = vmatpush2.bf16.msra.mxu0 0
      %314 = vmatprep.subr.bf16.mxu0 0
      %315 = vmatpush2.bf16.msra.mxu0 0
      %316 = vmatprep.mubr.bf16.mxu0 0
      %317 = vmatmul.mubr.bf16.gmra.mxu0 %v267
      %v318 = vpop.f32.mrf.mxu0
      %v319 = vadd.f32 0.0, %v318
      %v320 = vpop.f32.mrf.mxu0
      %v321 = vadd.f32 0.0, %v320
      %v322 = vpop.f32.mrf.mxu0
      %v323 = vadd.f32 0.0, %v322
      %v324 = vpop.f32.mrf.mxu0
      %v325 = vadd.f32 0.0, %v324
      %326 = vmatprep.mubr.bf16.mxu0 0
      %327 = vmatmul.mubr.bf16.gmra.mxu0 %v270
      %v328 = vpop.f32.mrf.mxu0
      %v329 = vadd.f32 0.0, %v328
      %v330 = vpop.f32.mrf.mxu0
      %v331 = vadd.f32 0.0, %v330
      %v332 = vpop.f32.mrf.mxu0
      %v333 = vadd.f32 0.0, %v332
      %v334 = vpop.f32.mrf.mxu0
      %v335 = vadd.f32 0.0, %v334
      %336 = vmatprep.mubr.bf16.mxu0 0
      %337 = vmatmul.mubr.bf16.gmra.mxu0 %v273
      %v338 = vpop.f32.mrf.mxu0
      %v339 = vadd.f32 0.0, %v338
      %v340 = vpop.f32.mrf.mxu0
      %v341 = vadd.f32 0.0, %v340
      %v342 = vpop.f32.mrf.mxu0
      %v343 = vadd.f32 0.0, %v342
      %v344 = vpop.f32.mrf.mxu0
      %v345 = vadd.f32 0.0, %v344
      %346 = vmatprep.mubr.bf16.mxu0 0
      %347 = vmatmul.mubr.bf16.gmra.mxu0 %v276
      %v348 = vpop.f32.mrf.mxu0
      %v349 = vadd.f32 0.0, %v348
      %v350 = vpop.f32.mrf.mxu0
      %v351 = vadd.f32 0.0, %v350
      %v352 = vpop.f32.mrf.mxu0
      %v353 = vadd.f32 0.0, %v352
      %v354 = vpop.f32.mrf.mxu0
      %v355 = vadd.f32 0.0, %v354
      %356 = vmatprep.mubr.bf16.mxu0 0
      %357 = vmatmul.mubr.bf16.gmra.mxu0 %v279
      %v358 = vpop.f32.mrf.mxu0
      %v359 = vadd.f32 0.0, %v358
      %v360 = vpop.f32.mrf.mxu0
      %v361 = vadd.f32 0.0, %v360
      %v362 = vpop.f32.mrf.mxu0
      %v363 = vadd.f32 0.0, %v362
      %v364 = vpop.f32.mrf.mxu0
      %v365 = vadd.f32 0.0, %v364
      %366 = vmatprep.mubr.bf16.mxu0 0
      %367 = vmatmul.mubr.bf16.gmra.mxu0 %v282
      %v368 = vpop.f32.mrf.mxu0
      %v369 = vadd.f32 0.0, %v368
      %v370 = vpop.f32.mrf.mxu0
      %v371 = vadd.f32 0.0, %v370
      %v372 = vpop.f32.mrf.mxu0
      %v373 = vadd.f32 0.0, %v372
      %v374 = vpop.f32.mrf.mxu0
      %v375 = vadd.f32 0.0, %v374
      %376 = vdwg.mxu0
      %377 = vxpose.xlu0.b32.start [1/16] %v339, 128
      %378 = vxpose.xlu0.b32.cont [2/16] 0.0, 128
      %379 = vxpose.xlu0.b32.cont [3/16] 0.0, 128
      %380 = vxpose.xlu0.b32.cont [4/16] 0.0, 128
      %381 = vxpose.xlu0.b32.cont [5/16] 0.0, 128
      %382 = vxpose.xlu0.b32.cont [6/16] 0.0, 128
      %383 = vxpose.xlu0.b32.cont [7/16] 0.0, 128
      %384 = vxpose.xlu0.b32.cont [8/16] 0.0, 128
      %385 = vxpose.xlu0.b32.cont [9/16] 0.0, 128
      %386 = vxpose.xlu0.b32.cont [10/16] 0.0, 128
      %387 = vxpose.xlu0.b32.cont [11/16] 0.0, 128
      %388 = vxpose.xlu0.b32.cont [12/16] 0.0, 128
      %389 = vxpose.xlu0.b32.cont [13/16] 0.0, 128
      %390 = vxpose.xlu0.b32.cont [14/16] 0.0, 128
      %391 = vxpose.xlu0.b32.cont [15/16] 0.0, 128
      %392 = vxpose.xlu0.b32.end [16/16] 0.0, 128
      %v393 = vpop.trf.xlu0
      %v394 = vpop.trf.xlu0
      %v395 = vpop.trf.xlu0
      %v396 = vpop.trf.xlu0
      %v397 = vpop.trf.xlu0
      %v398 = vpop.trf.xlu0
      %v399 = vpop.trf.xlu0
      %v400 = vpop.trf.xlu0
      %v401 = vpop.trf.xlu0
      %v402 = vpop.trf.xlu0
      %v403 = vpop.trf.xlu0
      %v404 = vpop.trf.xlu0
      %v405 = vpop.trf.xlu0
      %v406 = vpop.trf.xlu0
      %v407 = vpop.trf.xlu0
      %v408 = vpop.trf.xlu0
      %409 = vxpose.xlu0.b32.start [1/16] %v341, 128
      %410 = vxpose.xlu0.b32.cont [2/16] 0.0, 128
      %411 = vxpose.xlu0.b32.cont [3/16] 0.0, 128
      %412 = vxpose.xlu0.b32.cont [4/16] 0.0, 128
      %413 = vxpose.xlu0.b32.cont [5/16] 0.0, 128
      %414 = vxpose.xlu0.b32.cont [6/16] 0.0, 128
      %415 = vxpose.xlu0.b32.cont [7/16] 0.0, 128
      %416 = vxpose.xlu0.b32.cont [8/16] 0.0, 128
      %417 = vxpose.xlu0.b32.cont [9/16] 0.0, 128
      %418 = vxpose.xlu0.b32.cont [10/16] 0.0, 128
      %419 = vxpose.xlu0.b32.cont [11/16] 0.0, 128
      %420 = vxpose.xlu0.b32.cont [12/16] 0.0, 128
      %421 = vxpose.xlu0.b32.cont [13/16] 0.0, 128
      %422 = vxpose.xlu0.b32.cont [14/16] 0.0, 128
      %423 = vxpose.xlu0.b32.cont [15/16] 0.0, 128
      %424 = vxpose.xlu0.b32.end [16/16] 0.0, 128
      %v425 = vpop.trf.xlu0
      %v426 = vpop.trf.xlu0
      %v427 = vpop.trf.xlu0
      %v428 = vpop.trf.xlu0
      %v429 = vpop.trf.xlu0
      %v430 = vpop.trf.xlu0
      %v431 = vpop.trf.xlu0
      %v432 = vpop.trf.xlu0
      %v433 = vpop.trf.xlu0
      %v434 = vpop.trf.xlu0
      %v435 = vpop.trf.xlu0
      %v436 = vpop.trf.xlu0
      %v437 = vpop.trf.xlu0
      %v438 = vpop.trf.xlu0
      %v439 = vpop.trf.xlu0
      %v440 = vpop.trf.xlu0
      %vm441 = vcmask 64512
      %v443 = vsel %vm441, %v393, 0
      %v446 = vsel %vm441, %v394, 0
      %v449 = vsel %vm441, %v395, 0
      %v452 = vsel %vm441, %v396, 0
      %v455 = vsel %vm441, %v397, 0
      %v458 = vsel %vm441, %v398, 0
      %v461 = vsel %vm441, %v399, 0
      %v464 = vsel %vm441, %v400, 0
      %v467 = vsel %vm441, %v401, 0
      %v470 = vsel %vm441, %v402, 0
      %v473 = vsel %vm441, %v403, 0
      %v476 = vsel %vm441, %v404, 0
      %v479 = vsel %vm441, %v405, 0
      %v482 = vsel %vm441, %v406, 0
      %v485 = vsel %vm441, %v407, 0
      %v488 = vsel %vm441, %v408, 0
      %v491 = vsel %vm441, %v425, 0
      %v494 = vsel %vm441, %v426, 0
      %v497 = vsel %vm441, %v427, 0
      %v500 = vsel %vm441, %v428, 0
      %v503 = vsel %vm441, %v429, 0
      %v506 = vsel %vm441, %v430, 0
      %v509 = vsel %vm441, %v431, 0
      %v512 = vsel %vm441, %v432, 0
      %v515 = vsel %vm441, %v433, 0
      %v518 = vsel %vm441, %v434, 0
      %v521 = vsel %vm441, %v435, 0
      %v524 = vsel %vm441, %v436, 0
      %v527 = vsel %vm441, %v437, 0
      %v530 = vsel %vm441, %v438, 0
      %v533 = vsel %vm441, %v439, 0
      %v536 = vsel %vm441, %v440, 0
      %538 = vmatprep.subr.mxu0 0.0
      %539 = vmatpush1.msra.mxu0 0.0
      %540 = vmatprep.subr.mxu0 0.0
      %541 = vmatpush1.msra.mxu0 0.0
      %542 = vmatprep.subr.mxu0 0.0
      %543 = vmatpush1.msra.mxu0 0.0
      %544 = vmatprep.subr.mxu0 0.0
      %545 = vmatpush1.msra.mxu0 0.0
      %546 = vmatprep.subr.mxu0 0.0
      %547 = vmatpush1.msra.mxu0 0.0
      %548 = vmatprep.subr.mxu0 0.0
      %549 = vmatpush1.msra.mxu0 0.0
      %550 = vmatprep.subr.mxu0 0.0
      %551 = vmatpush1.msra.mxu0 0.0
      %552 = vmatprep.subr.mxu0 0.0
      %553 = vmatpush1.msra.mxu0 0.0
      %554 = vmatprep.subr.mxu0 0.0
      %555 = vmatpush1.msra.mxu0 0.0
      %556 = vmatprep.subr.mxu0 0.0
      %557 = vmatpush1.msra.mxu0 0.0
      %558 = vmatprep.subr.mxu0 0.0
      %559 = vmatpush1.msra.mxu0 0.0
      %560 = vmatprep.subr.mxu0 0.0
      %561 = vmatpush1.msra.mxu0 0.0
      %562 = vmatprep.subr.mxu0 0.0
      %563 = vmatpush1.msra.mxu0 0.0
      %564 = vmatprep.subr.mxu0 0.0
      %565 = vmatpush1.msra.mxu0 0.0
      %566 = vmatprep.subr.mxu0 0.0
      %567 = vmatpush1.msra.mxu0 0.0
      %568 = vmatprep.subr.mxu0 %v321
      %569 = vmatpush1.msra.mxu0 %v319
      %570 = vmatprep.subr.mxu0 0.0
      %571 = vmatpush2.msra.mxu0 0.0
      %572 = vmatprep.subr.mxu0 0.0
      %573 = vmatpush2.msra.mxu0 0.0
      %574 = vmatprep.subr.mxu0 0.0
      %575 = vmatpush2.msra.mxu0 0.0
      %576 = vmatprep.subr.mxu0 0.0
      %577 = vmatpush2.msra.mxu0 0.0
      %578 = vmatprep.subr.mxu0 0.0
      %579 = vmatpush2.msra.mxu0 0.0
      %580 = vmatprep.subr.mxu0 0.0
      %581 = vmatpush2.msra.mxu0 0.0
      %582 = vmatprep.subr.mxu0 0.0
      %583 = vmatpush2.msra.mxu0 0.0
      %584 = vmatprep.subr.mxu0 0.0
      %585 = vmatpush2.msra.mxu0 0.0
      %586 = vmatprep.subr.mxu0 0.0
      %587 = vmatpush2.msra.mxu0 0.0
      %588 = vmatprep.subr.mxu0 0.0
      %589 = vmatpush2.msra.mxu0 0.0
      %590 = vmatprep.subr.mxu0 0.0
      %591 = vmatpush2.msra.mxu0 0.0
      %592 = vmatprep.subr.mxu0 0.0
      %593 = vmatpush2.msra.mxu0 0.0
      %594 = vmatprep.subr.mxu0 0.0
      %595 = vmatpush2.msra.mxu0 0.0
      %596 = vmatprep.subr.mxu0 0.0
      %597 = vmatpush2.msra.mxu0 0.0
      %598 = vmatprep.subr.mxu0 0.0
      %599 = vmatpush2.msra.mxu0 0.0
      %600 = vmatprep.subr.mxu0 0.0
      %601 = vmatpush2.msra.mxu0 0.0
      %602 = vmatprep.mubr.f32.mxu0 0.0
      %603 = vmatmul.mubr.f32.gmra.mxu0 %v443
      %v604 = vpop.f32.mrf.mxu0
      %v605 = vadd.f32 0.0, %v604
      %v606 = vpop.f32.mrf.mxu0
      %v607 = vadd.f32 0.0, %v606
      %608 = vmatprep.mubr.f32.mxu0 0.0
      %609 = vmatmul.mubr.f32.gmra.mxu0 %v446
      %v610 = vpop.f32.mrf.mxu0
      %v611 = vadd.f32 0.0, %v610
      %v612 = vpop.f32.mrf.mxu0
      %v613 = vadd.f32 0.0, %v612
      %614 = vmatprep.mubr.f32.mxu0 0.0
      %615 = vmatmul.mubr.f32.gmra.mxu0 %v449
      %v616 = vpop.f32.mrf.mxu0
      %v617 = vadd.f32 0.0, %v616
      %v618 = vpop.f32.mrf.mxu0
      %v619 = vadd.f32 0.0, %v618
      %620 = vmatprep.mubr.f32.mxu0 0.0
      %621 = vmatmul.mubr.f32.gmra.mxu0 %v452
      %v622 = vpop.f32.mrf.mxu0
      %v623 = vadd.f32 0.0, %v622
      %v624 = vpop.f32.mrf.mxu0
      %v625 = vadd.f32 0.0, %v624
      %626 = vmatprep.mubr.f32.mxu0 0.0
      %627 = vmatmul.mubr.f32.gmra.mxu0 %v455
      %v628 = vpop.f32.mrf.mxu0
      %v629 = vadd.f32 0.0, %v628
      %v630 = vpop.f32.mrf.mxu0
      %v631 = vadd.f32 0.0, %v630
      %632 = vmatprep.mubr.f32.mxu0 0.0
      %633 = vmatmul.mubr.f32.gmra.mxu0 %v458
      %v634 = vpop.f32.mrf.mxu0
      %v635 = vadd.f32 0.0, %v634
      %v636 = vpop.f32.mrf.mxu0
      %v637 = vadd.f32 0.0, %v636
      %638 = vmatprep.mubr.f32.mxu0 0.0
      %639 = vmatmul.mubr.f32.gmra.mxu0 %v461
      %v640 = vpop.f32.mrf.mxu0
      %v641 = vadd.f32 0.0, %v640
      %v642 = vpop.f32.mrf.mxu0
      %v643 = vadd.f32 0.0, %v642
      %644 = vmatprep.mubr.f32.mxu0 0.0
      %645 = vmatmul.mubr.f32.gmra.mxu0 %v464
      %v646 = vpop.f32.mrf.mxu0
      %v647 = vadd.f32 0.0, %v646
      %v648 = vpop.f32.mrf.mxu0
      %v649 = vadd.f32 0.0, %v648
      %650 = vmatprep.mubr.f32.mxu0 0.0
      %651 = vmatmul.mubr.f32.gmra.mxu0 %v467
      %v652 = vpop.f32.mrf.mxu0
      %v653 = vadd.f32 0.0, %v652
      %v654 = vpop.f32.mrf.mxu0
      %v655 = vadd.f32 0.0, %v654
      %656 = vmatprep.mubr.f32.mxu0 0.0
      %657 = vmatmul.mubr.f32.gmra.mxu0 %v470
      %v658 = vpop.f32.mrf.mxu0
      %v659 = vadd.f32 0.0, %v658
      %v660 = vpop.f32.mrf.mxu0
      %v661 = vadd.f32 0.0, %v660
      %662 = vmatprep.mubr.f32.mxu0 0.0
      %663 = vmatmul.mubr.f32.gmra.mxu0 %v473
      %v664 = vpop.f32.mrf.mxu0
      %v665 = vadd.f32 0.0, %v664
      %v666 = vpop.f32.mrf.mxu0
      %v667 = vadd.f32 0.0, %v666
      %668 = vmatprep.mubr.f32.mxu0 0.0
      %669 = vmatmul.mubr.f32.gmra.mxu0 %v476
      %v670 = vpop.f32.mrf.mxu0
      %v671 = vadd.f32 0.0, %v670
      %v672 = vpop.f32.mrf.mxu0
      %v673 = vadd.f32 0.0, %v672
      %674 = vmatprep.mubr.f32.mxu0 0.0
      %675 = vmatmul.mubr.f32.gmra.mxu0 %v479
      %v676 = vpop.f32.mrf.mxu0
      %v677 = vadd.f32 0.0, %v676
      %v678 = vpop.f32.mrf.mxu0
      %v679 = vadd.f32 0.0, %v678
      %680 = vmatprep.mubr.f32.mxu0 0.0
      %681 = vmatmul.mubr.f32.gmra.mxu0 %v482
      %v682 = vpop.f32.mrf.mxu0
      %v683 = vadd.f32 0.0, %v682
      %v684 = vpop.f32.mrf.mxu0
      %v685 = vadd.f32 0.0, %v684
      %686 = vmatprep.mubr.f32.mxu0 0.0
      %687 = vmatmul.mubr.f32.gmra.mxu0 %v485
      %v688 = vpop.f32.mrf.mxu0
      %v689 = vadd.f32 0.0, %v688
      %v690 = vpop.f32.mrf.mxu0
      %v691 = vadd.f32 0.0, %v690
      %692 = vmatprep.mubr.f32.mxu0 0.0
      %693 = vmatmul.mubr.f32.gmra.mxu0 %v488
      %v694 = vpop.f32.mrf.mxu0
      %v695 = vadd.f32 0.0, %v694
      %v696 = vpop.f32.mrf.mxu0
      %v697 = vadd.f32 0.0, %v696
      %698 = vmatprep.mubr.f32.mxu0 0.0
      %699 = vmatmul.mubr.f32.gmra.mxu0 %v491
      %v700 = vpop.f32.mrf.mxu0
      %v701 = vadd.f32 0.0, %v700
      %v702 = vpop.f32.mrf.mxu0
      %v703 = vadd.f32 0.0, %v702
      %704 = vmatprep.mubr.f32.mxu0 0.0
      %705 = vmatmul.mubr.f32.gmra.mxu0 %v494
      %v706 = vpop.f32.mrf.mxu0
      %v707 = vadd.f32 0.0, %v706
      %v708 = vpop.f32.mrf.mxu0
      %v709 = vadd.f32 0.0, %v708
      %710 = vmatprep.mubr.f32.mxu0 0.0
      %711 = vmatmul.mubr.f32.gmra.mxu0 %v497
      %v712 = vpop.f32.mrf.mxu0
      %v713 = vadd.f32 0.0, %v712
      %v714 = vpop.f32.mrf.mxu0
      %v715 = vadd.f32 0.0, %v714
      %716 = vmatprep.mubr.f32.mxu0 0.0
      %717 = vmatmul.mubr.f32.gmra.mxu0 %v500
      %v718 = vpop.f32.mrf.mxu0
      %v719 = vadd.f32 0.0, %v718
      %v720 = vpop.f32.mrf.mxu0
      %v721 = vadd.f32 0.0, %v720
      %722 = vmatprep.mubr.f32.mxu0 0.0
      %723 = vmatmul.mubr.f32.gmra.mxu0 %v503
      %v724 = vpop.f32.mrf.mxu0
      %v725 = vadd.f32 0.0, %v724
      %v726 = vpop.f32.mrf.mxu0
      %v727 = vadd.f32 0.0, %v726
      %728 = vmatprep.mubr.f32.mxu0 0.0
      %729 = vmatmul.mubr.f32.gmra.mxu0 %v506
      %v730 = vpop.f32.mrf.mxu0
      %v731 = vadd.f32 0.0, %v730
      %v732 = vpop.f32.mrf.mxu0
      %v733 = vadd.f32 0.0, %v732
      %734 = vmatprep.mubr.f32.mxu0 0.0
      %735 = vmatmul.mubr.f32.gmra.mxu0 %v509
      %v736 = vpop.f32.mrf.mxu0
      %v737 = vadd.f32 0.0, %v736
      %v738 = vpop.f32.mrf.mxu0
      %v739 = vadd.f32 0.0, %v738
      %740 = vmatprep.mubr.f32.mxu0 0.0
      %741 = vmatmul.mubr.f32.gmra.mxu0 %v512
      %v742 = vpop.f32.mrf.mxu0
      %v743 = vadd.f32 0.0, %v742
      %v744 = vpop.f32.mrf.mxu0
      %v745 = vadd.f32 0.0, %v744
      %746 = vmatprep.mubr.f32.mxu0 0.0
      %747 = vmatmul.mubr.f32.gmra.mxu0 %v515
      %v748 = vpop.f32.mrf.mxu0
      %v749 = vadd.f32 0.0, %v748
      %v750 = vpop.f32.mrf.mxu0
      %v751 = vadd.f32 0.0, %v750
      %752 = vmatprep.mubr.f32.mxu0 0.0
      %753 = vmatmul.mubr.f32.gmra.mxu0 %v518
      %v754 = vpop.f32.mrf.mxu0
      %v755 = vadd.f32 0.0, %v754
      %v756 = vpop.f32.mrf.mxu0
      %v757 = vadd.f32 0.0, %v756
      %758 = vmatprep.mubr.f32.mxu0 0.0
      %759 = vmatmul.mubr.f32.gmra.mxu0 %v521
      %v760 = vpop.f32.mrf.mxu0
      %v761 = vadd.f32 0.0, %v760
      %v762 = vpop.f32.mrf.mxu0
      %v763 = vadd.f32 0.0, %v762
      %764 = vmatprep.mubr.f32.mxu0 0.0
      %765 = vmatmul.mubr.f32.gmra.mxu0 %v524
      %v766 = vpop.f32.mrf.mxu0
      %v767 = vadd.f32 0.0, %v766
      %v768 = vpop.f32.mrf.mxu0
      %v769 = vadd.f32 0.0, %v768
      %770 = vmatprep.mubr.f32.mxu0 0.0
      %771 = vmatmul.mubr.f32.gmra.mxu0 %v527
      %v772 = vpop.f32.mrf.mxu0
      %v773 = vadd.f32 0.0, %v772
      %v774 = vpop.f32.mrf.mxu0
      %v775 = vadd.f32 0.0, %v774
      %776 = vmatprep.mubr.f32.mxu0 0.0
      %777 = vmatmul.mubr.f32.gmra.mxu0 %v530
      %v778 = vpop.f32.mrf.mxu0
      %v779 = vadd.f32 0.0, %v778
      %v780 = vpop.f32.mrf.mxu0
      %v781 = vadd.f32 0.0, %v780
      %782 = vmatprep.mubr.f32.mxu0 0.0
      %783 = vmatmul.mubr.f32.gmra.mxu0 %v533
      %v784 = vpop.f32.mrf.mxu0
      %v785 = vadd.f32 0.0, %v784
      %v786 = vpop.f32.mrf.mxu0
      %v787 = vadd.f32 0.0, %v786
      %788 = vmatprep.mubr.f32.mxu0 0.0
      %789 = vmatmul.mubr.f32.gmra.mxu0 %v536
      %v790 = vpop.f32.mrf.mxu0
      %v791 = vadd.f32 0.0, %v790
      %v792 = vpop.f32.mrf.mxu0
      %v793 = vadd.f32 0.0, %v792
      %794 = vdwg.mxu0
      %v795 = vmax.f32 %v605, %v617
      %v796 = vmax.f32 %v611, %v623
      %v797 = vmax.f32 %v795, %v629
      %v798 = vmax.f32 %v796, %v635
      %v799 = vmax.f32 %v797, %v641
      %v800 = vmax.f32 %v798, %v647
      %v801 = vmax.f32 %v799, %v653
      %v802 = vmax.f32 %v800, %v659
      %v803 = vmax.f32 %v801, %v665
      %v804 = vmax.f32 %v802, %v671
      %v805 = vmax.f32 %v803, %v677
      %v806 = vmax.f32 %v804, %v683
      %v807 = vmax.f32 %v805, %v689
      %v808 = vmax.f32 %v806, %v695
      %v809 = vmax.f32 %v807, %v701
      %v810 = vmax.f32 %v808, %v707
      %v811 = vmax.f32 %v809, %v713
      %v812 = vmax.f32 %v810, %v719
      %v813 = vmax.f32 %v811, %v725
      %v814 = vmax.f32 %v812, %v731
      %v815 = vmax.f32 %v813, %v737
      %v816 = vmax.f32 %v814, %v743
      %v817 = vmax.f32 %v815, %v749
      %v818 = vmax.f32 %v816, %v755
      %v819 = vmax.f32 %v817, %v761
      %v820 = vmax.f32 %v818, %v767
      %v821 = vmax.f32 %v819, %v773
      %v822 = vmax.f32 %v820, %v779
      %v823 = vmax.f32 %v821, %v785
      %v824 = vmax.f32 %v822, %v791
      %v825 = vmax.f32 %v823, %v824
      %v826 = vrot.slane %v825, 4
      %v827 = vmax.f32 %v825, %v826
      %v828 = vrot.slane %v827, 2
      %v829 = vmax.f32 %v827, %v828
      %v830 = vrot.slane %v829, 1
      %v831 = vmax.f32 %v829, %v830
      %v832 = vmax.f32 %v607, %v619
      %v833 = vmax.f32 %v613, %v625
      %v834 = vmax.f32 %v832, %v631
      %v835 = vmax.f32 %v833, %v637
      %v836 = vmax.f32 %v834, %v643
      %v837 = vmax.f32 %v835, %v649
      %v838 = vmax.f32 %v836, %v655
      %v839 = vmax.f32 %v837, %v661
      %v840 = vmax.f32 %v838, %v667
      %v841 = vmax.f32 %v839, %v673
      %v842 = vmax.f32 %v840, %v679
      %v843 = vmax.f32 %v841, %v685
      %v844 = vmax.f32 %v842, %v691
      %v845 = vmax.f32 %v843, %v697
      %v846 = vmax.f32 %v844, %v703
      %v847 = vmax.f32 %v845, %v709
      %v848 = vmax.f32 %v846, %v715
      %v849 = vmax.f32 %v847, %v721
      %v850 = vmax.f32 %v848, %v727
      %v851 = vmax.f32 %v849, %v733
      %v852 = vmax.f32 %v850, %v739
      %v853 = vmax.f32 %v851, %v745
      %v854 = vmax.f32 %v852, %v751
      %v855 = vmax.f32 %v853, %v757
      %v856 = vmax.f32 %v854, %v763
      %v857 = vmax.f32 %v855, %v769
      %v858 = vmax.f32 %v856, %v775
      %v859 = vmax.f32 %v857, %v781
      %v860 = vmax.f32 %v858, %v787
      %v861 = vmax.f32 %v859, %v793
      %v862 = vmax.f32 %v860, %v861
      %v863 = vrot.slane %v862, 4
      %v864 = vmax.f32 %v862, %v863
      %v865 = vrot.slane %v864, 2
      %v866 = vmax.f32 %v864, %v865
      %v867 = vrot.slane %v866, 1
      %v868 = vmax.f32 %v866, %v867
      %v869 = vsub.f32 %v605, %v831
      %v870 = vsub.f32 %v607, %v868
      %v871 = vsub.f32 %v611, %v831
      %v872 = vsub.f32 %v613, %v868
      %v873 = vsub.f32 %v617, %v831
      %v874 = vsub.f32 %v619, %v868
      %v875 = vsub.f32 %v623, %v831
      %v876 = vsub.f32 %v625, %v868
      %v877 = vsub.f32 %v629, %v831
      %v878 = vsub.f32 %v631, %v868
      %v879 = vsub.f32 %v635, %v831
      %v880 = vsub.f32 %v637, %v868
      %v881 = vsub.f32 %v641, %v831
      %v882 = vsub.f32 %v643, %v868
      %v883 = vsub.f32 %v647, %v831
      %v884 = vsub.f32 %v649, %v868
      %v885 = vsub.f32 %v653, %v831
      %v886 = vsub.f32 %v655, %v868
      %v887 = vsub.f32 %v659, %v831
      %v888 = vsub.f32 %v661, %v868
      %v889 = vsub.f32 %v665, %v831
      %v890 = vsub.f32 %v667, %v868
      %v891 = vsub.f32 %v671, %v831
      %v892 = vsub.f32 %v673, %v868
      %v893 = vsub.f32 %v677, %v831
      %v894 = vsub.f32 %v679, %v868
      %v895 = vsub.f32 %v683, %v831
      %v896 = vsub.f32 %v685, %v868
      %v897 = vsub.f32 %v689, %v831
      %v898 = vsub.f32 %v691, %v868
      %v899 = vsub.f32 %v695, %v831
      %v900 = vsub.f32 %v697, %v868
      %v901 = vsub.f32 %v701, %v831
      %v902 = vsub.f32 %v703, %v868
      %v903 = vsub.f32 %v707, %v831
      %v904 = vsub.f32 %v709, %v868
      %v905 = vsub.f32 %v713, %v831
      %v906 = vsub.f32 %v715, %v868
      %v907 = vsub.f32 %v719, %v831
      %v908 = vsub.f32 %v721, %v868
      %v909 = vsub.f32 %v725, %v831
      %v910 = vsub.f32 %v727, %v868
      %v911 = vsub.f32 %v731, %v831
      %v912 = vsub.f32 %v733, %v868
      %v913 = vsub.f32 %v737, %v831
      %v914 = vsub.f32 %v739, %v868
      %v915 = vsub.f32 %v743, %v831
      %v916 = vsub.f32 %v745, %v868
      %v917 = vsub.f32 %v749, %v831
      %v918 = vsub.f32 %v751, %v868
      %v919 = vsub.f32 %v755, %v831
      %v920 = vsub.f32 %v757, %v868
      %v921 = vsub.f32 %v761, %v831
      %v922 = vsub.f32 %v763, %v868
      %v923 = vsub.f32 %v767, %v831
      %v924 = vsub.f32 %v769, %v868
      %v925 = vsub.f32 %v773, %v831
      %v926 = vsub.f32 %v775, %v868
      %v927 = vsub.f32 %v779, %v831
      %v928 = vsub.f32 %v781, %v868
      %v929 = vsub.f32 %v785, %v831
      %v930 = vsub.f32 %v787, %v868
      %v931 = vsub.f32 %v791, %v831
      %v932 = vsub.f32 %v793, %v868
      %v933 = vmul.f32 %v869, 1.442695
      %v934 = vpow.pop %v933
      %v935 = vmul.f32 %v870, 1.442695
      %v936 = vpow.pop %v935
      %v937 = vmul.f32 %v871, 1.442695
      %v938 = vpow.pop %v937
      %v939 = vmul.f32 %v872, 1.442695
      %v940 = vpow.pop %v939
      %v941 = vmul.f32 %v873, 1.442695
      %v942 = vpow.pop %v941
      %v943 = vmul.f32 %v874, 1.442695
      %v944 = vpow.pop %v943
      %v945 = vmul.f32 %v875, 1.442695
      %v946 = vpow.pop %v945
      %v947 = vmul.f32 %v876, 1.442695
      %v948 = vpow.pop %v947
      %v949 = vmul.f32 %v877, 1.442695
      %v950 = vpow.pop %v949
      %v951 = vmul.f32 %v878, 1.442695
      %v952 = vpow.pop %v951
      %v953 = vmul.f32 %v879, 1.442695
      %v954 = vpow.pop %v953
      %v955 = vmul.f32 %v880, 1.442695
      %v956 = vpow.pop %v955
      %v957 = vmul.f32 %v881, 1.442695
      %v958 = vpow.pop %v957
      %v959 = vmul.f32 %v882, 1.442695
      %v960 = vpow.pop %v959
      %v961 = vmul.f32 %v883, 1.442695
      %v962 = vpow.pop %v961
      %v963 = vmul.f32 %v884, 1.442695
      %v964 = vpow.pop %v963
      %v965 = vmul.f32 %v885, 1.442695
      %v966 = vpow.pop %v965
      %v967 = vmul.f32 %v886, 1.442695
      %v968 = vpow.pop %v967
      %v969 = vmul.f32 %v887, 1.442695
      %v970 = vpow.pop %v969
      %v971 = vmul.f32 %v888, 1.442695
      %v972 = vpow.pop %v971
      %v973 = vmul.f32 %v889, 1.442695
      %v974 = vpow.pop %v973
      %v975 = vmul.f32 %v890, 1.442695
      %v976 = vpow.pop %v975
      %v977 = vmul.f32 %v891, 1.442695
      %v978 = vpow.pop %v977
      %v979 = vmul.f32 %v892, 1.442695
      %v980 = vpow.pop %v979
      %v981 = vmul.f32 %v893, 1.442695
      %v982 = vpow.pop %v981
      %v983 = vmul.f32 %v894, 1.442695
      %v984 = vpow.pop %v983
      %v985 = vmul.f32 %v895, 1.442695
      %v986 = vpow.pop %v985
      %v987 = vmul.f32 %v896, 1.442695
      %v988 = vpow.pop %v987
      %v989 = vmul.f32 %v897, 1.442695
      %v990 = vpow.pop %v989
      %v991 = vmul.f32 %v898, 1.442695
      %v992 = vpow.pop %v991
      %v993 = vmul.f32 %v899, 1.442695
      %v994 = vpow.pop %v993
      %v995 = vmul.f32 %v900, 1.442695
      %v996 = vpow.pop %v995
      %v997 = vmul.f32 %v901, 1.442695
      %v998 = vpow.pop %v997
      %v999 = vmul.f32 %v902, 1.442695
      %v1000 = vpow.pop %v999
      %v1001 = vmul.f32 %v903, 1.442695
      %v1002 = vpow.pop %v1001
      %v1003 = vmul.f32 %v904, 1.442695
      %v1004 = vpow.pop %v1003
      %v1005 = vmul.f32 %v905, 1.442695
      %v1006 = vpow.pop %v1005
      %v1007 = vmul.f32 %v906, 1.442695
      %v1008 = vpow.pop %v1007
      %v1009 = vmul.f32 %v907, 1.442695
      %v1010 = vpow.pop %v1009
      %v1011 = vmul.f32 %v908, 1.442695
      %v1012 = vpow.pop %v1011
      %v1013 = vmul.f32 %v909, 1.442695
      %v1014 = vpow.pop %v1013
      %v1015 = vmul.f32 %v910, 1.442695
      %v1016 = vpow.pop %v1015
      %v1017 = vmul.f32 %v911, 1.442695
      %v1018 = vpow.pop %v1017
      %v1019 = vmul.f32 %v912, 1.442695
      %v1020 = vpow.pop %v1019
      %v1021 = vmul.f32 %v913, 1.442695
      %v1022 = vpow.pop %v1021
      %v1023 = vmul.f32 %v914, 1.442695
      %v1024 = vpow.pop %v1023
      %v1025 = vmul.f32 %v915, 1.442695
      %v1026 = vpow.pop %v1025
      %v1027 = vmul.f32 %v916, 1.442695
      %v1028 = vpow.pop %v1027
      %v1029 = vmul.f32 %v917, 1.442695
      %v1030 = vpow.pop %v1029
      %v1031 = vmul.f32 %v918, 1.442695
      %v1032 = vpow.pop %v1031
      %v1033 = vmul.f32 %v919, 1.442695
      %v1034 = vpow.pop %v1033
      %v1035 = vmul.f32 %v920, 1.442695
      %v1036 = vpow.pop %v1035
      %v1037 = vmul.f32 %v921, 1.442695
      %v1038 = vpow.pop %v1037
      %v1039 = vmul.f32 %v922, 1.442695
      %v1040 = vpow.pop %v1039
      %v1041 = vmul.f32 %v923, 1.442695
      %v1042 = vpow.pop %v1041
      %v1043 = vmul.f32 %v924, 1.442695
      %v1044 = vpow.pop %v1043
      %v1045 = vmul.f32 %v925, 1.442695
      %v1046 = vpow.pop %v1045
      %v1047 = vmul.f32 %v926, 1.442695
      %v1048 = vpow.pop %v1047
      %v1049 = vmul.f32 %v927, 1.442695
      %v1050 = vpow.pop %v1049
      %v1051 = vmul.f32 %v928, 1.442695
      %v1052 = vpow.pop %v1051
      %v1053 = vmul.f32 %v929, 1.442695
      %v1054 = vpow.pop %v1053
      %v1055 = vmul.f32 %v930, 1.442695
      %v1056 = vpow.pop %v1055
      %v1057 = vmul.f32 %v931, 1.442695
      %v1058 = vpow.pop %v1057
      %v1059 = vmul.f32 %v932, 1.442695
      %v1060 = vpow.pop %v1059
      %v1061 = vadd.f32 %v934, %v938
      %v1062 = vadd.f32 %v1061, %v942
      %v1063 = vadd.f32 %v1062, %v946
      %v1064 = vadd.f32 %v1063, %v950
      %v1065 = vadd.f32 %v1064, %v954
      %v1066 = vadd.f32 %v1065, %v958
      %v1067 = vadd.f32 %v1066, %v962
      %v1068 = vadd.f32 %v1067, %v966
      %v1069 = vadd.f32 %v1068, %v970
      %v1070 = vadd.f32 %v1069, %v974
      %v1071 = vadd.f32 %v1070, %v978
      %v1072 = vadd.f32 %v1071, %v982
      %v1073 = vadd.f32 %v1072, %v986
      %v1074 = vadd.f32 %v1073, %v990
      %v1075 = vadd.f32 %v1074, %v994
      %v1076 = vadd.f32 %v1075, %v998
      %v1077 = vadd.f32 %v1076, %v1002
      %v1078 = vadd.f32 %v1077, %v1006
      %v1079 = vadd.f32 %v1078, %v1010
      %v1080 = vadd.f32 %v1079, %v1014
      %v1081 = vadd.f32 %v1080, %v1018
      %v1082 = vadd.f32 %v1081, %v1022
      %v1083 = vadd.f32 %v1082, %v1026
      %v1084 = vadd.f32 %v1083, %v1030
      %v1085 = vadd.f32 %v1084, %v1034
      %v1086 = vadd.f32 %v1085, %v1038
      %v1087 = vadd.f32 %v1086, %v1042
      %v1088 = vadd.f32 %v1087, %v1046
      %v1089 = vadd.f32 %v1088, %v1050
      %v1090 = vadd.f32 %v1089, %v1054
      %v1091 = vadd.f32 %v1090, %v1058
      %v1092 = vrot.slane %v1091, 4
      %v1093 = vadd.f32 %v1091, %v1092
      %v1094 = vrot.slane %v1093, 2
      %v1095 = vadd.f32 %v1093, %v1094
      %v1096 = vrot.slane %v1095, 1
      %v1097 = vadd.f32 %v1095, %v1096
      %v1098 = vadd.f32 %v936, %v940
      %v1099 = vadd.f32 %v1098, %v944
      %v1100 = vadd.f32 %v1099, %v948
      %v1101 = vadd.f32 %v1100, %v952
      %v1102 = vadd.f32 %v1101, %v956
      %v1103 = vadd.f32 %v1102, %v960
      %v1104 = vadd.f32 %v1103, %v964
      %v1105 = vadd.f32 %v1104, %v968
      %v1106 = vadd.f32 %v1105, %v972
      %v1107 = vadd.f32 %v1106, %v976
      %v1108 = vadd.f32 %v1107, %v980
      %v1109 = vadd.f32 %v1108, %v984
      %v1110 = vadd.f32 %v1109, %v988
      %v1111 = vadd.f32 %v1110, %v992
      %v1112 = vadd.f32 %v1111, %v996
      %v1113 = vadd.f32 %v1112, %v1000
      %v1114 = vadd.f32 %v1113, %v1004
      %v1115 = vadd.f32 %v1114, %v1008
      %v1116 = vadd.f32 %v1115, %v1012
      %v1117 = vadd.f32 %v1116, %v1016
      %v1118 = vadd.f32 %v1117, %v1020
      %v1119 = vadd.f32 %v1118, %v1024
      %v1120 = vadd.f32 %v1119, %v1028
      %v1121 = vadd.f32 %v1120, %v1032
      %v1122 = vadd.f32 %v1121, %v1036
      %v1123 = vadd.f32 %v1122, %v1040
      %v1124 = vadd.f32 %v1123, %v1044
      %v1125 = vadd.f32 %v1124, %v1048
      %v1126 = vadd.f32 %v1125, %v1052
      %v1127 = vadd.f32 %v1126, %v1056
      %v1128 = vadd.f32 %v1127, %v1060
      %v1129 = vrot.slane %v1128, 4
      %v1130 = vadd.f32 %v1128, %v1129
      %v1131 = vrot.slane %v1130, 2
      %v1132 = vadd.f32 %v1130, %v1131
      %v1133 = vrot.slane %v1132, 1
      %v1134 = vadd.f32 %v1132, %v1133
      %v1135 = vpack.c.bf16 %v359, %v359
      %v1136 = vpack.c.bf16 %v361, %v361
      %v1137 = vpack.c.bf16 %v938, %v934
      %v1138 = vpack.c.bf16 %v940, %v936
      %v1139 = vpack.c.bf16 %v946, %v942
      %v1140 = vpack.c.bf16 %v948, %v944
      %v1141 = vpack.c.bf16 %v954, %v950
      %v1142 = vpack.c.bf16 %v956, %v952
      %v1143 = vpack.c.bf16 %v962, %v958
      %v1144 = vpack.c.bf16 %v964, %v960
      %v1145 = vpack.c.bf16 %v970, %v966
      %v1146 = vpack.c.bf16 %v972, %v968
      %v1147 = vpack.c.bf16 %v978, %v974
      %v1148 = vpack.c.bf16 %v980, %v976
      %v1149 = vpack.c.bf16 %v986, %v982
      %v1150 = vpack.c.bf16 %v988, %v984
      %v1151 = vpack.c.bf16 %v994, %v990
      %v1152 = vpack.c.bf16 %v996, %v992
      %v1153 = vpack.c.bf16 %v1002, %v998
      %v1154 = vpack.c.bf16 %v1004, %v1000
      %v1155 = vpack.c.bf16 %v1010, %v1006
      %v1156 = vpack.c.bf16 %v1012, %v1008
      %v1157 = vpack.c.bf16 %v1018, %v1014
      %v1158 = vpack.c.bf16 %v1020, %v1016
      %v1159 = vpack.c.bf16 %v1026, %v1022
      %v1160 = vpack.c.bf16 %v1028, %v1024
      %v1161 = vpack.c.bf16 %v1034, %v1030
      %v1162 = vpack.c.bf16 %v1036, %v1032
      %v1163 = vpack.c.bf16 %v1042, %v1038
      %v1164 = vpack.c.bf16 %v1044, %v1040
      %v1165 = vpack.c.bf16 %v1050, %v1046
      %v1166 = vpack.c.bf16 %v1052, %v1048
      %v1167 = vpack.c.bf16 %v1058, %v1054
      %v1168 = vpack.c.bf16 %v1060, %v1056
      %1169 = vmatprep.subr.bf16.mxu0 %v1152
      %1170 = vmatpush1.bf16.msra.mxu0 %v1151
      %1171 = vmatprep.subr.bf16.mxu0 %v1150
      %1172 = vmatpush1.bf16.msra.mxu0 %v1149
      %1173 = vmatprep.subr.bf16.mxu0 %v1148
      %1174 = vmatpush1.bf16.msra.mxu0 %v1147
      %1175 = vmatprep.subr.bf16.mxu0 %v1146
      %1176 = vmatpush1.bf16.msra.mxu0 %v1145
      %1177 = vmatprep.subr.bf16.mxu0 %v1144
      %1178 = vmatpush1.bf16.msra.mxu0 %v1143
      %1179 = vmatprep.subr.bf16.mxu0 %v1142
      %1180 = vmatpush1.bf16.msra.mxu0 %v1141
      %1181 = vmatprep.subr.bf16.mxu0 %v1140
      %1182 = vmatpush1.bf16.msra.mxu0 %v1139
      %1183 = vmatprep.subr.bf16.mxu0 %v1138
      %1184 = vmatpush1.bf16.msra.mxu0 %v1137
      %1185 = vmatprep.subr.bf16.mxu0 %v1168
      %1186 = vmatpush2.bf16.msra.mxu0 %v1167
      %1187 = vmatprep.subr.bf16.mxu0 %v1166
      %1188 = vmatpush2.bf16.msra.mxu0 %v1165
      %1189 = vmatprep.subr.bf16.mxu0 %v1164
      %1190 = vmatpush2.bf16.msra.mxu0 %v1163
      %1191 = vmatprep.subr.bf16.mxu0 %v1162
      %1192 = vmatpush2.bf16.msra.mxu0 %v1161
      %1193 = vmatprep.subr.bf16.mxu0 %v1160
      %1194 = vmatpush2.bf16.msra.mxu0 %v1159
      %1195 = vmatprep.subr.bf16.mxu0 %v1158
      %1196 = vmatpush2.bf16.msra.mxu0 %v1157
      %1197 = vmatprep.subr.bf16.mxu0 %v1156
      %1198 = vmatpush2.bf16.msra.mxu0 %v1155
      %1199 = vmatprep.subr.bf16.mxu0 %v1154
      %1200 = vmatpush2.bf16.msra.mxu0 %v1153
      %1201 = vmatprep.mubr.bf16.mxu0 %v1136
      %1202 = vmatmul.mubr.bf16.gmra.mxu0 %v1135
      %v1203 = vpop.f32.mrf.mxu0
      %v1204 = vadd.f32 0.0, %v1203
      %v1205 = vpop.f32.mrf.mxu0
      %v1206 = vadd.f32 0.0, %v1205
      %v1207 = vpop.f32.mrf.mxu0
      %v1208 = vpop.f32.mrf.mxu0
      %1209 = vdwg.mxu0
      %v1210 = vrcp.pop %v1097
      %v1211 = vrcp.pop %v1134
      %v1212 = vmul.f32 %v1204, %v1210
      %v1213 = vmul.f32 %v1206, %v1211
      %1214 = vxpose.xlu0.b32.start [1/16] %v343, 128
      %1215 = vxpose.xlu0.b32.cont [2/16] 0.0, 128
      %1216 = vxpose.xlu0.b32.cont [3/16] 0.0, 128
      %1217 = vxpose.xlu0.b32.cont [4/16] 0.0, 128
      %1218 = vxpose.xlu0.b32.cont [5/16] 0.0, 128
      %1219 = vxpose.xlu0.b32.cont [6/16] 0.0, 128
      %1220 = vxpose.xlu0.b32.cont [7/16] 0.0, 128
      %1221 = vxpose.xlu0.b32.cont [8/16] 0.0, 128
      %1222 = vxpose.xlu0.b32.cont [9/16] 0.0, 128
      %1223 = vxpose.xlu0.b32.cont [10/16] 0.0, 128
      %1224 = vxpose.xlu0.b32.cont [11/16] 0.0, 128
      %1225 = vxpose.xlu0.b32.cont [12/16] 0.0, 128
      %1226 = vxpose.xlu0.b32.cont [13/16] 0.0, 128
      %1227 = vxpose.xlu0.b32.cont [14/16] 0.0, 128
      %1228 = vxpose.xlu0.b32.cont [15/16] 0.0, 128
      %1229 = vxpose.xlu0.b32.end [16/16] 0.0, 128
      %v1230 = vpop.trf.xlu0
      %v1231 = vpop.trf.xlu0
      %v1232 = vpop.trf.xlu0
      %v1233 = vpop.trf.xlu0
      %v1234 = vpop.trf.xlu0
      %v1235 = vpop.trf.xlu0
      %v1236 = vpop.trf.xlu0
      %v1237 = vpop.trf.xlu0
      %v1238 = vpop.trf.xlu0
      %v1239 = vpop.trf.xlu0
      %v1240 = vpop.trf.xlu0
      %v1241 = vpop.trf.xlu0
      %v1242 = vpop.trf.xlu0
      %v1243 = vpop.trf.xlu0
      %v1244 = vpop.trf.xlu0
      %v1245 = vpop.trf.xlu0
      %1246 = vxpose.xlu0.b32.start [1/16] %v345, 128
      %1247 = vxpose.xlu0.b32.cont [2/16] 0.0, 128
      %1248 = vxpose.xlu0.b32.cont [3/16] 0.0, 128
      %1249 = vxpose.xlu0.b32.cont [4/16] 0.0, 128
      %1250 = vxpose.xlu0.b32.cont [5/16] 0.0, 128
      %1251 = vxpose.xlu0.b32.cont [6/16] 0.0, 128
      %1252 = vxpose.xlu0.b32.cont [7/16] 0.0, 128
      %1253 = vxpose.xlu0.b32.cont [8/16] 0.0, 128
      %1254 = vxpose.xlu0.b32.cont [9/16] 0.0, 128
      %1255 = vxpose.xlu0.b32.cont [10/16] 0.0, 128
      %1256 = vxpose.xlu0.b32.cont [11/16] 0.0, 128
      %1257 = vxpose.xlu0.b32.cont [12/16] 0.0, 128
      %1258 = vxpose.xlu0.b32.cont [13/16] 0.0, 128
      %1259 = vxpose.xlu0.b32.cont [14/16] 0.0, 128
      %1260 = vxpose.xlu0.b32.cont [15/16] 0.0, 128
      %1261 = vxpose.xlu0.b32.end [16/16] 0.0, 128
      %v1262 = vpop.trf.xlu0
      %v1263 = vpop.trf.xlu0
      %v1264 = vpop.trf.xlu0
      %v1265 = vpop.trf.xlu0
      %v1266 = vpop.trf.xlu0
      %v1267 = vpop.trf.xlu0
      %v1268 = vpop.trf.xlu0
      %v1269 = vpop.trf.xlu0
      %v1270 = vpop.trf.xlu0
      %v1271 = vpop.trf.xlu0
      %v1272 = vpop.trf.xlu0
      %v1273 = vpop.trf.xlu0
      %v1274 = vpop.trf.xlu0
      %v1275 = vpop.trf.xlu0
      %v1276 = vpop.trf.xlu0
      %v1277 = vpop.trf.xlu0
      %v1279 = vsel %vm441, %v1230, 0
      %v1282 = vsel %vm441, %v1231, 0
      %v1285 = vsel %vm441, %v1232, 0
      %v1288 = vsel %vm441, %v1233, 0
      %v1291 = vsel %vm441, %v1234, 0
      %v1294 = vsel %vm441, %v1235, 0
      %v1297 = vsel %vm441, %v1236, 0
      %v1300 = vsel %vm441, %v1237, 0
      %v1303 = vsel %vm441, %v1238, 0
      %v1306 = vsel %vm441, %v1239, 0
      %v1309 = vsel %vm441, %v1240, 0
      %v1312 = vsel %vm441, %v1241, 0
      %v1315 = vsel %vm441, %v1242, 0
      %v1318 = vsel %vm441, %v1243, 0
      %v1321 = vsel %vm441, %v1244, 0
      %v1324 = vsel %vm441, %v1245, 0
      %v1327 = vsel %vm441, %v1262, 0
      %v1330 = vsel %vm441, %v1263, 0
      %v1333 = vsel %vm441, %v1264, 0
      %v1336 = vsel %vm441, %v1265, 0
      %v1339 = vsel %vm441, %v1266, 0
      %v1342 = vsel %vm441, %v1267, 0
      %v1345 = vsel %vm441, %v1268, 0
      %v1348 = vsel %vm441, %v1269, 0
      %v1351 = vsel %vm441, %v1270, 0
      %v1354 = vsel %vm441, %v1271, 0
      %v1357 = vsel %vm441, %v1272, 0
      %v1360 = vsel %vm441, %v1273, 0
      %v1363 = vsel %vm441, %v1274, 0
      %v1366 = vsel %vm441, %v1275, 0
      %v1369 = vsel %vm441, %v1276, 0
      %v1372 = vsel %vm441, %v1277, 0
      %1374 = vmatprep.subr.mxu0 0.0
      %1375 = vmatpush1.msra.mxu0 0.0
      %1376 = vmatprep.subr.mxu0 0.0
      %1377 = vmatpush1.msra.mxu0 0.0
      %1378 = vmatprep.subr.mxu0 0.0
      %1379 = vmatpush1.msra.mxu0 0.0
      %1380 = vmatprep.subr.mxu0 0.0
      %1381 = vmatpush1.msra.mxu0 0.0
      %1382 = vmatprep.subr.mxu0 0.0
      %1383 = vmatpush1.msra.mxu0 0.0
      %1384 = vmatprep.subr.mxu0 0.0
      %1385 = vmatpush1.msra.mxu0 0.0
      %1386 = vmatprep.subr.mxu0 0.0
      %1387 = vmatpush1.msra.mxu0 0.0
      %1388 = vmatprep.subr.mxu0 0.0
      %1389 = vmatpush1.msra.mxu0 0.0
      %1390 = vmatprep.subr.mxu0 0.0
      %1391 = vmatpush1.msra.mxu0 0.0
      %1392 = vmatprep.subr.mxu0 0.0
      %1393 = vmatpush1.msra.mxu0 0.0
      %1394 = vmatprep.subr.mxu0 0.0
      %1395 = vmatpush1.msra.mxu0 0.0
      %1396 = vmatprep.subr.mxu0 0.0
      %1397 = vmatpush1.msra.mxu0 0.0
      %1398 = vmatprep.subr.mxu0 0.0
      %1399 = vmatpush1.msra.mxu0 0.0
      %1400 = vmatprep.subr.mxu0 0.0
      %1401 = vmatpush1.msra.mxu0 0.0
      %1402 = vmatprep.subr.mxu0 0.0
      %1403 = vmatpush1.msra.mxu0 0.0
      %1404 = vmatprep.subr.mxu0 %v325
      %1405 = vmatpush1.msra.mxu0 %v323
      %1406 = vmatprep.subr.mxu0 0.0
      %1407 = vmatpush2.msra.mxu0 0.0
      %1408 = vmatprep.subr.mxu0 0.0
      %1409 = vmatpush2.msra.mxu0 0.0
      %1410 = vmatprep.subr.mxu0 0.0
      %1411 = vmatpush2.msra.mxu0 0.0
      %1412 = vmatprep.subr.mxu0 0.0
      %1413 = vmatpush2.msra.mxu0 0.0
      %1414 = vmatprep.subr.mxu0 0.0
      %1415 = vmatpush2.msra.mxu0 0.0
      %1416 = vmatprep.subr.mxu0 0.0
      %1417 = vmatpush2.msra.mxu0 0.0
      %1418 = vmatprep.subr.mxu0 0.0
      %1419 = vmatpush2.msra.mxu0 0.0
      %1420 = vmatprep.subr.mxu0 0.0
      %1421 = vmatpush2.msra.mxu0 0.0
      %1422 = vmatprep.subr.mxu0 0.0
      %1423 = vmatpush2.msra.mxu0 0.0
      %1424 = vmatprep.subr.mxu0 0.0
      %1425 = vmatpush2.msra.mxu0 0.0
      %1426 = vmatprep.subr.mxu0 0.0
      %1427 = vmatpush2.msra.mxu0 0.0
      %1428 = vmatprep.subr.mxu0 0.0
      %1429 = vmatpush2.msra.mxu0 0.0
      %1430 = vmatprep.subr.mxu0 0.0
      %1431 = vmatpush2.msra.mxu0 0.0
      %1432 = vmatprep.subr.mxu0 0.0
      %1433 = vmatpush2.msra.mxu0 0.0
      %1434 = vmatprep.subr.mxu0 0.0
      %1435 = vmatpush2.msra.mxu0 0.0
      %1436 = vmatprep.subr.mxu0 0.0
      %1437 = vmatpush2.msra.mxu0 0.0
      %1438 = vmatprep.mubr.f32.mxu0 0.0
      %1439 = vmatmul.mubr.f32.gmra.mxu0 %v1279
      %v1440 = vpop.f32.mrf.mxu0
      %v1441 = vadd.f32 0.0, %v1440
      %v1442 = vpop.f32.mrf.mxu0
      %v1443 = vadd.f32 0.0, %v1442
      %1444 = vmatprep.mubr.f32.mxu0 0.0
      %1445 = vmatmul.mubr.f32.gmra.mxu0 %v1282
      %v1446 = vpop.f32.mrf.mxu0
      %v1447 = vadd.f32 0.0, %v1446
      %v1448 = vpop.f32.mrf.mxu0
      %v1449 = vadd.f32 0.0, %v1448
      %1450 = vmatprep.mubr.f32.mxu0 0.0
      %1451 = vmatmul.mubr.f32.gmra.mxu0 %v1285
      %v1452 = vpop.f32.mrf.mxu0
      %v1453 = vadd.f32 0.0, %v1452
      %v1454 = vpop.f32.mrf.mxu0
      %v1455 = vadd.f32 0.0, %v1454
      %1456 = vmatprep.mubr.f32.mxu0 0.0
      %1457 = vmatmul.mubr.f32.gmra.mxu0 %v1288
      %v1458 = vpop.f32.mrf.mxu0
      %v1459 = vadd.f32 0.0, %v1458
      %v1460 = vpop.f32.mrf.mxu0
      %v1461 = vadd.f32 0.0, %v1460
      %1462 = vmatprep.mubr.f32.mxu0 0.0
      %1463 = vmatmul.mubr.f32.gmra.mxu0 %v1291
      %v1464 = vpop.f32.mrf.mxu0
      %v1465 = vadd.f32 0.0, %v1464
      %v1466 = vpop.f32.mrf.mxu0
      %v1467 = vadd.f32 0.0, %v1466
      %1468 = vmatprep.mubr.f32.mxu0 0.0
      %1469 = vmatmul.mubr.f32.gmra.mxu0 %v1294
      %v1470 = vpop.f32.mrf.mxu0
      %v1471 = vadd.f32 0.0, %v1470
      %v1472 = vpop.f32.mrf.mxu0
      %v1473 = vadd.f32 0.0, %v1472
      %1474 = vmatprep.mubr.f32.mxu0 0.0
      %1475 = vmatmul.mubr.f32.gmra.mxu0 %v1297
      %v1476 = vpop.f32.mrf.mxu0
      %v1477 = vadd.f32 0.0, %v1476
      %v1478 = vpop.f32.mrf.mxu0
      %v1479 = vadd.f32 0.0, %v1478
      %1480 = vmatprep.mubr.f32.mxu0 0.0
      %1481 = vmatmul.mubr.f32.gmra.mxu0 %v1300
      %v1482 = vpop.f32.mrf.mxu0
      %v1483 = vadd.f32 0.0, %v1482
      %v1484 = vpop.f32.mrf.mxu0
      %v1485 = vadd.f32 0.0, %v1484
      %1486 = vmatprep.mubr.f32.mxu0 0.0
      %1487 = vmatmul.mubr.f32.gmra.mxu0 %v1303
      %v1488 = vpop.f32.mrf.mxu0
      %v1489 = vadd.f32 0.0, %v1488
      %v1490 = vpop.f32.mrf.mxu0
      %v1491 = vadd.f32 0.0, %v1490
      %1492 = vmatprep.mubr.f32.mxu0 0.0
      %1493 = vmatmul.mubr.f32.gmra.mxu0 %v1306
      %v1494 = vpop.f32.mrf.mxu0
      %v1495 = vadd.f32 0.0, %v1494
      %v1496 = vpop.f32.mrf.mxu0
      %v1497 = vadd.f32 0.0, %v1496
      %1498 = vmatprep.mubr.f32.mxu0 0.0
      %1499 = vmatmul.mubr.f32.gmra.mxu0 %v1309
      %v1500 = vpop.f32.mrf.mxu0
      %v1501 = vadd.f32 0.0, %v1500
      %v1502 = vpop.f32.mrf.mxu0
      %v1503 = vadd.f32 0.0, %v1502
      %1504 = vmatprep.mubr.f32.mxu0 0.0
      %1505 = vmatmul.mubr.f32.gmra.mxu0 %v1312
      %v1506 = vpop.f32.mrf.mxu0
      %v1507 = vadd.f32 0.0, %v1506
      %v1508 = vpop.f32.mrf.mxu0
      %v1509 = vadd.f32 0.0, %v1508
      %1510 = vmatprep.mubr.f32.mxu0 0.0
      %1511 = vmatmul.mubr.f32.gmra.mxu0 %v1315
      %v1512 = vpop.f32.mrf.mxu0
      %v1513 = vadd.f32 0.0, %v1512
      %v1514 = vpop.f32.mrf.mxu0
      %v1515 = vadd.f32 0.0, %v1514
      %1516 = vmatprep.mubr.f32.mxu0 0.0
      %1517 = vmatmul.mubr.f32.gmra.mxu0 %v1318
      %v1518 = vpop.f32.mrf.mxu0
      %v1519 = vadd.f32 0.0, %v1518
      %v1520 = vpop.f32.mrf.mxu0
      %v1521 = vadd.f32 0.0, %v1520
      %1522 = vmatprep.mubr.f32.mxu0 0.0
      %1523 = vmatmul.mubr.f32.gmra.mxu0 %v1321
      %v1524 = vpop.f32.mrf.mxu0
      %v1525 = vadd.f32 0.0, %v1524
      %v1526 = vpop.f32.mrf.mxu0
      %v1527 = vadd.f32 0.0, %v1526
      %1528 = vmatprep.mubr.f32.mxu0 0.0
      %1529 = vmatmul.mubr.f32.gmra.mxu0 %v1324
      %v1530 = vpop.f32.mrf.mxu0
      %v1531 = vadd.f32 0.0, %v1530
      %v1532 = vpop.f32.mrf.mxu0
      %v1533 = vadd.f32 0.0, %v1532
      %1534 = vmatprep.mubr.f32.mxu0 0.0
      %1535 = vmatmul.mubr.f32.gmra.mxu0 %v1327
      %v1536 = vpop.f32.mrf.mxu0
      %v1537 = vadd.f32 0.0, %v1536
      %v1538 = vpop.f32.mrf.mxu0
      %v1539 = vadd.f32 0.0, %v1538
      %1540 = vmatprep.mubr.f32.mxu0 0.0
      %1541 = vmatmul.mubr.f32.gmra.mxu0 %v1330
      %v1542 = vpop.f32.mrf.mxu0
      %v1543 = vadd.f32 0.0, %v1542
      %v1544 = vpop.f32.mrf.mxu0
      %v1545 = vadd.f32 0.0, %v1544
      %1546 = vmatprep.mubr.f32.mxu0 0.0
      %1547 = vmatmul.mubr.f32.gmra.mxu0 %v1333
      %v1548 = vpop.f32.mrf.mxu0
      %v1549 = vadd.f32 0.0, %v1548
      %v1550 = vpop.f32.mrf.mxu0
      %v1551 = vadd.f32 0.0, %v1550
      %1552 = vmatprep.mubr.f32.mxu0 0.0
      %1553 = vmatmul.mubr.f32.gmra.mxu0 %v1336
      %v1554 = vpop.f32.mrf.mxu0
      %v1555 = vadd.f32 0.0, %v1554
      %v1556 = vpop.f32.mrf.mxu0
      %v1557 = vadd.f32 0.0, %v1556
      %1558 = vmatprep.mubr.f32.mxu0 0.0
      %1559 = vmatmul.mubr.f32.gmra.mxu0 %v1339
      %v1560 = vpop.f32.mrf.mxu0
      %v1561 = vadd.f32 0.0, %v1560
      %v1562 = vpop.f32.mrf.mxu0
      %v1563 = vadd.f32 0.0, %v1562
      %1564 = vmatprep.mubr.f32.mxu0 0.0
      %1565 = vmatmul.mubr.f32.gmra.mxu0 %v1342
      %v1566 = vpop.f32.mrf.mxu0
      %v1567 = vadd.f32 0.0, %v1566
      %v1568 = vpop.f32.mrf.mxu0
      %v1569 = vadd.f32 0.0, %v1568
      %1570 = vmatprep.mubr.f32.mxu0 0.0
      %1571 = vmatmul.mubr.f32.gmra.mxu0 %v1345
      %v1572 = vpop.f32.mrf.mxu0
      %v1573 = vadd.f32 0.0, %v1572
      %v1574 = vpop.f32.mrf.mxu0
      %v1575 = vadd.f32 0.0, %v1574
      %1576 = vmatprep.mubr.f32.mxu0 0.0
      %1577 = vmatmul.mubr.f32.gmra.mxu0 %v1348
      %v1578 = vpop.f32.mrf.mxu0
      %v1579 = vadd.f32 0.0, %v1578
      %v1580 = vpop.f32.mrf.mxu0
      %v1581 = vadd.f32 0.0, %v1580
      %1582 = vmatprep.mubr.f32.mxu0 0.0
      %1583 = vmatmul.mubr.f32.gmra.mxu0 %v1351
      %v1584 = vpop.f32.mrf.mxu0
      %v1585 = vadd.f32 0.0, %v1584
      %v1586 = vpop.f32.mrf.mxu0
      %v1587 = vadd.f32 0.0, %v1586
      %1588 = vmatprep.mubr.f32.mxu0 0.0
      %1589 = vmatmul.mubr.f32.gmra.mxu0 %v1354
      %v1590 = vpop.f32.mrf.mxu0
      %v1591 = vadd.f32 0.0, %v1590
      %v1592 = vpop.f32.mrf.mxu0
      %v1593 = vadd.f32 0.0, %v1592
      %1594 = vmatprep.mubr.f32.mxu0 0.0
      %1595 = vmatmul.mubr.f32.gmra.mxu0 %v1357
      %v1596 = vpop.f32.mrf.mxu0
      %v1597 = vadd.f32 0.0, %v1596
      %v1598 = vpop.f32.mrf.mxu0
      %v1599 = vadd.f32 0.0, %v1598
      %1600 = vmatprep.mubr.f32.mxu0 0.0
      %1601 = vmatmul.mubr.f32.gmra.mxu0 %v1360
      %v1602 = vpop.f32.mrf.mxu0
      %v1603 = vadd.f32 0.0, %v1602
      %v1604 = vpop.f32.mrf.mxu0
      %v1605 = vadd.f32 0.0, %v1604
      %1606 = vmatprep.mubr.f32.mxu0 0.0
      %1607 = vmatmul.mubr.f32.gmra.mxu0 %v1363
      %v1608 = vpop.f32.mrf.mxu0
      %v1609 = vadd.f32 0.0, %v1608
      %v1610 = vpop.f32.mrf.mxu0
      %v1611 = vadd.f32 0.0, %v1610
      %1612 = vmatprep.mubr.f32.mxu0 0.0
      %1613 = vmatmul.mubr.f32.gmra.mxu0 %v1366
      %v1614 = vpop.f32.mrf.mxu0
      %v1615 = vadd.f32 0.0, %v1614
      %v1616 = vpop.f32.mrf.mxu0
      %v1617 = vadd.f32 0.0, %v1616
      %1618 = vmatprep.mubr.f32.mxu0 0.0
      %1619 = vmatmul.mubr.f32.gmra.mxu0 %v1369
      %v1620 = vpop.f32.mrf.mxu0
      %v1621 = vadd.f32 0.0, %v1620
      %v1622 = vpop.f32.mrf.mxu0
      %v1623 = vadd.f32 0.0, %v1622
      %1624 = vmatprep.mubr.f32.mxu0 0.0
      %1625 = vmatmul.mubr.f32.gmra.mxu0 %v1372
      %v1626 = vpop.f32.mrf.mxu0
      %v1627 = vadd.f32 0.0, %v1626
      %v1628 = vpop.f32.mrf.mxu0
      %v1629 = vadd.f32 0.0, %v1628
      %1630 = vdwg.mxu0
      %v1631 = vmax.f32 %v1441, %v1453
      %v1632 = vmax.f32 %v1447, %v1459
      %v1633 = vmax.f32 %v1631, %v1465
      %v1634 = vmax.f32 %v1632, %v1471
      %v1635 = vmax.f32 %v1633, %v1477
      %v1636 = vmax.f32 %v1634, %v1483
      %v1637 = vmax.f32 %v1635, %v1489
      %v1638 = vmax.f32 %v1636, %v1495
      %v1639 = vmax.f32 %v1637, %v1501
      %v1640 = vmax.f32 %v1638, %v1507
      %v1641 = vmax.f32 %v1639, %v1513
      %v1642 = vmax.f32 %v1640, %v1519
      %v1643 = vmax.f32 %v1641, %v1525
      %v1644 = vmax.f32 %v1642, %v1531
      %v1645 = vmax.f32 %v1643, %v1537
      %v1646 = vmax.f32 %v1644, %v1543
      %v1647 = vmax.f32 %v1645, %v1549
      %v1648 = vmax.f32 %v1646, %v1555
      %v1649 = vmax.f32 %v1647, %v1561
      %v1650 = vmax.f32 %v1648, %v1567
      %v1651 = vmax.f32 %v1649, %v1573
      %v1652 = vmax.f32 %v1650, %v1579
      %v1653 = vmax.f32 %v1651, %v1585
      %v1654 = vmax.f32 %v1652, %v1591
      %v1655 = vmax.f32 %v1653, %v1597
      %v1656 = vmax.f32 %v1654, %v1603
      %v1657 = vmax.f32 %v1655, %v1609
      %v1658 = vmax.f32 %v1656, %v1615
      %v1659 = vmax.f32 %v1657, %v1621
      %v1660 = vmax.f32 %v1658, %v1627
      %v1661 = vmax.f32 %v1659, %v1660
      %v1662 = vrot.slane %v1661, 4
      %v1663 = vmax.f32 %v1661, %v1662
      %v1664 = vrot.slane %v1663, 2
      %v1665 = vmax.f32 %v1663, %v1664
      %v1666 = vrot.slane %v1665, 1
      %v1667 = vmax.f32 %v1665, %v1666
      %v1668 = vmax.f32 %v1443, %v1455
      %v1669 = vmax.f32 %v1449, %v1461
      %v1670 = vmax.f32 %v1668, %v1467
      %v1671 = vmax.f32 %v1669, %v1473
      %v1672 = vmax.f32 %v1670, %v1479
      %v1673 = vmax.f32 %v1671, %v1485
      %v1674 = vmax.f32 %v1672, %v1491
      %v1675 = vmax.f32 %v1673, %v1497
      %v1676 = vmax.f32 %v1674, %v1503
      %v1677 = vmax.f32 %v1675, %v1509
      %v1678 = vmax.f32 %v1676, %v1515
      %v1679 = vmax.f32 %v1677, %v1521
      %v1680 = vmax.f32 %v1678, %v1527
      %v1681 = vmax.f32 %v1679, %v1533
      %v1682 = vmax.f32 %v1680, %v1539
      %v1683 = vmax.f32 %v1681, %v1545
      %v1684 = vmax.f32 %v1682, %v1551
      %v1685 = vmax.f32 %v1683, %v1557
      %v1686 = vmax.f32 %v1684, %v1563
      %v1687 = vmax.f32 %v1685, %v1569
      %v1688 = vmax.f32 %v1686, %v1575
      %v1689 = vmax.f32 %v1687, %v1581
      %v1690 = vmax.f32 %v1688, %v1587
      %v1691 = vmax.f32 %v1689, %v1593
      %v1692 = vmax.f32 %v1690, %v1599
      %v1693 = vmax.f32 %v1691, %v1605
      %v1694 = vmax.f32 %v1692, %v1611
      %v1695 = vmax.f32 %v1693, %v1617
      %v1696 = vmax.f32 %v1694, %v1623
      %v1697 = vmax.f32 %v1695, %v1629
      %v1698 = vmax.f32 %v1696, %v1697
      %v1699 = vrot.slane %v1698, 4
      %v1700 = vmax.f32 %v1698, %v1699
      %v1701 = vrot.slane %v1700, 2
      %v1702 = vmax.f32 %v1700, %v1701
      %v1703 = vrot.slane %v1702, 1
      %v1704 = vmax.f32 %v1702, %v1703
      %v1705 = vsub.f32 %v1441, %v1667
      %v1706 = vsub.f32 %v1443, %v1704
      %v1707 = vsub.f32 %v1447, %v1667
      %v1708 = vsub.f32 %v1449, %v1704
      %v1709 = vsub.f32 %v1453, %v1667
      %v1710 = vsub.f32 %v1455, %v1704
      %v1711 = vsub.f32 %v1459, %v1667
      %v1712 = vsub.f32 %v1461, %v1704
      %v1713 = vsub.f32 %v1465, %v1667
      %v1714 = vsub.f32 %v1467, %v1704
      %v1715 = vsub.f32 %v1471, %v1667
      %v1716 = vsub.f32 %v1473, %v1704
      %v1717 = vsub.f32 %v1477, %v1667
      %v1718 = vsub.f32 %v1479, %v1704
      %v1719 = vsub.f32 %v1483, %v1667
      %v1720 = vsub.f32 %v1485, %v1704
      %v1721 = vsub.f32 %v1489, %v1667
      %v1722 = vsub.f32 %v1491, %v1704
      %v1723 = vsub.f32 %v1495, %v1667
      %v1724 = vsub.f32 %v1497, %v1704
      %v1725 = vsub.f32 %v1501, %v1667
      %v1726 = vsub.f32 %v1503, %v1704
      %v1727 = vsub.f32 %v1507, %v1667
      %v1728 = vsub.f32 %v1509, %v1704
      %v1729 = vsub.f32 %v1513, %v1667
      %v1730 = vsub.f32 %v1515, %v1704
      %v1731 = vsub.f32 %v1519, %v1667
      %v1732 = vsub.f32 %v1521, %v1704
      %v1733 = vsub.f32 %v1525, %v1667
      %v1734 = vsub.f32 %v1527, %v1704
      %v1735 = vsub.f32 %v1531, %v1667
      %v1736 = vsub.f32 %v1533, %v1704
      %v1737 = vsub.f32 %v1537, %v1667
      %v1738 = vsub.f32 %v1539, %v1704
      %v1739 = vsub.f32 %v1543, %v1667
      %v1740 = vsub.f32 %v1545, %v1704
      %v1741 = vsub.f32 %v1549, %v1667
      %v1742 = vsub.f32 %v1551, %v1704
      %v1743 = vsub.f32 %v1555, %v1667
      %v1744 = vsub.f32 %v1557, %v1704
      %v1745 = vsub.f32 %v1561, %v1667
      %v1746 = vsub.f32 %v1563, %v1704
      %v1747 = vsub.f32 %v1567, %v1667
      %v1748 = vsub.f32 %v1569, %v1704
      %v1749 = vsub.f32 %v1573, %v1667
      %v1750 = vsub.f32 %v1575, %v1704
      %v1751 = vsub.f32 %v1579, %v1667
      %v1752 = vsub.f32 %v1581, %v1704
      %v1753 = vsub.f32 %v1585, %v1667
      %v1754 = vsub.f32 %v1587, %v1704
      %v1755 = vsub.f32 %v1591, %v1667
      %v1756 = vsub.f32 %v1593, %v1704
      %v1757 = vsub.f32 %v1597, %v1667
      %v1758 = vsub.f32 %v1599, %v1704
      %v1759 = vsub.f32 %v1603, %v1667
      %v1760 = vsub.f32 %v1605, %v1704
      %v1761 = vsub.f32 %v1609, %v1667
      %v1762 = vsub.f32 %v1611, %v1704
      %v1763 = vsub.f32 %v1615, %v1667
      %v1764 = vsub.f32 %v1617, %v1704
      %v1765 = vsub.f32 %v1621, %v1667
      %v1766 = vsub.f32 %v1623, %v1704
      %v1767 = vsub.f32 %v1627, %v1667
      %v1768 = vsub.f32 %v1629, %v1704
      %v1769 = vmul.f32 %v1705, 1.442695
      %v1770 = vpow.pop %v1769
      %v1771 = vmul.f32 %v1706, 1.442695
      %v1772 = vpow.pop %v1771
      %v1773 = vmul.f32 %v1707, 1.442695
      %v1774 = vpow.pop %v1773
      %v1775 = vmul.f32 %v1708, 1.442695
      %v1776 = vpow.pop %v1775
      %v1777 = vmul.f32 %v1709, 1.442695
      %v1778 = vpow.pop %v1777
      %v1779 = vmul.f32 %v1710, 1.442695
      %v1780 = vpow.pop %v1779
      %v1781 = vmul.f32 %v1711, 1.442695
      %v1782 = vpow.pop %v1781
      %v1783 = vmul.f32 %v1712, 1.442695
      %v1784 = vpow.pop %v1783
      %v1785 = vmul.f32 %v1713, 1.442695
      %v1786 = vpow.pop %v1785
      %v1787 = vmul.f32 %v1714, 1.442695
      %v1788 = vpow.pop %v1787
      %v1789 = vmul.f32 %v1715, 1.442695
      %v1790 = vpow.pop %v1789
      %v1791 = vmul.f32 %v1716, 1.442695
      %v1792 = vpow.pop %v1791
      %v1793 = vmul.f32 %v1717, 1.442695
      %v1794 = vpow.pop %v1793
      %v1795 = vmul.f32 %v1718, 1.442695
      %v1796 = vpow.pop %v1795
      %v1797 = vmul.f32 %v1719, 1.442695
      %v1798 = vpow.pop %v1797
      %v1799 = vmul.f32 %v1720, 1.442695
      %v1800 = vpow.pop %v1799
      %v1801 = vmul.f32 %v1721, 1.442695
      %v1802 = vpow.pop %v1801
      %v1803 = vmul.f32 %v1722, 1.442695
      %v1804 = vpow.pop %v1803
      %v1805 = vmul.f32 %v1723, 1.442695
      %v1806 = vpow.pop %v1805
      %v1807 = vmul.f32 %v1724, 1.442695
      %v1808 = vpow.pop %v1807
      %v1809 = vmul.f32 %v1725, 1.442695
      %v1810 = vpow.pop %v1809
      %v1811 = vmul.f32 %v1726, 1.442695
      %v1812 = vpow.pop %v1811
      %v1813 = vmul.f32 %v1727, 1.442695
      %v1814 = vpow.pop %v1813
      %v1815 = vmul.f32 %v1728, 1.442695
      %v1816 = vpow.pop %v1815
      %v1817 = vmul.f32 %v1729, 1.442695
      %v1818 = vpow.pop %v1817
      %v1819 = vmul.f32 %v1730, 1.442695
      %v1820 = vpow.pop %v1819
      %v1821 = vmul.f32 %v1731, 1.442695
      %v1822 = vpow.pop %v1821
      %v1823 = vmul.f32 %v1732, 1.442695
      %v1824 = vpow.pop %v1823
      %v1825 = vmul.f32 %v1733, 1.442695
      %v1826 = vpow.pop %v1825
      %v1827 = vmul.f32 %v1734, 1.442695
      %v1828 = vpow.pop %v1827
      %v1829 = vmul.f32 %v1735, 1.442695
      %v1830 = vpow.pop %v1829
      %v1831 = vmul.f32 %v1736, 1.442695
      %v1832 = vpow.pop %v1831
      %v1833 = vmul.f32 %v1737, 1.442695
      %v1834 = vpow.pop %v1833
      %v1835 = vmul.f32 %v1738, 1.442695
      %v1836 = vpow.pop %v1835
      %v1837 = vmul.f32 %v1739, 1.442695
      %v1838 = vpow.pop %v1837
      %v1839 = vmul.f32 %v1740, 1.442695
      %v1840 = vpow.pop %v1839
      %v1841 = vmul.f32 %v1741, 1.442695
      %v1842 = vpow.pop %v1841
      %v1843 = vmul.f32 %v1742, 1.442695
      %v1844 = vpow.pop %v1843
      %v1845 = vmul.f32 %v1743, 1.442695
      %v1846 = vpow.pop %v1845
      %v1847 = vmul.f32 %v1744, 1.442695
      %v1848 = vpow.pop %v1847
      %v1849 = vmul.f32 %v1745, 1.442695
      %v1850 = vpow.pop %v1849
      %v1851 = vmul.f32 %v1746, 1.442695
      %v1852 = vpow.pop %v1851
      %v1853 = vmul.f32 %v1747, 1.442695
      %v1854 = vpow.pop %v1853
      %v1855 = vmul.f32 %v1748, 1.442695
      %v1856 = vpow.pop %v1855
      %v1857 = vmul.f32 %v1749, 1.442695
      %v1858 = vpow.pop %v1857
      %v1859 = vmul.f32 %v1750, 1.442695
      %v1860 = vpow.pop %v1859
      %v1861 = vmul.f32 %v1751, 1.442695
      %v1862 = vpow.pop %v1861
      %v1863 = vmul.f32 %v1752, 1.442695
      %v1864 = vpow.pop %v1863
      %v1865 = vmul.f32 %v1753, 1.442695
      %v1866 = vpow.pop %v1865
      %v1867 = vmul.f32 %v1754, 1.442695
      %v1868 = vpow.pop %v1867
      %v1869 = vmul.f32 %v1755, 1.442695
      %v1870 = vpow.pop %v1869
      %v1871 = vmul.f32 %v1756, 1.442695
      %v1872 = vpow.pop %v1871
      %v1873 = vmul.f32 %v1757, 1.442695
      %v1874 = vpow.pop %v1873
      %v1875 = vmul.f32 %v1758, 1.442695
      %v1876 = vpow.pop %v1875
      %v1877 = vmul.f32 %v1759, 1.442695
      %v1878 = vpow.pop %v1877
      %v1879 = vmul.f32 %v1760, 1.442695
      %v1880 = vpow.pop %v1879
      %v1881 = vmul.f32 %v1761, 1.442695
      %v1882 = vpow.pop %v1881
      %v1883 = vmul.f32 %v1762, 1.442695
      %v1884 = vpow.pop %v1883
      %v1885 = vmul.f32 %v1763, 1.442695
      %v1886 = vpow.pop %v1885
      %v1887 = vmul.f32 %v1764, 1.442695
      %v1888 = vpow.pop %v1887
      %v1889 = vmul.f32 %v1765, 1.442695
      %v1890 = vpow.pop %v1889
      %v1891 = vmul.f32 %v1766, 1.442695
      %v1892 = vpow.pop %v1891
      %v1893 = vmul.f32 %v1767, 1.442695
      %v1894 = vpow.pop %v1893
      %v1895 = vmul.f32 %v1768, 1.442695
      %v1896 = vpow.pop %v1895
      %v1897 = vadd.f32 %v1770, %v1774
      %v1898 = vadd.f32 %v1897, %v1778
      %v1899 = vadd.f32 %v1898, %v1782
      %v1900 = vadd.f32 %v1899, %v1786
      %v1901 = vadd.f32 %v1900, %v1790
      %v1902 = vadd.f32 %v1901, %v1794
      %v1903 = vadd.f32 %v1902, %v1798
      %v1904 = vadd.f32 %v1903, %v1802
      %v1905 = vadd.f32 %v1904, %v1806
      %v1906 = vadd.f32 %v1905, %v1810
      %v1907 = vadd.f32 %v1906, %v1814
      %v1908 = vadd.f32 %v1907, %v1818
      %v1909 = vadd.f32 %v1908, %v1822
      %v1910 = vadd.f32 %v1909, %v1826
      %v1911 = vadd.f32 %v1910, %v1830
      %v1912 = vadd.f32 %v1911, %v1834
      %v1913 = vadd.f32 %v1912, %v1838
      %v1914 = vadd.f32 %v1913, %v1842
      %v1915 = vadd.f32 %v1914, %v1846
      %v1916 = vadd.f32 %v1915, %v1850
      %v1917 = vadd.f32 %v1916, %v1854
      %v1918 = vadd.f32 %v1917, %v1858
      %v1919 = vadd.f32 %v1918, %v1862
      %v1920 = vadd.f32 %v1919, %v1866
      %v1921 = vadd.f32 %v1920, %v1870
      %v1922 = vadd.f32 %v1921, %v1874
      %v1923 = vadd.f32 %v1922, %v1878
      %v1924 = vadd.f32 %v1923, %v1882
      %v1925 = vadd.f32 %v1924, %v1886
      %v1926 = vadd.f32 %v1925, %v1890
      %v1927 = vadd.f32 %v1926, %v1894
      %v1928 = vrot.slane %v1927, 4
      %v1929 = vadd.f32 %v1927, %v1928
      %v1930 = vrot.slane %v1929, 2
      %v1931 = vadd.f32 %v1929, %v1930
      %v1932 = vrot.slane %v1931, 1
      %v1933 = vadd.f32 %v1931, %v1932
      %v1934 = vadd.f32 %v1772, %v1776
      %v1935 = vadd.f32 %v1934, %v1780
      %v1936 = vadd.f32 %v1935, %v1784
      %v1937 = vadd.f32 %v1936, %v1788
      %v1938 = vadd.f32 %v1937, %v1792
      %v1939 = vadd.f32 %v1938, %v1796
      %v1940 = vadd.f32 %v1939, %v1800
      %v1941 = vadd.f32 %v1940, %v1804
      %v1942 = vadd.f32 %v1941, %v1808
      %v1943 = vadd.f32 %v1942, %v1812
      %v1944 = vadd.f32 %v1943, %v1816
      %v1945 = vadd.f32 %v1944, %v1820
      %v1946 = vadd.f32 %v1945, %v1824
      %v1947 = vadd.f32 %v1946, %v1828
      %v1948 = vadd.f32 %v1947, %v1832
      %v1949 = vadd.f32 %v1948, %v1836
      %v1950 = vadd.f32 %v1949, %v1840
      %v1951 = vadd.f32 %v1950, %v1844
      %v1952 = vadd.f32 %v1951, %v1848
      %v1953 = vadd.f32 %v1952, %v1852
      %v1954 = vadd.f32 %v1953, %v1856
      %v1955 = vadd.f32 %v1954, %v1860
      %v1956 = vadd.f32 %v1955, %v1864
      %v1957 = vadd.f32 %v1956, %v1868
      %v1958 = vadd.f32 %v1957, %v1872
      %v1959 = vadd.f32 %v1958, %v1876
      %v1960 = vadd.f32 %v1959, %v1880
      %v1961 = vadd.f32 %v1960, %v1884
      %v1962 = vadd.f32 %v1961, %v1888
      %v1963 = vadd.f32 %v1962, %v1892
      %v1964 = vadd.f32 %v1963, %v1896
      %v1965 = vrot.slane %v1964, 4
      %v1966 = vadd.f32 %v1964, %v1965
      %v1967 = vrot.slane %v1966, 2
      %v1968 = vadd.f32 %v1966, %v1967
      %v1969 = vrot.slane %v1968, 1
      %v1970 = vadd.f32 %v1968, %v1969
      %v1971 = vpack.c.bf16 %v363, %v363
      %v1972 = vpack.c.bf16 %v365, %v365
      %v1973 = vpack.c.bf16 %v1774, %v1770
      %v1974 = vpack.c.bf16 %v1776, %v1772
      %v1975 = vpack.c.bf16 %v1782, %v1778
      %v1976 = vpack.c.bf16 %v1784, %v1780
      %v1977 = vpack.c.bf16 %v1790, %v1786
      %v1978 = vpack.c.bf16 %v1792, %v1788
      %v1979 = vpack.c.bf16 %v1798, %v1794
      %v1980 = vpack.c.bf16 %v1800, %v1796
      %v1981 = vpack.c.bf16 %v1806, %v1802
      %v1982 = vpack.c.bf16 %v1808, %v1804
      %v1983 = vpack.c.bf16 %v1814, %v1810
      %v1984 = vpack.c.bf16 %v1816, %v1812
      %v1985 = vpack.c.bf16 %v1822, %v1818
      %v1986 = vpack.c.bf16 %v1824, %v1820
      %v1987 = vpack.c.bf16 %v1830, %v1826
      %v1988 = vpack.c.bf16 %v1832, %v1828
      %v1989 = vpack.c.bf16 %v1838, %v1834
      %v1990 = vpack.c.bf16 %v1840, %v1836
      %v1991 = vpack.c.bf16 %v1846, %v1842
      %v1992 = vpack.c.bf16 %v1848, %v1844
      %v1993 = vpack.c.bf16 %v1854, %v1850
      %v1994 = vpack.c.bf16 %v1856, %v1852
      %v1995 = vpack.c.bf16 %v1862, %v1858
      %v1996 = vpack.c.bf16 %v1864, %v1860
      %v1997 = vpack.c.bf16 %v1870, %v1866
      %v1998 = vpack.c.bf16 %v1872, %v1868
      %v1999 = vpack.c.bf16 %v1878, %v1874
      %v2000 = vpack.c.bf16 %v1880, %v1876
      %v2001 = vpack.c.bf16 %v1886, %v1882
      %v2002 = vpack.c.bf16 %v1888, %v1884
      %v2003 = vpack.c.bf16 %v1894, %v1890
      %v2004 = vpack.c.bf16 %v1896, %v1892
      %2005 = vmatprep.subr.bf16.mxu0 %v1988
      %2006 = vmatpush1.bf16.msra.mxu0 %v1987
      %2007 = vmatprep.subr.bf16.mxu0 %v1986
      %2008 = vmatpush1.bf16.msra.mxu0 %v1985
      %2009 = vmatprep.subr.bf16.mxu0 %v1984
      %2010 = vmatpush1.bf16.msra.mxu0 %v1983
      %2011 = vmatprep.subr.bf16.mxu0 %v1982
      %2012 = vmatpush1.bf16.msra.mxu0 %v1981
      %2013 = vmatprep.subr.bf16.mxu0 %v1980
      %2014 = vmatpush1.bf16.msra.mxu0 %v1979
      %2015 = vmatprep.subr.bf16.mxu0 %v1978
      %2016 = vmatpush1.bf16.msra.mxu0 %v1977
      %2017 = vmatprep.subr.bf16.mxu0 %v1976
      %2018 = vmatpush1.bf16.msra.mxu0 %v1975
      %2019 = vmatprep.subr.bf16.mxu0 %v1974
      %2020 = vmatpush1.bf16.msra.mxu0 %v1973
      %2021 = vmatprep.subr.bf16.mxu0 %v2004
      %2022 = vmatpush2.bf16.msra.mxu0 %v2003
      %2023 = vmatprep.subr.bf16.mxu0 %v2002
      %2024 = vmatpush2.bf16.msra.mxu0 %v2001
      %2025 = vmatprep.subr.bf16.mxu0 %v2000
      %2026 = vmatpush2.bf16.msra.mxu0 %v1999
      %2027 = vmatprep.subr.bf16.mxu0 %v1998
      %2028 = vmatpush2.bf16.msra.mxu0 %v1997
      %2029 = vmatprep.subr.bf16.mxu0 %v1996
      %2030 = vmatpush2.bf16.msra.mxu0 %v1995
      %2031 = vmatprep.subr.bf16.mxu0 %v1994
      %2032 = vmatpush2.bf16.msra.mxu0 %v1993
      %2033 = vmatprep.subr.bf16.mxu0 %v1992
      %2034 = vmatpush2.bf16.msra.mxu0 %v1991
      %2035 = vmatprep.subr.bf16.mxu0 %v1990
      %2036 = vmatpush2.bf16.msra.mxu0 %v1989
      %2037 = vmatprep.mubr.bf16.mxu0 %v1972
      %2038 = vmatmul.mubr.bf16.gmra.mxu0 %v1971
      %v2039 = vpop.f32.mrf.mxu0
      %v2040 = vadd.f32 0.0, %v2039
      %v2041 = vpop.f32.mrf.mxu0
      %v2042 = vadd.f32 0.0, %v2041
      %v2043 = vpop.f32.mrf.mxu0
      %v2044 = vpop.f32.mrf.mxu0
      %2045 = vdwg.mxu0
      %v2046 = vrcp.pop %v1933
      %v2047 = vrcp.pop %v1970
      %v2048 = vmul.f32 %v2040, %v2046
      %v2049 = vmul.f32 %v2042, %v2047
      %2050 = vxpose.xlu0.b32.start [1/16] %v349, 128
      %2051 = vxpose.xlu0.b32.cont [2/16] 0.0, 128
      %2052 = vxpose.xlu0.b32.cont [3/16] 0.0, 128
      %2053 = vxpose.xlu0.b32.cont [4/16] 0.0, 128
      %2054 = vxpose.xlu0.b32.cont [5/16] 0.0, 128
      %2055 = vxpose.xlu0.b32.cont [6/16] 0.0, 128
      %2056 = vxpose.xlu0.b32.cont [7/16] 0.0, 128
      %2057 = vxpose.xlu0.b32.cont [8/16] 0.0, 128
      %2058 = vxpose.xlu0.b32.cont [9/16] 0.0, 128
      %2059 = vxpose.xlu0.b32.cont [10/16] 0.0, 128
      %2060 = vxpose.xlu0.b32.cont [11/16] 0.0, 128
      %2061 = vxpose.xlu0.b32.cont [12/16] 0.0, 128
      %2062 = vxpose.xlu0.b32.cont [13/16] 0.0, 128
      %2063 = vxpose.xlu0.b32.cont [14/16] 0.0, 128
      %2064 = vxpose.xlu0.b32.cont [15/16] 0.0, 128
      %2065 = vxpose.xlu0.b32.end [16/16] 0.0, 128
      %v2066 = vpop.trf.xlu0
      %v2067 = vpop.trf.xlu0
      %v2068 = vpop.trf.xlu0
      %v2069 = vpop.trf.xlu0
      %v2070 = vpop.trf.xlu0
      %v2071 = vpop.trf.xlu0
      %v2072 = vpop.trf.xlu0
      %v2073 = vpop.trf.xlu0
      %v2074 = vpop.trf.xlu0
      %v2075 = vpop.trf.xlu0
      %v2076 = vpop.trf.xlu0
      %v2077 = vpop.trf.xlu0
      %v2078 = vpop.trf.xlu0
      %v2079 = vpop.trf.xlu0
      %v2080 = vpop.trf.xlu0
      %v2081 = vpop.trf.xlu0
      %2082 = vxpose.xlu0.b32.start [1/16] %v351, 128
      %2083 = vxpose.xlu0.b32.cont [2/16] 0.0, 128
      %2084 = vxpose.xlu0.b32.cont [3/16] 0.0, 128
      %2085 = vxpose.xlu0.b32.cont [4/16] 0.0, 128
      %2086 = vxpose.xlu0.b32.cont [5/16] 0.0, 128
      %2087 = vxpose.xlu0.b32.cont [6/16] 0.0, 128
      %2088 = vxpose.xlu0.b32.cont [7/16] 0.0, 128
      %2089 = vxpose.xlu0.b32.cont [8/16] 0.0, 128
      %2090 = vxpose.xlu0.b32.cont [9/16] 0.0, 128
      %2091 = vxpose.xlu0.b32.cont [10/16] 0.0, 128
      %2092 = vxpose.xlu0.b32.cont [11/16] 0.0, 128
      %2093 = vxpose.xlu0.b32.cont [12/16] 0.0, 128
      %2094 = vxpose.xlu0.b32.cont [13/16] 0.0, 128
      %2095 = vxpose.xlu0.b32.cont [14/16] 0.0, 128
      %2096 = vxpose.xlu0.b32.cont [15/16] 0.0, 128
      %2097 = vxpose.xlu0.b32.end [16/16] 0.0, 128
      %v2098 = vpop.trf.xlu0
      %v2099 = vpop.trf.xlu0
      %v2100 = vpop.trf.xlu0
      %v2101 = vpop.trf.xlu0
      %v2102 = vpop.trf.xlu0
      %v2103 = vpop.trf.xlu0
      %v2104 = vpop.trf.xlu0
      %v2105 = vpop.trf.xlu0
      %v2106 = vpop.trf.xlu0
      %v2107 = vpop.trf.xlu0
      %v2108 = vpop.trf.xlu0
      %v2109 = vpop.trf.xlu0
      %v2110 = vpop.trf.xlu0
      %v2111 = vpop.trf.xlu0
      %v2112 = vpop.trf.xlu0
      %v2113 = vpop.trf.xlu0
      %v2115 = vsel %vm441, %v2066, 0
      %v2118 = vsel %vm441, %v2067, 0
      %v2121 = vsel %vm441, %v2068, 0
      %v2124 = vsel %vm441, %v2069, 0
      %v2127 = vsel %vm441, %v2070, 0
      %v2130 = vsel %vm441, %v2071, 0
      %v2133 = vsel %vm441, %v2072, 0
      %v2136 = vsel %vm441, %v2073, 0
      %v2139 = vsel %vm441, %v2074, 0
      %v2142 = vsel %vm441, %v2075, 0
      %v2145 = vsel %vm441, %v2076, 0
      %v2148 = vsel %vm441, %v2077, 0
      %v2151 = vsel %vm441, %v2078, 0
      %v2154 = vsel %vm441, %v2079, 0
      %v2157 = vsel %vm441, %v2080, 0
      %v2160 = vsel %vm441, %v2081, 0
      %v2163 = vsel %vm441, %v2098, 0
      %v2166 = vsel %vm441, %v2099, 0
      %v2169 = vsel %vm441, %v2100, 0
      %v2172 = vsel %vm441, %v2101, 0
      %v2175 = vsel %vm441, %v2102, 0
      %v2178 = vsel %vm441, %v2103, 0
      %v2181 = vsel %vm441, %v2104, 0
      %v2184 = vsel %vm441, %v2105, 0
      %v2187 = vsel %vm441, %v2106, 0
      %v2190 = vsel %vm441, %v2107, 0
      %v2193 = vsel %vm441, %v2108, 0
      %v2196 = vsel %vm441, %v2109, 0
      %v2199 = vsel %vm441, %v2110, 0
      %v2202 = vsel %vm441, %v2111, 0
      %v2205 = vsel %vm441, %v2112, 0
      %v2208 = vsel %vm441, %v2113, 0
      %2210 = vmatprep.subr.mxu0 0.0
      %2211 = vmatpush1.msra.mxu0 0.0
      %2212 = vmatprep.subr.mxu0 0.0
      %2213 = vmatpush1.msra.mxu0 0.0
      %2214 = vmatprep.subr.mxu0 0.0
      %2215 = vmatpush1.msra.mxu0 0.0
      %2216 = vmatprep.subr.mxu0 0.0
      %2217 = vmatpush1.msra.mxu0 0.0
      %2218 = vmatprep.subr.mxu0 0.0
      %2219 = vmatpush1.msra.mxu0 0.0
      %2220 = vmatprep.subr.mxu0 0.0
      %2221 = vmatpush1.msra.mxu0 0.0
      %2222 = vmatprep.subr.mxu0 0.0
      %2223 = vmatpush1.msra.mxu0 0.0
      %2224 = vmatprep.subr.mxu0 0.0
      %2225 = vmatpush1.msra.mxu0 0.0
      %2226 = vmatprep.subr.mxu0 0.0
      %2227 = vmatpush1.msra.mxu0 0.0
      %2228 = vmatprep.subr.mxu0 0.0
      %2229 = vmatpush1.msra.mxu0 0.0
      %2230 = vmatprep.subr.mxu0 0.0
      %2231 = vmatpush1.msra.mxu0 0.0
      %2232 = vmatprep.subr.mxu0 0.0
      %2233 = vmatpush1.msra.mxu0 0.0
      %2234 = vmatprep.subr.mxu0 0.0
      %2235 = vmatpush1.msra.mxu0 0.0
      %2236 = vmatprep.subr.mxu0 0.0
      %2237 = vmatpush1.msra.mxu0 0.0
      %2238 = vmatprep.subr.mxu0 0.0
      %2239 = vmatpush1.msra.mxu0 0.0
      %2240 = vmatprep.subr.mxu0 %v331
      %2241 = vmatpush1.msra.mxu0 %v329
      %2242 = vmatprep.subr.mxu0 0.0
      %2243 = vmatpush2.msra.mxu0 0.0
      %2244 = vmatprep.subr.mxu0 0.0
      %2245 = vmatpush2.msra.mxu0 0.0
      %2246 = vmatprep.subr.mxu0 0.0
      %2247 = vmatpush2.msra.mxu0 0.0
      %2248 = vmatprep.subr.mxu0 0.0
      %2249 = vmatpush2.msra.mxu0 0.0
      %2250 = vmatprep.subr.mxu0 0.0
      %2251 = vmatpush2.msra.mxu0 0.0
      %2252 = vmatprep.subr.mxu0 0.0
      %2253 = vmatpush2.msra.mxu0 0.0
      %2254 = vmatprep.subr.mxu0 0.0
      %2255 = vmatpush2.msra.mxu0 0.0
      %2256 = vmatprep.subr.mxu0 0.0
      %2257 = vmatpush2.msra.mxu0 0.0
      %2258 = vmatprep.subr.mxu0 0.0
      %2259 = vmatpush2.msra.mxu0 0.0
      %2260 = vmatprep.subr.mxu0 0.0
      %2261 = vmatpush2.msra.mxu0 0.0
      %2262 = vmatprep.subr.mxu0 0.0
      %2263 = vmatpush2.msra.mxu0 0.0
      %2264 = vmatprep.subr.mxu0 0.0
      %2265 = vmatpush2.msra.mxu0 0.0
      %2266 = vmatprep.subr.mxu0 0.0
      %2267 = vmatpush2.msra.mxu0 0.0
      %2268 = vmatprep.subr.mxu0 0.0
      %2269 = vmatpush2.msra.mxu0 0.0
      %2270 = vmatprep.subr.mxu0 0.0
      %2271 = vmatpush2.msra.mxu0 0.0
      %2272 = vmatprep.subr.mxu0 0.0
      %2273 = vmatpush2.msra.mxu0 0.0
      %2274 = vmatprep.mubr.f32.mxu0 0.0
      %2275 = vmatmul.mubr.f32.gmra.mxu0 %v2115
      %v2276 = vpop.f32.mrf.mxu0
      %v2277 = vadd.f32 0.0, %v2276
      %v2278 = vpop.f32.mrf.mxu0
      %v2279 = vadd.f32 0.0, %v2278
      %2280 = vmatprep.mubr.f32.mxu0 0.0
      %2281 = vmatmul.mubr.f32.gmra.mxu0 %v2118
      %v2282 = vpop.f32.mrf.mxu0
      %v2283 = vadd.f32 0.0, %v2282
      %v2284 = vpop.f32.mrf.mxu0
      %v2285 = vadd.f32 0.0, %v2284
      %2286 = vmatprep.mubr.f32.mxu0 0.0
      %2287 = vmatmul.mubr.f32.gmra.mxu0 %v2121
      %v2288 = vpop.f32.mrf.mxu0
      %v2289 = vadd.f32 0.0, %v2288
      %v2290 = vpop.f32.mrf.mxu0
      %v2291 = vadd.f32 0.0, %v2290
      %2292 = vmatprep.mubr.f32.mxu0 0.0
      %2293 = vmatmul.mubr.f32.gmra.mxu0 %v2124
      %v2294 = vpop.f32.mrf.mxu0
      %v2295 = vadd.f32 0.0, %v2294
      %v2296 = vpop.f32.mrf.mxu0
      %v2297 = vadd.f32 0.0, %v2296
      %2298 = vmatprep.mubr.f32.mxu0 0.0
      %2299 = vmatmul.mubr.f32.gmra.mxu0 %v2127
      %v2300 = vpop.f32.mrf.mxu0
      %v2301 = vadd.f32 0.0, %v2300
      %v2302 = vpop.f32.mrf.mxu0
      %v2303 = vadd.f32 0.0, %v2302
      %2304 = vmatprep.mubr.f32.mxu0 0.0
      %2305 = vmatmul.mubr.f32.gmra.mxu0 %v2130
      %v2306 = vpop.f32.mrf.mxu0
      %v2307 = vadd.f32 0.0, %v2306
      %v2308 = vpop.f32.mrf.mxu0
      %v2309 = vadd.f32 0.0, %v2308
      %2310 = vmatprep.mubr.f32.mxu0 0.0
      %2311 = vmatmul.mubr.f32.gmra.mxu0 %v2133
      %v2312 = vpop.f32.mrf.mxu0
      %v2313 = vadd.f32 0.0, %v2312
      %v2314 = vpop.f32.mrf.mxu0
      %v2315 = vadd.f32 0.0, %v2314
      %2316 = vmatprep.mubr.f32.mxu0 0.0
      %2317 = vmatmul.mubr.f32.gmra.mxu0 %v2136
      %v2318 = vpop.f32.mrf.mxu0
      %v2319 = vadd.f32 0.0, %v2318
      %v2320 = vpop.f32.mrf.mxu0
      %v2321 = vadd.f32 0.0, %v2320
      %2322 = vmatprep.mubr.f32.mxu0 0.0
      %2323 = vmatmul.mubr.f32.gmra.mxu0 %v2139
      %v2324 = vpop.f32.mrf.mxu0
      %v2325 = vadd.f32 0.0, %v2324
      %v2326 = vpop.f32.mrf.mxu0
      %v2327 = vadd.f32 0.0, %v2326
      %2328 = vmatprep.mubr.f32.mxu0 0.0
      %2329 = vmatmul.mubr.f32.gmra.mxu0 %v2142
      %v2330 = vpop.f32.mrf.mxu0
      %v2331 = vadd.f32 0.0, %v2330
      %v2332 = vpop.f32.mrf.mxu0
      %v2333 = vadd.f32 0.0, %v2332
      %2334 = vmatprep.mubr.f32.mxu0 0.0
      %2335 = vmatmul.mubr.f32.gmra.mxu0 %v2145
      %v2336 = vpop.f32.mrf.mxu0
      %v2337 = vadd.f32 0.0, %v2336
      %v2338 = vpop.f32.mrf.mxu0
      %v2339 = vadd.f32 0.0, %v2338
      %2340 = vmatprep.mubr.f32.mxu0 0.0
      %2341 = vmatmul.mubr.f32.gmra.mxu0 %v2148
      %v2342 = vpop.f32.mrf.mxu0
      %v2343 = vadd.f32 0.0, %v2342
      %v2344 = vpop.f32.mrf.mxu0
      %v2345 = vadd.f32 0.0, %v2344
      %2346 = vmatprep.mubr.f32.mxu0 0.0
      %2347 = vmatmul.mubr.f32.gmra.mxu0 %v2151
      %v2348 = vpop.f32.mrf.mxu0
      %v2349 = vadd.f32 0.0, %v2348
      %v2350 = vpop.f32.mrf.mxu0
      %v2351 = vadd.f32 0.0, %v2350
      %2352 = vmatprep.mubr.f32.mxu0 0.0
      %2353 = vmatmul.mubr.f32.gmra.mxu0 %v2154
      %v2354 = vpop.f32.mrf.mxu0
      %v2355 = vadd.f32 0.0, %v2354
      %v2356 = vpop.f32.mrf.mxu0
      %v2357 = vadd.f32 0.0, %v2356
      %2358 = vmatprep.mubr.f32.mxu0 0.0
      %2359 = vmatmul.mubr.f32.gmra.mxu0 %v2157
      %v2360 = vpop.f32.mrf.mxu0
      %v2361 = vadd.f32 0.0, %v2360
      %v2362 = vpop.f32.mrf.mxu0
      %v2363 = vadd.f32 0.0, %v2362
      %2364 = vmatprep.mubr.f32.mxu0 0.0
      %2365 = vmatmul.mubr.f32.gmra.mxu0 %v2160
      %v2366 = vpop.f32.mrf.mxu0
      %v2367 = vadd.f32 0.0, %v2366
      %v2368 = vpop.f32.mrf.mxu0
      %v2369 = vadd.f32 0.0, %v2368
      %2370 = vmatprep.mubr.f32.mxu0 0.0
      %2371 = vmatmul.mubr.f32.gmra.mxu0 %v2163
      %v2372 = vpop.f32.mrf.mxu0
      %v2373 = vadd.f32 0.0, %v2372
      %v2374 = vpop.f32.mrf.mxu0
      %v2375 = vadd.f32 0.0, %v2374
      %2376 = vmatprep.mubr.f32.mxu0 0.0
      %2377 = vmatmul.mubr.f32.gmra.mxu0 %v2166
      %v2378 = vpop.f32.mrf.mxu0
      %v2379 = vadd.f32 0.0, %v2378
      %v2380 = vpop.f32.mrf.mxu0
      %v2381 = vadd.f32 0.0, %v2380
      %2382 = vmatprep.mubr.f32.mxu0 0.0
      %2383 = vmatmul.mubr.f32.gmra.mxu0 %v2169
      %v2384 = vpop.f32.mrf.mxu0
      %v2385 = vadd.f32 0.0, %v2384
      %v2386 = vpop.f32.mrf.mxu0
      %v2387 = vadd.f32 0.0, %v2386
      %2388 = vmatprep.mubr.f32.mxu0 0.0
      %2389 = vmatmul.mubr.f32.gmra.mxu0 %v2172
      %v2390 = vpop.f32.mrf.mxu0
      %v2391 = vadd.f32 0.0, %v2390
      %v2392 = vpop.f32.mrf.mxu0
      %v2393 = vadd.f32 0.0, %v2392
      %2394 = vmatprep.mubr.f32.mxu0 0.0
      %2395 = vmatmul.mubr.f32.gmra.mxu0 %v2175
      %v2396 = vpop.f32.mrf.mxu0
      %v2397 = vadd.f32 0.0, %v2396
      %v2398 = vpop.f32.mrf.mxu0
      %v2399 = vadd.f32 0.0, %v2398
      %2400 = vmatprep.mubr.f32.mxu0 0.0
      %2401 = vmatmul.mubr.f32.gmra.mxu0 %v2178
      %v2402 = vpop.f32.mrf.mxu0
      %v2403 = vadd.f32 0.0, %v2402
      %v2404 = vpop.f32.mrf.mxu0
      %v2405 = vadd.f32 0.0, %v2404
      %2406 = vmatprep.mubr.f32.mxu0 0.0
      %2407 = vmatmul.mubr.f32.gmra.mxu0 %v2181
      %v2408 = vpop.f32.mrf.mxu0
      %v2409 = vadd.f32 0.0, %v2408
      %v2410 = vpop.f32.mrf.mxu0
      %v2411 = vadd.f32 0.0, %v2410
      %2412 = vmatprep.mubr.f32.mxu0 0.0
      %2413 = vmatmul.mubr.f32.gmra.mxu0 %v2184
      %v2414 = vpop.f32.mrf.mxu0
      %v2415 = vadd.f32 0.0, %v2414
      %v2416 = vpop.f32.mrf.mxu0
      %v2417 = vadd.f32 0.0, %v2416
      %2418 = vmatprep.mubr.f32.mxu0 0.0
      %2419 = vmatmul.mubr.f32.gmra.mxu0 %v2187
      %v2420 = vpop.f32.mrf.mxu0
      %v2421 = vadd.f32 0.0, %v2420
      %v2422 = vpop.f32.mrf.mxu0
      %v2423 = vadd.f32 0.0, %v2422
      %2424 = vmatprep.mubr.f32.mxu0 0.0
      %2425 = vmatmul.mubr.f32.gmra.mxu0 %v2190
      %v2426 = vpop.f32.mrf.mxu0
      %v2427 = vadd.f32 0.0, %v2426
      %v2428 = vpop.f32.mrf.mxu0
      %v2429 = vadd.f32 0.0, %v2428
      %2430 = vmatprep.mubr.f32.mxu0 0.0
      %2431 = vmatmul.mubr.f32.gmra.mxu0 %v2193
      %v2432 = vpop.f32.mrf.mxu0
      %v2433 = vadd.f32 0.0, %v2432
      %v2434 = vpop.f32.mrf.mxu0
      %v2435 = vadd.f32 0.0, %v2434
      %2436 = vmatprep.mubr.f32.mxu0 0.0
      %2437 = vmatmul.mubr.f32.gmra.mxu0 %v2196
      %v2438 = vpop.f32.mrf.mxu0
      %v2439 = vadd.f32 0.0, %v2438
      %v2440 = vpop.f32.mrf.mxu0
      %v2441 = vadd.f32 0.0, %v2440
      %2442 = vmatprep.mubr.f32.mxu0 0.0
      %2443 = vmatmul.mubr.f32.gmra.mxu0 %v2199
      %v2444 = vpop.f32.mrf.mxu0
      %v2445 = vadd.f32 0.0, %v2444
      %v2446 = vpop.f32.mrf.mxu0
      %v2447 = vadd.f32 0.0, %v2446
      %2448 = vmatprep.mubr.f32.mxu0 0.0
      %2449 = vmatmul.mubr.f32.gmra.mxu0 %v2202
      %v2450 = vpop.f32.mrf.mxu0
      %v2451 = vadd.f32 0.0, %v2450
      %v2452 = vpop.f32.mrf.mxu0
      %v2453 = vadd.f32 0.0, %v2452
      %2454 = vmatprep.mubr.f32.mxu0 0.0
      %2455 = vmatmul.mubr.f32.gmra.mxu0 %v2205
      %v2456 = vpop.f32.mrf.mxu0
      %v2457 = vadd.f32 0.0, %v2456
      %v2458 = vpop.f32.mrf.mxu0
      %v2459 = vadd.f32 0.0, %v2458
      %2460 = vmatprep.mubr.f32.mxu0 0.0
      %2461 = vmatmul.mubr.f32.gmra.mxu0 %v2208
      %v2462 = vpop.f32.mrf.mxu0
      %v2463 = vadd.f32 0.0, %v2462
      %v2464 = vpop.f32.mrf.mxu0
      %v2465 = vadd.f32 0.0, %v2464
      %2466 = vdwg.mxu0
      %v2467 = vmax.f32 %v2277, %v2289
      %v2468 = vmax.f32 %v2283, %v2295
      %v2469 = vmax.f32 %v2467, %v2301
      %v2470 = vmax.f32 %v2468, %v2307
      %v2471 = vmax.f32 %v2469, %v2313
      %v2472 = vmax.f32 %v2470, %v2319
      %v2473 = vmax.f32 %v2471, %v2325
      %v2474 = vmax.f32 %v2472, %v2331
      %v2475 = vmax.f32 %v2473, %v2337
      %v2476 = vmax.f32 %v2474, %v2343
      %v2477 = vmax.f32 %v2475, %v2349
      %v2478 = vmax.f32 %v2476, %v2355
      %v2479 = vmax.f32 %v2477, %v2361
      %v2480 = vmax.f32 %v2478, %v2367
      %v2481 = vmax.f32 %v2479, %v2373
      %v2482 = vmax.f32 %v2480, %v2379
      %v2483 = vmax.f32 %v2481, %v2385
      %v2484 = vmax.f32 %v2482, %v2391
      %v2485 = vmax.f32 %v2483, %v2397
      %v2486 = vmax.f32 %v2484, %v2403
      %v2487 = vmax.f32 %v2485, %v2409
      %v2488 = vmax.f32 %v2486, %v2415
      %v2489 = vmax.f32 %v2487, %v2421
      %v2490 = vmax.f32 %v2488, %v2427
      %v2491 = vmax.f32 %v2489, %v2433
      %v2492 = vmax.f32 %v2490, %v2439
      %v2493 = vmax.f32 %v2491, %v2445
      %v2494 = vmax.f32 %v2492, %v2451
      %v2495 = vmax.f32 %v2493, %v2457
      %v2496 = vmax.f32 %v2494, %v2463
      %v2497 = vmax.f32 %v2495, %v2496
      %v2498 = vrot.slane %v2497, 4
      %v2499 = vmax.f32 %v2497, %v2498
      %v2500 = vrot.slane %v2499, 2
      %v2501 = vmax.f32 %v2499, %v2500
      %v2502 = vrot.slane %v2501, 1
      %v2503 = vmax.f32 %v2501, %v2502
      %v2504 = vmax.f32 %v2279, %v2291
      %v2505 = vmax.f32 %v2285, %v2297
      %v2506 = vmax.f32 %v2504, %v2303
      %v2507 = vmax.f32 %v2505, %v2309
      %v2508 = vmax.f32 %v2506, %v2315
      %v2509 = vmax.f32 %v2507, %v2321
      %v2510 = vmax.f32 %v2508, %v2327
      %v2511 = vmax.f32 %v2509, %v2333
      %v2512 = vmax.f32 %v2510, %v2339
      %v2513 = vmax.f32 %v2511, %v2345
      %v2514 = vmax.f32 %v2512, %v2351
      %v2515 = vmax.f32 %v2513, %v2357
      %v2516 = vmax.f32 %v2514, %v2363
      %v2517 = vmax.f32 %v2515, %v2369
      %v2518 = vmax.f32 %v2516, %v2375
      %v2519 = vmax.f32 %v2517, %v2381
      %v2520 = vmax.f32 %v2518, %v2387
      %v2521 = vmax.f32 %v2519, %v2393
      %v2522 = vmax.f32 %v2520, %v2399
      %v2523 = vmax.f32 %v2521, %v2405
      %v2524 = vmax.f32 %v2522, %v2411
      %v2525 = vmax.f32 %v2523, %v2417
      %v2526 = vmax.f32 %v2524, %v2423
      %v2527 = vmax.f32 %v2525, %v2429
      %v2528 = vmax.f32 %v2526, %v2435
      %v2529 = vmax.f32 %v2527, %v2441
      %v2530 = vmax.f32 %v2528, %v2447
      %v2531 = vmax.f32 %v2529, %v2453
      %v2532 = vmax.f32 %v2530, %v2459
      %v2533 = vmax.f32 %v2531, %v2465
      %v2534 = vmax.f32 %v2532, %v2533
      %v2535 = vrot.slane %v2534, 4
      %v2536 = vmax.f32 %v2534, %v2535
      %v2537 = vrot.slane %v2536, 2
      %v2538 = vmax.f32 %v2536, %v2537
      %v2539 = vrot.slane %v2538, 1
      %v2540 = vmax.f32 %v2538, %v2539
      %v2541 = vsub.f32 %v2277, %v2503
      %v2542 = vsub.f32 %v2279, %v2540
      %v2543 = vsub.f32 %v2283, %v2503
      %v2544 = vsub.f32 %v2285, %v2540
      %v2545 = vsub.f32 %v2289, %v2503
      %v2546 = vsub.f32 %v2291, %v2540
      %v2547 = vsub.f32 %v2295, %v2503
      %v2548 = vsub.f32 %v2297, %v2540
      %v2549 = vsub.f32 %v2301, %v2503
      %v2550 = vsub.f32 %v2303, %v2540
      %v2551 = vsub.f32 %v2307, %v2503
      %v2552 = vsub.f32 %v2309, %v2540
      %v2553 = vsub.f32 %v2313, %v2503
      %v2554 = vsub.f32 %v2315, %v2540
      %v2555 = vsub.f32 %v2319, %v2503
      %v2556 = vsub.f32 %v2321, %v2540
      %v2557 = vsub.f32 %v2325, %v2503
      %v2558 = vsub.f32 %v2327, %v2540
      %v2559 = vsub.f32 %v2331, %v2503
      %v2560 = vsub.f32 %v2333, %v2540
      %v2561 = vsub.f32 %v2337, %v2503
      %v2562 = vsub.f32 %v2339, %v2540
      %v2563 = vsub.f32 %v2343, %v2503
      %v2564 = vsub.f32 %v2345, %v2540
      %v2565 = vsub.f32 %v2349, %v2503
      %v2566 = vsub.f32 %v2351, %v2540
      %v2567 = vsub.f32 %v2355, %v2503
      %v2568 = vsub.f32 %v2357, %v2540
      %v2569 = vsub.f32 %v2361, %v2503
      %v2570 = vsub.f32 %v2363, %v2540
      %v2571 = vsub.f32 %v2367, %v2503
      %v2572 = vsub.f32 %v2369, %v2540
      %v2573 = vsub.f32 %v2373, %v2503
      %v2574 = vsub.f32 %v2375, %v2540
      %v2575 = vsub.f32 %v2379, %v2503
      %v2576 = vsub.f32 %v2381, %v2540
      %v2577 = vsub.f32 %v2385, %v2503
      %v2578 = vsub.f32 %v2387, %v2540
      %v2579 = vsub.f32 %v2391, %v2503
      %v2580 = vsub.f32 %v2393, %v2540
      %v2581 = vsub.f32 %v2397, %v2503
      %v2582 = vsub.f32 %v2399, %v2540
      %v2583 = vsub.f32 %v2403, %v2503
      %v2584 = vsub.f32 %v2405, %v2540
      %v2585 = vsub.f32 %v2409, %v2503
      %v2586 = vsub.f32 %v2411, %v2540
      %v2587 = vsub.f32 %v2415, %v2503
      %v2588 = vsub.f32 %v2417, %v2540
      %v2589 = vsub.f32 %v2421, %v2503
      %v2590 = vsub.f32 %v2423, %v2540
      %v2591 = vsub.f32 %v2427, %v2503
      %v2592 = vsub.f32 %v2429, %v2540
      %v2593 = vsub.f32 %v2433, %v2503
      %v2594 = vsub.f32 %v2435, %v2540
      %v2595 = vsub.f32 %v2439, %v2503
      %v2596 = vsub.f32 %v2441, %v2540
      %v2597 = vsub.f32 %v2445, %v2503
      %v2598 = vsub.f32 %v2447, %v2540
      %v2599 = vsub.f32 %v2451, %v2503
      %v2600 = vsub.f32 %v2453, %v2540
      %v2601 = vsub.f32 %v2457, %v2503
      %v2602 = vsub.f32 %v2459, %v2540
      %v2603 = vsub.f32 %v2463, %v2503
      %v2604 = vsub.f32 %v2465, %v2540
      %v2605 = vmul.f32 %v2541, 1.442695
      %v2606 = vpow.pop %v2605
      %v2607 = vmul.f32 %v2542, 1.442695
      %v2608 = vpow.pop %v2607
      %v2609 = vmul.f32 %v2543, 1.442695
      %v2610 = vpow.pop %v2609
      %v2611 = vmul.f32 %v2544, 1.442695
      %v2612 = vpow.pop %v2611
      %v2613 = vmul.f32 %v2545, 1.442695
      %v2614 = vpow.pop %v2613
      %v2615 = vmul.f32 %v2546, 1.442695
      %v2616 = vpow.pop %v2615
      %v2617 = vmul.f32 %v2547, 1.442695
      %v2618 = vpow.pop %v2617
      %v2619 = vmul.f32 %v2548, 1.442695
      %v2620 = vpow.pop %v2619
      %v2621 = vmul.f32 %v2549, 1.442695
      %v2622 = vpow.pop %v2621
      %v2623 = vmul.f32 %v2550, 1.442695
      %v2624 = vpow.pop %v2623
      %v2625 = vmul.f32 %v2551, 1.442695
      %v2626 = vpow.pop %v2625
      %v2627 = vmul.f32 %v2552, 1.442695
      %v2628 = vpow.pop %v2627
      %v2629 = vmul.f32 %v2553, 1.442695
      %v2630 = vpow.pop %v2629
      %v2631 = vmul.f32 %v2554, 1.442695
      %v2632 = vpow.pop %v2631
      %v2633 = vmul.f32 %v2555, 1.442695
      %v2634 = vpow.pop %v2633
      %v2635 = vmul.f32 %v2556, 1.442695
      %v2636 = vpow.pop %v2635
      %v2637 = vmul.f32 %v2557, 1.442695
      %v2638 = vpow.pop %v2637
      %v2639 = vmul.f32 %v2558, 1.442695
      %v2640 = vpow.pop %v2639
      %v2641 = vmul.f32 %v2559, 1.442695
      %v2642 = vpow.pop %v2641
      %v2643 = vmul.f32 %v2560, 1.442695
      %v2644 = vpow.pop %v2643
      %v2645 = vmul.f32 %v2561, 1.442695
      %v2646 = vpow.pop %v2645
      %v2647 = vmul.f32 %v2562, 1.442695
      %v2648 = vpow.pop %v2647
      %v2649 = vmul.f32 %v2563, 1.442695
      %v2650 = vpow.pop %v2649
      %v2651 = vmul.f32 %v2564, 1.442695
      %v2652 = vpow.pop %v2651
      %v2653 = vmul.f32 %v2565, 1.442695
      %v2654 = vpow.pop %v2653
      %v2655 = vmul.f32 %v2566, 1.442695
      %v2656 = vpow.pop %v2655
      %v2657 = vmul.f32 %v2567, 1.442695
      %v2658 = vpow.pop %v2657
      %v2659 = vmul.f32 %v2568, 1.442695
      %v2660 = vpow.pop %v2659
      %v2661 = vmul.f32 %v2569, 1.442695
      %v2662 = vpow.pop %v2661
      %v2663 = vmul.f32 %v2570, 1.442695
      %v2664 = vpow.pop %v2663
      %v2665 = vmul.f32 %v2571, 1.442695
      %v2666 = vpow.pop %v2665
      %v2667 = vmul.f32 %v2572, 1.442695
      %v2668 = vpow.pop %v2667
      %v2669 = vmul.f32 %v2573, 1.442695
      %v2670 = vpow.pop %v2669
      %v2671 = vmul.f32 %v2574, 1.442695
      %v2672 = vpow.pop %v2671
      %v2673 = vmul.f32 %v2575, 1.442695
      %v2674 = vpow.pop %v2673
      %v2675 = vmul.f32 %v2576, 1.442695
      %v2676 = vpow.pop %v2675
      %v2677 = vmul.f32 %v2577, 1.442695
      %v2678 = vpow.pop %v2677
      %v2679 = vmul.f32 %v2578, 1.442695
      %v2680 = vpow.pop %v2679
      %v2681 = vmul.f32 %v2579, 1.442695
      %v2682 = vpow.pop %v2681
      %v2683 = vmul.f32 %v2580, 1.442695
      %v2684 = vpow.pop %v2683
      %v2685 = vmul.f32 %v2581, 1.442695
      %v2686 = vpow.pop %v2685
      %v2687 = vmul.f32 %v2582, 1.442695
      %v2688 = vpow.pop %v2687
      %v2689 = vmul.f32 %v2583, 1.442695
      %v2690 = vpow.pop %v2689
      %v2691 = vmul.f32 %v2584, 1.442695
      %v2692 = vpow.pop %v2691
      %v2693 = vmul.f32 %v2585, 1.442695
      %v2694 = vpow.pop %v2693
      %v2695 = vmul.f32 %v2586, 1.442695
      %v2696 = vpow.pop %v2695
      %v2697 = vmul.f32 %v2587, 1.442695
      %v2698 = vpow.pop %v2697
      %v2699 = vmul.f32 %v2588, 1.442695
      %v2700 = vpow.pop %v2699
      %v2701 = vmul.f32 %v2589, 1.442695
      %v2702 = vpow.pop %v2701
      %v2703 = vmul.f32 %v2590, 1.442695
      %v2704 = vpow.pop %v2703
      %v2705 = vmul.f32 %v2591, 1.442695
      %v2706 = vpow.pop %v2705
      %v2707 = vmul.f32 %v2592, 1.442695
      %v2708 = vpow.pop %v2707
      %v2709 = vmul.f32 %v2593, 1.442695
      %v2710 = vpow.pop %v2709
      %v2711 = vmul.f32 %v2594, 1.442695
      %v2712 = vpow.pop %v2711
      %v2713 = vmul.f32 %v2595, 1.442695
      %v2714 = vpow.pop %v2713
      %v2715 = vmul.f32 %v2596, 1.442695
      %v2716 = vpow.pop %v2715
      %v2717 = vmul.f32 %v2597, 1.442695
      %v2718 = vpow.pop %v2717
      %v2719 = vmul.f32 %v2598, 1.442695
      %v2720 = vpow.pop %v2719
      %v2721 = vmul.f32 %v2599, 1.442695
      %v2722 = vpow.pop %v2721
      %v2723 = vmul.f32 %v2600, 1.442695
      %v2724 = vpow.pop %v2723
      %v2725 = vmul.f32 %v2601, 1.442695
      %v2726 = vpow.pop %v2725
      %v2727 = vmul.f32 %v2602, 1.442695
      %v2728 = vpow.pop %v2727
      %v2729 = vmul.f32 %v2603, 1.442695
      %v2730 = vpow.pop %v2729
      %v2731 = vmul.f32 %v2604, 1.442695
      %v2732 = vpow.pop %v2731
      %v2733 = vadd.f32 %v2606, %v2610
      %v2734 = vadd.f32 %v2733, %v2614
      %v2735 = vadd.f32 %v2734, %v2618
      %v2736 = vadd.f32 %v2735, %v2622
      %v2737 = vadd.f32 %v2736, %v2626
      %v2738 = vadd.f32 %v2737, %v2630
      %v2739 = vadd.f32 %v2738, %v2634
      %v2740 = vadd.f32 %v2739, %v2638
      %v2741 = vadd.f32 %v2740, %v2642
      %v2742 = vadd.f32 %v2741, %v2646
      %v2743 = vadd.f32 %v2742, %v2650
      %v2744 = vadd.f32 %v2743, %v2654
      %v2745 = vadd.f32 %v2744, %v2658
      %v2746 = vadd.f32 %v2745, %v2662
      %v2747 = vadd.f32 %v2746, %v2666
      %v2748 = vadd.f32 %v2747, %v2670
      %v2749 = vadd.f32 %v2748, %v2674
      %v2750 = vadd.f32 %v2749, %v2678
      %v2751 = vadd.f32 %v2750, %v2682
      %v2752 = vadd.f32 %v2751, %v2686
      %v2753 = vadd.f32 %v2752, %v2690
      %v2754 = vadd.f32 %v2753, %v2694
      %v2755 = vadd.f32 %v2754, %v2698
      %v2756 = vadd.f32 %v2755, %v2702
      %v2757 = vadd.f32 %v2756, %v2706
      %v2758 = vadd.f32 %v2757, %v2710
      %v2759 = vadd.f32 %v2758, %v2714
      %v2760 = vadd.f32 %v2759, %v2718
      %v2761 = vadd.f32 %v2760, %v2722
      %v2762 = vadd.f32 %v2761, %v2726
      %v2763 = vadd.f32 %v2762, %v2730
      %v2764 = vrot.slane %v2763, 4
      %v2765 = vadd.f32 %v2763, %v2764
      %v2766 = vrot.slane %v2765, 2
      %v2767 = vadd.f32 %v2765, %v2766
      %v2768 = vrot.slane %v2767, 1
      %v2769 = vadd.f32 %v2767, %v2768
      %v2770 = vadd.f32 %v2608, %v2612
      %v2771 = vadd.f32 %v2770, %v2616
      %v2772 = vadd.f32 %v2771, %v2620
      %v2773 = vadd.f32 %v2772, %v2624
      %v2774 = vadd.f32 %v2773, %v2628
      %v2775 = vadd.f32 %v2774, %v2632
      %v2776 = vadd.f32 %v2775, %v2636
      %v2777 = vadd.f32 %v2776, %v2640
      %v2778 = vadd.f32 %v2777, %v2644
      %v2779 = vadd.f32 %v2778, %v2648
      %v2780 = vadd.f32 %v2779, %v2652
      %v2781 = vadd.f32 %v2780, %v2656
      %v2782 = vadd.f32 %v2781, %v2660
      %v2783 = vadd.f32 %v2782, %v2664
      %v2784 = vadd.f32 %v2783, %v2668
      %v2785 = vadd.f32 %v2784, %v2672
      %v2786 = vadd.f32 %v2785, %v2676
      %v2787 = vadd.f32 %v2786, %v2680
      %v2788 = vadd.f32 %v2787, %v2684
      %v2789 = vadd.f32 %v2788, %v2688
      %v2790 = vadd.f32 %v2789, %v2692
      %v2791 = vadd.f32 %v2790, %v2696
      %v2792 = vadd.f32 %v2791, %v2700
      %v2793 = vadd.f32 %v2792, %v2704
      %v2794 = vadd.f32 %v2793, %v2708
      %v2795 = vadd.f32 %v2794, %v2712
      %v2796 = vadd.f32 %v2795, %v2716
      %v2797 = vadd.f32 %v2796, %v2720
      %v2798 = vadd.f32 %v2797, %v2724
      %v2799 = vadd.f32 %v2798, %v2728
      %v2800 = vadd.f32 %v2799, %v2732
      %v2801 = vrot.slane %v2800, 4
      %v2802 = vadd.f32 %v2800, %v2801
      %v2803 = vrot.slane %v2802, 2
      %v2804 = vadd.f32 %v2802, %v2803
      %v2805 = vrot.slane %v2804, 1
      %v2806 = vadd.f32 %v2804, %v2805
      %v2807 = vpack.c.bf16 %v369, %v369
      %v2808 = vpack.c.bf16 %v371, %v371
      %v2809 = vpack.c.bf16 %v2610, %v2606
      %v2810 = vpack.c.bf16 %v2612, %v2608
      %v2811 = vpack.c.bf16 %v2618, %v2614
      %v2812 = vpack.c.bf16 %v2620, %v2616
      %v2813 = vpack.c.bf16 %v2626, %v2622
      %v2814 = vpack.c.bf16 %v2628, %v2624
      %v2815 = vpack.c.bf16 %v2634, %v2630
      %v2816 = vpack.c.bf16 %v2636, %v2632
      %v2817 = vpack.c.bf16 %v2642, %v2638
      %v2818 = vpack.c.bf16 %v2644, %v2640
      %v2819 = vpack.c.bf16 %v2650, %v2646
      %v2820 = vpack.c.bf16 %v2652, %v2648
      %v2821 = vpack.c.bf16 %v2658, %v2654
      %v2822 = vpack.c.bf16 %v2660, %v2656
      %v2823 = vpack.c.bf16 %v2666, %v2662
      %v2824 = vpack.c.bf16 %v2668, %v2664
      %v2825 = vpack.c.bf16 %v2674, %v2670
      %v2826 = vpack.c.bf16 %v2676, %v2672
      %v2827 = vpack.c.bf16 %v2682, %v2678
      %v2828 = vpack.c.bf16 %v2684, %v2680
      %v2829 = vpack.c.bf16 %v2690, %v2686
      %v2830 = vpack.c.bf16 %v2692, %v2688
      %v2831 = vpack.c.bf16 %v2698, %v2694
      %v2832 = vpack.c.bf16 %v2700, %v2696
      %v2833 = vpack.c.bf16 %v2706, %v2702
      %v2834 = vpack.c.bf16 %v2708, %v2704
      %v2835 = vpack.c.bf16 %v2714, %v2710
      %v2836 = vpack.c.bf16 %v2716, %v2712
      %v2837 = vpack.c.bf16 %v2722, %v2718
      %v2838 = vpack.c.bf16 %v2724, %v2720
      %v2839 = vpack.c.bf16 %v2730, %v2726
      %v2840 = vpack.c.bf16 %v2732, %v2728
      %2841 = vmatprep.subr.bf16.mxu0 %v2824
      %2842 = vmatpush1.bf16.msra.mxu0 %v2823
      %2843 = vmatprep.subr.bf16.mxu0 %v2822
      %2844 = vmatpush1.bf16.msra.mxu0 %v2821
      %2845 = vmatprep.subr.bf16.mxu0 %v2820
      %2846 = vmatpush1.bf16.msra.mxu0 %v2819
      %2847 = vmatprep.subr.bf16.mxu0 %v2818
      %2848 = vmatpush1.bf16.msra.mxu0 %v2817
      %2849 = vmatprep.subr.bf16.mxu0 %v2816
      %2850 = vmatpush1.bf16.msra.mxu0 %v2815
      %2851 = vmatprep.subr.bf16.mxu0 %v2814
      %2852 = vmatpush1.bf16.msra.mxu0 %v2813
      %2853 = vmatprep.subr.bf16.mxu0 %v2812
      %2854 = vmatpush1.bf16.msra.mxu0 %v2811
      %2855 = vmatprep.subr.bf16.mxu0 %v2810
      %2856 = vmatpush1.bf16.msra.mxu0 %v2809
      %2857 = vmatprep.subr.bf16.mxu0 %v2840
      %2858 = vmatpush2.bf16.msra.mxu0 %v2839
      %2859 = vmatprep.subr.bf16.mxu0 %v2838
      %2860 = vmatpush2.bf16.msra.mxu0 %v2837
      %2861 = vmatprep.subr.bf16.mxu0 %v2836
      %2862 = vmatpush2.bf16.msra.mxu0 %v2835
      %2863 = vmatprep.subr.bf16.mxu0 %v2834
      %2864 = vmatpush2.bf16.msra.mxu0 %v2833
      %2865 = vmatprep.subr.bf16.mxu0 %v2832
      %2866 = vmatpush2.bf16.msra.mxu0 %v2831
      %2867 = vmatprep.subr.bf16.mxu0 %v2830
      %2868 = vmatpush2.bf16.msra.mxu0 %v2829
      %2869 = vmatprep.subr.bf16.mxu0 %v2828
      %2870 = vmatpush2.bf16.msra.mxu0 %v2827
      %2871 = vmatprep.subr.bf16.mxu0 %v2826
      %2872 = vmatpush2.bf16.msra.mxu0 %v2825
      %2873 = vmatprep.mubr.bf16.mxu0 %v2808
      %2874 = vmatmul.mubr.bf16.gmra.mxu0 %v2807
      %v2875 = vpop.f32.mrf.mxu0
      %v2876 = vadd.f32 0.0, %v2875
      %v2877 = vpop.f32.mrf.mxu0
      %v2878 = vadd.f32 0.0, %v2877
      %v2879 = vpop.f32.mrf.mxu0
      %v2880 = vpop.f32.mrf.mxu0
      %2881 = vdwg.mxu0
      %v2882 = vrcp.pop %v2769
      %v2883 = vrcp.pop %v2806
      %v2884 = vmul.f32 %v2876, %v2882
      %v2885 = vmul.f32 %v2878, %v2883
      %2886 = vxpose.xlu0.b32.start [1/16] %v353, 128
      %2887 = vxpose.xlu0.b32.cont [2/16] 0.0, 128
      %2888 = vxpose.xlu0.b32.cont [3/16] 0.0, 128
      %2889 = vxpose.xlu0.b32.cont [4/16] 0.0, 128
      %2890 = vxpose.xlu0.b32.cont [5/16] 0.0, 128
      %2891 = vxpose.xlu0.b32.cont [6/16] 0.0, 128
      %2892 = vxpose.xlu0.b32.cont [7/16] 0.0, 128
      %2893 = vxpose.xlu0.b32.cont [8/16] 0.0, 128
      %2894 = vxpose.xlu0.b32.cont [9/16] 0.0, 128
      %2895 = vxpose.xlu0.b32.cont [10/16] 0.0, 128
      %2896 = vxpose.xlu0.b32.cont [11/16] 0.0, 128
      %2897 = vxpose.xlu0.b32.cont [12/16] 0.0, 128
      %2898 = vxpose.xlu0.b32.cont [13/16] 0.0, 128
      %2899 = vxpose.xlu0.b32.cont [14/16] 0.0, 128
      %2900 = vxpose.xlu0.b32.cont [15/16] 0.0, 128
      %2901 = vxpose.xlu0.b32.end [16/16] 0.0, 128
      %v2902 = vpop.trf.xlu0
      %v2903 = vpop.trf.xlu0
      %v2904 = vpop.trf.xlu0
      %v2905 = vpop.trf.xlu0
      %v2906 = vpop.trf.xlu0
      %v2907 = vpop.trf.xlu0
      %v2908 = vpop.trf.xlu0
      %v2909 = vpop.trf.xlu0
      %v2910 = vpop.trf.xlu0
      %v2911 = vpop.trf.xlu0
      %v2912 = vpop.trf.xlu0
      %v2913 = vpop.trf.xlu0
      %v2914 = vpop.trf.xlu0
      %v2915 = vpop.trf.xlu0
      %v2916 = vpop.trf.xlu0
      %v2917 = vpop.trf.xlu0
      %2918 = vxpose.xlu0.b32.start [1/16] %v355, 128
      %2919 = vxpose.xlu0.b32.cont [2/16] 0.0, 128
      %2920 = vxpose.xlu0.b32.cont [3/16] 0.0, 128
      %2921 = vxpose.xlu0.b32.cont [4/16] 0.0, 128
      %2922 = vxpose.xlu0.b32.cont [5/16] 0.0, 128
      %2923 = vxpose.xlu0.b32.cont [6/16] 0.0, 128
      %2924 = vxpose.xlu0.b32.cont [7/16] 0.0, 128
      %2925 = vxpose.xlu0.b32.cont [8/16] 0.0, 128
      %2926 = vxpose.xlu0.b32.cont [9/16] 0.0, 128
      %2927 = vxpose.xlu0.b32.cont [10/16] 0.0, 128
      %2928 = vxpose.xlu0.b32.cont [11/16] 0.0, 128
      %2929 = vxpose.xlu0.b32.cont [12/16] 0.0, 128
      %2930 = vxpose.xlu0.b32.cont [13/16] 0.0, 128
      %2931 = vxpose.xlu0.b32.cont [14/16] 0.0, 128
      %2932 = vxpose.xlu0.b32.cont [15/16] 0.0, 128
      %2933 = vxpose.xlu0.b32.end [16/16] 0.0, 128
      %v2934 = vpop.trf.xlu0
      %v2935 = vpop.trf.xlu0
      %v2936 = vpop.trf.xlu0
      %v2937 = vpop.trf.xlu0
      %v2938 = vpop.trf.xlu0
      %v2939 = vpop.trf.xlu0
      %v2940 = vpop.trf.xlu0
      %v2941 = vpop.trf.xlu0
      %v2942 = vpop.trf.xlu0
      %v2943 = vpop.trf.xlu0
      %v2944 = vpop.trf.xlu0
      %v2945 = vpop.trf.xlu0
      %v2946 = vpop.trf.xlu0
      %v2947 = vpop.trf.xlu0
      %v2948 = vpop.trf.xlu0
      %v2949 = vpop.trf.xlu0
      %v2951 = vsel %vm441, %v2902, 0
      %v2954 = vsel %vm441, %v2903, 0
      %v2957 = vsel %vm441, %v2904, 0
      %v2960 = vsel %vm441, %v2905, 0
      %v2963 = vsel %vm441, %v2906, 0
      %v2966 = vsel %vm441, %v2907, 0
      %v2969 = vsel %vm441, %v2908, 0
      %v2972 = vsel %vm441, %v2909, 0
      %v2975 = vsel %vm441, %v2910, 0
      %v2978 = vsel %vm441, %v2911, 0
      %v2981 = vsel %vm441, %v2912, 0
      %v2984 = vsel %vm441, %v2913, 0
      %v2987 = vsel %vm441, %v2914, 0
      %v2990 = vsel %vm441, %v2915, 0
      %v2993 = vsel %vm441, %v2916, 0
      %v2996 = vsel %vm441, %v2917, 0
      %v2999 = vsel %vm441, %v2934, 0
      %v3002 = vsel %vm441, %v2935, 0
      %v3005 = vsel %vm441, %v2936, 0
      %v3008 = vsel %vm441, %v2937, 0
      %v3011 = vsel %vm441, %v2938, 0
      %v3014 = vsel %vm441, %v2939, 0
      %v3017 = vsel %vm441, %v2940, 0
      %v3020 = vsel %vm441, %v2941, 0
      %v3023 = vsel %vm441, %v2942, 0
      %v3026 = vsel %vm441, %v2943, 0
      %v3029 = vsel %vm441, %v2944, 0
      %v3032 = vsel %vm441, %v2945, 0
      %v3035 = vsel %vm441, %v2946, 0
      %v3038 = vsel %vm441, %v2947, 0
      %v3041 = vsel %vm441, %v2948, 0
      %v3044 = vsel %vm441, %v2949, 0
      %3046 = vmatprep.subr.mxu0 0.0
      %3047 = vmatpush1.msra.mxu0 0.0
      %3048 = vmatprep.subr.mxu0 0.0
      %3049 = vmatpush1.msra.mxu0 0.0
      %3050 = vmatprep.subr.mxu0 0.0
      %3051 = vmatpush1.msra.mxu0 0.0
      %3052 = vmatprep.subr.mxu0 0.0
      %3053 = vmatpush1.msra.mxu0 0.0
      %3054 = vmatprep.subr.mxu0 0.0
      %3055 = vmatpush1.msra.mxu0 0.0
      %3056 = vmatprep.subr.mxu0 0.0
      %3057 = vmatpush1.msra.mxu0 0.0
      %3058 = vmatprep.subr.mxu0 0.0
      %3059 = vmatpush1.msra.mxu0 0.0
      %3060 = vmatprep.subr.mxu0 0.0
      %3061 = vmatpush1.msra.mxu0 0.0
      %3062 = vmatprep.subr.mxu0 0.0
      %3063 = vmatpush1.msra.mxu0 0.0
      %3064 = vmatprep.subr.mxu0 0.0
      %3065 = vmatpush1.msra.mxu0 0.0
      %3066 = vmatprep.subr.mxu0 0.0
      %3067 = vmatpush1.msra.mxu0 0.0
      %3068 = vmatprep.subr.mxu0 0.0
      %3069 = vmatpush1.msra.mxu0 0.0
      %3070 = vmatprep.subr.mxu0 0.0
      %3071 = vmatpush1.msra.mxu0 0.0
      %3072 = vmatprep.subr.mxu0 0.0
      %3073 = vmatpush1.msra.mxu0 0.0
      %3074 = vmatprep.subr.mxu0 0.0
      %3075 = vmatpush1.msra.mxu0 0.0
      %3076 = vmatprep.subr.mxu0 %v335
      %3077 = vmatpush1.msra.mxu0 %v333
      %3078 = vmatprep.subr.mxu0 0.0
      %3079 = vmatpush2.msra.mxu0 0.0
      %3080 = vmatprep.subr.mxu0 0.0
      %3081 = vmatpush2.msra.mxu0 0.0
      %3082 = vmatprep.subr.mxu0 0.0
      %3083 = vmatpush2.msra.mxu0 0.0
      %3084 = vmatprep.subr.mxu0 0.0
      %3085 = vmatpush2.msra.mxu0 0.0
      %3086 = vmatprep.subr.mxu0 0.0
      %3087 = vmatpush2.msra.mxu0 0.0
      %3088 = vmatprep.subr.mxu0 0.0
      %3089 = vmatpush2.msra.mxu0 0.0
      %3090 = vmatprep.subr.mxu0 0.0
      %3091 = vmatpush2.msra.mxu0 0.0
      %3092 = vmatprep.subr.mxu0 0.0
      %3093 = vmatpush2.msra.mxu0 0.0
      %3094 = vmatprep.subr.mxu0 0.0
      %3095 = vmatpush2.msra.mxu0 0.0
      %3096 = vmatprep.subr.mxu0 0.0
      %3097 = vmatpush2.msra.mxu0 0.0
      %3098 = vmatprep.subr.mxu0 0.0
      %3099 = vmatpush2.msra.mxu0 0.0
      %3100 = vmatprep.subr.mxu0 0.0
      %3101 = vmatpush2.msra.mxu0 0.0
      %3102 = vmatprep.subr.mxu0 0.0
      %3103 = vmatpush2.msra.mxu0 0.0
      %3104 = vmatprep.subr.mxu0 0.0
      %3105 = vmatpush2.msra.mxu0 0.0
      %3106 = vmatprep.subr.mxu0 0.0
      %3107 = vmatpush2.msra.mxu0 0.0
      %3108 = vmatprep.subr.mxu0 0.0
      %3109 = vmatpush2.msra.mxu0 0.0
      %3110 = vmatprep.mubr.f32.mxu0 0.0
      %3111 = vmatmul.mubr.f32.gmra.mxu0 %v2951
      %v3112 = vpop.f32.mrf.mxu0
      %v3113 = vadd.f32 0.0, %v3112
      %v3114 = vpop.f32.mrf.mxu0
      %v3115 = vadd.f32 0.0, %v3114
      %3116 = vmatprep.mubr.f32.mxu0 0.0
      %3117 = vmatmul.mubr.f32.gmra.mxu0 %v2954
      %v3118 = vpop.f32.mrf.mxu0
      %v3119 = vadd.f32 0.0, %v3118
      %v3120 = vpop.f32.mrf.mxu0
      %v3121 = vadd.f32 0.0, %v3120
      %3122 = vmatprep.mubr.f32.mxu0 0.0
      %3123 = vmatmul.mubr.f32.gmra.mxu0 %v2957
      %v3124 = vpop.f32.mrf.mxu0
      %v3125 = vadd.f32 0.0, %v3124
      %v3126 = vpop.f32.mrf.mxu0
      %v3127 = vadd.f32 0.0, %v3126
      %3128 = vmatprep.mubr.f32.mxu0 0.0
      %3129 = vmatmul.mubr.f32.gmra.mxu0 %v2960
      %v3130 = vpop.f32.mrf.mxu0
      %v3131 = vadd.f32 0.0, %v3130
      %v3132 = vpop.f32.mrf.mxu0
      %v3133 = vadd.f32 0.0, %v3132
      %3134 = vmatprep.mubr.f32.mxu0 0.0
      %3135 = vmatmul.mubr.f32.gmra.mxu0 %v2963
      %v3136 = vpop.f32.mrf.mxu0
      %v3137 = vadd.f32 0.0, %v3136
      %v3138 = vpop.f32.mrf.mxu0
      %v3139 = vadd.f32 0.0, %v3138
      %3140 = vmatprep.mubr.f32.mxu0 0.0
      %3141 = vmatmul.mubr.f32.gmra.mxu0 %v2966
      %v3142 = vpop.f32.mrf.mxu0
      %v3143 = vadd.f32 0.0, %v3142
      %v3144 = vpop.f32.mrf.mxu0
      %v3145 = vadd.f32 0.0, %v3144
      %3146 = vmatprep.mubr.f32.mxu0 0.0
      %3147 = vmatmul.mubr.f32.gmra.mxu0 %v2969
      %v3148 = vpop.f32.mrf.mxu0
      %v3149 = vadd.f32 0.0, %v3148
      %v3150 = vpop.f32.mrf.mxu0
      %v3151 = vadd.f32 0.0, %v3150
      %3152 = vmatprep.mubr.f32.mxu0 0.0
      %3153 = vmatmul.mubr.f32.gmra.mxu0 %v2972
      %v3154 = vpop.f32.mrf.mxu0
      %v3155 = vadd.f32 0.0, %v3154
      %v3156 = vpop.f32.mrf.mxu0
      %v3157 = vadd.f32 0.0, %v3156
      %3158 = vmatprep.mubr.f32.mxu0 0.0
      %3159 = vmatmul.mubr.f32.gmra.mxu0 %v2975
      %v3160 = vpop.f32.mrf.mxu0
      %v3161 = vadd.f32 0.0, %v3160
      %v3162 = vpop.f32.mrf.mxu0
      %v3163 = vadd.f32 0.0, %v3162
      %3164 = vmatprep.mubr.f32.mxu0 0.0
      %3165 = vmatmul.mubr.f32.gmra.mxu0 %v2978
      %v3166 = vpop.f32.mrf.mxu0
      %v3167 = vadd.f32 0.0, %v3166
      %v3168 = vpop.f32.mrf.mxu0
      %v3169 = vadd.f32 0.0, %v3168
      %3170 = vmatprep.mubr.f32.mxu0 0.0
      %3171 = vmatmul.mubr.f32.gmra.mxu0 %v2981
      %v3172 = vpop.f32.mrf.mxu0
      %v3173 = vadd.f32 0.0, %v3172
      %v3174 = vpop.f32.mrf.mxu0
      %v3175 = vadd.f32 0.0, %v3174
      %3176 = vmatprep.mubr.f32.mxu0 0.0
      %3177 = vmatmul.mubr.f32.gmra.mxu0 %v2984
      %v3178 = vpop.f32.mrf.mxu0
      %v3179 = vadd.f32 0.0, %v3178
      %v3180 = vpop.f32.mrf.mxu0
      %v3181 = vadd.f32 0.0, %v3180
      %3182 = vmatprep.mubr.f32.mxu0 0.0
      %3183 = vmatmul.mubr.f32.gmra.mxu0 %v2987
      %v3184 = vpop.f32.mrf.mxu0
      %v3185 = vadd.f32 0.0, %v3184
      %v3186 = vpop.f32.mrf.mxu0
      %v3187 = vadd.f32 0.0, %v3186
      %3188 = vmatprep.mubr.f32.mxu0 0.0
      %3189 = vmatmul.mubr.f32.gmra.mxu0 %v2990
      %v3190 = vpop.f32.mrf.mxu0
      %v3191 = vadd.f32 0.0, %v3190
      %v3192 = vpop.f32.mrf.mxu0
      %v3193 = vadd.f32 0.0, %v3192
      %3194 = vmatprep.mubr.f32.mxu0 0.0
      %3195 = vmatmul.mubr.f32.gmra.mxu0 %v2993
      %v3196 = vpop.f32.mrf.mxu0
      %v3197 = vadd.f32 0.0, %v3196
      %v3198 = vpop.f32.mrf.mxu0
      %v3199 = vadd.f32 0.0, %v3198
      %3200 = vmatprep.mubr.f32.mxu0 0.0
      %3201 = vmatmul.mubr.f32.gmra.mxu0 %v2996
      %v3202 = vpop.f32.mrf.mxu0
      %v3203 = vadd.f32 0.0, %v3202
      %v3204 = vpop.f32.mrf.mxu0
      %v3205 = vadd.f32 0.0, %v3204
      %3206 = vmatprep.mubr.f32.mxu0 0.0
      %3207 = vmatmul.mubr.f32.gmra.mxu0 %v2999
      %v3208 = vpop.f32.mrf.mxu0
      %v3209 = vadd.f32 0.0, %v3208
      %v3210 = vpop.f32.mrf.mxu0
      %v3211 = vadd.f32 0.0, %v3210
      %3212 = vmatprep.mubr.f32.mxu0 0.0
      %3213 = vmatmul.mubr.f32.gmra.mxu0 %v3002
      %v3214 = vpop.f32.mrf.mxu0
      %v3215 = vadd.f32 0.0, %v3214
      %v3216 = vpop.f32.mrf.mxu0
      %v3217 = vadd.f32 0.0, %v3216
      %3218 = vmatprep.mubr.f32.mxu0 0.0
      %3219 = vmatmul.mubr.f32.gmra.mxu0 %v3005
      %v3220 = vpop.f32.mrf.mxu0
      %v3221 = vadd.f32 0.0, %v3220
      %v3222 = vpop.f32.mrf.mxu0
      %v3223 = vadd.f32 0.0, %v3222
      %3224 = vmatprep.mubr.f32.mxu0 0.0
      %3225 = vmatmul.mubr.f32.gmra.mxu0 %v3008
      %v3226 = vpop.f32.mrf.mxu0
      %v3227 = vadd.f32 0.0, %v3226
      %v3228 = vpop.f32.mrf.mxu0
      %v3229 = vadd.f32 0.0, %v3228
      %3230 = vmatprep.mubr.f32.mxu0 0.0
      %3231 = vmatmul.mubr.f32.gmra.mxu0 %v3011
      %v3232 = vpop.f32.mrf.mxu0
      %v3233 = vadd.f32 0.0, %v3232
      %v3234 = vpop.f32.mrf.mxu0
      %v3235 = vadd.f32 0.0, %v3234
      %3236 = vmatprep.mubr.f32.mxu0 0.0
      %3237 = vmatmul.mubr.f32.gmra.mxu0 %v3014
      %v3238 = vpop.f32.mrf.mxu0
      %v3239 = vadd.f32 0.0, %v3238
      %v3240 = vpop.f32.mrf.mxu0
      %v3241 = vadd.f32 0.0, %v3240
      %3242 = vmatprep.mubr.f32.mxu0 0.0
      %3243 = vmatmul.mubr.f32.gmra.mxu0 %v3017
      %v3244 = vpop.f32.mrf.mxu0
      %v3245 = vadd.f32 0.0, %v3244
      %v3246 = vpop.f32.mrf.mxu0
      %v3247 = vadd.f32 0.0, %v3246
      %3248 = vmatprep.mubr.f32.mxu0 0.0
      %3249 = vmatmul.mubr.f32.gmra.mxu0 %v3020
      %v3250 = vpop.f32.mrf.mxu0
      %v3251 = vadd.f32 0.0, %v3250
      %v3252 = vpop.f32.mrf.mxu0
      %v3253 = vadd.f32 0.0, %v3252
      %3254 = vmatprep.mubr.f32.mxu0 0.0
      %3255 = vmatmul.mubr.f32.gmra.mxu0 %v3023
      %v3256 = vpop.f32.mrf.mxu0
      %v3257 = vadd.f32 0.0, %v3256
      %v3258 = vpop.f32.mrf.mxu0
      %v3259 = vadd.f32 0.0, %v3258
      %3260 = vmatprep.mubr.f32.mxu0 0.0
      %3261 = vmatmul.mubr.f32.gmra.mxu0 %v3026
      %v3262 = vpop.f32.mrf.mxu0
      %v3263 = vadd.f32 0.0, %v3262
      %v3264 = vpop.f32.mrf.mxu0
      %v3265 = vadd.f32 0.0, %v3264
      %3266 = vmatprep.mubr.f32.mxu0 0.0
      %3267 = vmatmul.mubr.f32.gmra.mxu0 %v3029
      %v3268 = vpop.f32.mrf.mxu0
      %v3269 = vadd.f32 0.0, %v3268
      %v3270 = vpop.f32.mrf.mxu0
      %v3271 = vadd.f32 0.0, %v3270
      %3272 = vmatprep.mubr.f32.mxu0 0.0
      %3273 = vmatmul.mubr.f32.gmra.mxu0 %v3032
      %v3274 = vpop.f32.mrf.mxu0
      %v3275 = vadd.f32 0.0, %v3274
      %v3276 = vpop.f32.mrf.mxu0
      %v3277 = vadd.f32 0.0, %v3276
      %3278 = vmatprep.mubr.f32.mxu0 0.0
      %3279 = vmatmul.mubr.f32.gmra.mxu0 %v3035
      %v3280 = vpop.f32.mrf.mxu0
      %v3281 = vadd.f32 0.0, %v3280
      %v3282 = vpop.f32.mrf.mxu0
      %v3283 = vadd.f32 0.0, %v3282
      %3284 = vmatprep.mubr.f32.mxu0 0.0
      %3285 = vmatmul.mubr.f32.gmra.mxu0 %v3038
      %v3286 = vpop.f32.mrf.mxu0
      %v3287 = vadd.f32 0.0, %v3286
      %v3288 = vpop.f32.mrf.mxu0
      %v3289 = vadd.f32 0.0, %v3288
      %3290 = vmatprep.mubr.f32.mxu0 0.0
      %3291 = vmatmul.mubr.f32.gmra.mxu0 %v3041
      %v3292 = vpop.f32.mrf.mxu0
      %v3293 = vadd.f32 0.0, %v3292
      %v3294 = vpop.f32.mrf.mxu0
      %v3295 = vadd.f32 0.0, %v3294
      %3296 = vmatprep.mubr.f32.mxu0 0.0
      %3297 = vmatmul.mubr.f32.gmra.mxu0 %v3044
      %v3298 = vpop.f32.mrf.mxu0
      %v3299 = vadd.f32 0.0, %v3298
      %v3300 = vpop.f32.mrf.mxu0
      %v3301 = vadd.f32 0.0, %v3300
      %3302 = vdwg.mxu0
      %v3303 = vmax.f32 %v3113, %v3125
      %v3304 = vmax.f32 %v3119, %v3131
      %v3305 = vmax.f32 %v3303, %v3137
      %v3306 = vmax.f32 %v3304, %v3143
      %v3307 = vmax.f32 %v3305, %v3149
      %v3308 = vmax.f32 %v3306, %v3155
      %v3309 = vmax.f32 %v3307, %v3161
      %v3310 = vmax.f32 %v3308, %v3167
      %v3311 = vmax.f32 %v3309, %v3173
      %v3312 = vmax.f32 %v3310, %v3179
      %v3313 = vmax.f32 %v3311, %v3185
      %v3314 = vmax.f32 %v3312, %v3191
      %v3315 = vmax.f32 %v3313, %v3197
      %v3316 = vmax.f32 %v3314, %v3203
      %v3317 = vmax.f32 %v3315, %v3209
      %v3318 = vmax.f32 %v3316, %v3215
      %v3319 = vmax.f32 %v3317, %v3221
      %v3320 = vmax.f32 %v3318, %v3227
      %v3321 = vmax.f32 %v3319, %v3233
      %v3322 = vmax.f32 %v3320, %v3239
      %v3323 = vmax.f32 %v3321, %v3245
      %v3324 = vmax.f32 %v3322, %v3251
      %v3325 = vmax.f32 %v3323, %v3257
      %v3326 = vmax.f32 %v3324, %v3263
      %v3327 = vmax.f32 %v3325, %v3269
      %v3328 = vmax.f32 %v3326, %v3275
      %v3329 = vmax.f32 %v3327, %v3281
      %v3330 = vmax.f32 %v3328, %v3287
      %v3331 = vmax.f32 %v3329, %v3293
      %v3332 = vmax.f32 %v3330, %v3299
      %v3333 = vmax.f32 %v3331, %v3332
      %v3334 = vrot.slane %v3333, 4
      %v3335 = vmax.f32 %v3333, %v3334
      %v3336 = vrot.slane %v3335, 2
      %v3337 = vmax.f32 %v3335, %v3336
      %v3338 = vrot.slane %v3337, 1
      %v3339 = vmax.f32 %v3337, %v3338
      %v3340 = vmax.f32 %v3115, %v3127
      %v3341 = vmax.f32 %v3121, %v3133
      %v3342 = vmax.f32 %v3340, %v3139
      %v3343 = vmax.f32 %v3341, %v3145
      %v3344 = vmax.f32 %v3342, %v3151
      %v3345 = vmax.f32 %v3343, %v3157
      %v3346 = vmax.f32 %v3344, %v3163
      %v3347 = vmax.f32 %v3345, %v3169
      %v3348 = vmax.f32 %v3346, %v3175
      %v3349 = vmax.f32 %v3347, %v3181
      %v3350 = vmax.f32 %v3348, %v3187
      %v3351 = vmax.f32 %v3349, %v3193
      %v3352 = vmax.f32 %v3350, %v3199
      %v3353 = vmax.f32 %v3351, %v3205
      %v3354 = vmax.f32 %v3352, %v3211
      %v3355 = vmax.f32 %v3353, %v3217
      %v3356 = vmax.f32 %v3354, %v3223
      %v3357 = vmax.f32 %v3355, %v3229
      %v3358 = vmax.f32 %v3356, %v3235
      %v3359 = vmax.f32 %v3357, %v3241
      %v3360 = vmax.f32 %v3358, %v3247
      %v3361 = vmax.f32 %v3359, %v3253
      %v3362 = vmax.f32 %v3360, %v3259
      %v3363 = vmax.f32 %v3361, %v3265
      %v3364 = vmax.f32 %v3362, %v3271
      %v3365 = vmax.f32 %v3363, %v3277
      %v3366 = vmax.f32 %v3364, %v3283
      %v3367 = vmax.f32 %v3365, %v3289
      %v3368 = vmax.f32 %v3366, %v3295
      %v3369 = vmax.f32 %v3367, %v3301
      %v3370 = vmax.f32 %v3368, %v3369
      %v3371 = vrot.slane %v3370, 4
      %v3372 = vmax.f32 %v3370, %v3371
      %v3373 = vrot.slane %v3372, 2
      %v3374 = vmax.f32 %v3372, %v3373
      %v3375 = vrot.slane %v3374, 1
      %v3376 = vmax.f32 %v3374, %v3375
      %v3377 = vsub.f32 %v3113, %v3339
      %v3378 = vsub.f32 %v3115, %v3376
      %v3379 = vsub.f32 %v3119, %v3339
      %v3380 = vsub.f32 %v3121, %v3376
      %v3381 = vsub.f32 %v3125, %v3339
      %v3382 = vsub.f32 %v3127, %v3376
      %v3383 = vsub.f32 %v3131, %v3339
      %v3384 = vsub.f32 %v3133, %v3376
      %v3385 = vsub.f32 %v3137, %v3339
      %v3386 = vsub.f32 %v3139, %v3376
      %v3387 = vsub.f32 %v3143, %v3339
      %v3388 = vsub.f32 %v3145, %v3376
      %v3389 = vsub.f32 %v3149, %v3339
      %v3390 = vsub.f32 %v3151, %v3376
      %v3391 = vsub.f32 %v3155, %v3339
      %v3392 = vsub.f32 %v3157, %v3376
      %v3393 = vsub.f32 %v3161, %v3339
      %v3394 = vsub.f32 %v3163, %v3376
      %v3395 = vsub.f32 %v3167, %v3339
      %v3396 = vsub.f32 %v3169, %v3376
      %v3397 = vsub.f32 %v3173, %v3339
      %v3398 = vsub.f32 %v3175, %v3376
      %v3399 = vsub.f32 %v3179, %v3339
      %v3400 = vsub.f32 %v3181, %v3376
      %v3401 = vsub.f32 %v3185, %v3339
      %v3402 = vsub.f32 %v3187, %v3376
      %v3403 = vsub.f32 %v3191, %v3339
      %v3404 = vsub.f32 %v3193, %v3376
      %v3405 = vsub.f32 %v3197, %v3339
      %v3406 = vsub.f32 %v3199, %v3376
      %v3407 = vsub.f32 %v3203, %v3339
      %v3408 = vsub.f32 %v3205, %v3376
      %v3409 = vsub.f32 %v3209, %v3339
      %v3410 = vsub.f32 %v3211, %v3376
      %v3411 = vsub.f32 %v3215, %v3339
      %v3412 = vsub.f32 %v3217, %v3376
      %v3413 = vsub.f32 %v3221, %v3339
      %v3414 = vsub.f32 %v3223, %v3376
      %v3415 = vsub.f32 %v3227, %v3339
      %v3416 = vsub.f32 %v3229, %v3376
      %v3417 = vsub.f32 %v3233, %v3339
      %v3418 = vsub.f32 %v3235, %v3376
      %v3419 = vsub.f32 %v3239, %v3339
      %v3420 = vsub.f32 %v3241, %v3376
      %v3421 = vsub.f32 %v3245, %v3339
      %v3422 = vsub.f32 %v3247, %v3376
      %v3423 = vsub.f32 %v3251, %v3339
      %v3424 = vsub.f32 %v3253, %v3376
      %v3425 = vsub.f32 %v3257, %v3339
      %v3426 = vsub.f32 %v3259, %v3376
      %v3427 = vsub.f32 %v3263, %v3339
      %v3428 = vsub.f32 %v3265, %v3376
      %v3429 = vsub.f32 %v3269, %v3339
      %v3430 = vsub.f32 %v3271, %v3376
      %v3431 = vsub.f32 %v3275, %v3339
      %v3432 = vsub.f32 %v3277, %v3376
      %v3433 = vsub.f32 %v3281, %v3339
      %v3434 = vsub.f32 %v3283, %v3376
      %v3435 = vsub.f32 %v3287, %v3339
      %v3436 = vsub.f32 %v3289, %v3376
      %v3437 = vsub.f32 %v3293, %v3339
      %v3438 = vsub.f32 %v3295, %v3376
      %v3439 = vsub.f32 %v3299, %v3339
      %v3440 = vsub.f32 %v3301, %v3376
      %v3441 = vmul.f32 %v3377, 1.442695
      %v3442 = vpow.pop %v3441
      %v3443 = vmul.f32 %v3378, 1.442695
      %v3444 = vpow.pop %v3443
      %v3445 = vmul.f32 %v3379, 1.442695
      %v3446 = vpow.pop %v3445
      %v3447 = vmul.f32 %v3380, 1.442695
      %v3448 = vpow.pop %v3447
      %v3449 = vmul.f32 %v3381, 1.442695
      %v3450 = vpow.pop %v3449
      %v3451 = vmul.f32 %v3382, 1.442695
      %v3452 = vpow.pop %v3451
      %v3453 = vmul.f32 %v3383, 1.442695
      %v3454 = vpow.pop %v3453
      %v3455 = vmul.f32 %v3384, 1.442695
      %v3456 = vpow.pop %v3455
      %v3457 = vmul.f32 %v3385, 1.442695
      %v3458 = vpow.pop %v3457
      %v3459 = vmul.f32 %v3386, 1.442695
      %v3460 = vpow.pop %v3459
      %v3461 = vmul.f32 %v3387, 1.442695
      %v3462 = vpow.pop %v3461
      %v3463 = vmul.f32 %v3388, 1.442695
      %v3464 = vpow.pop %v3463
      %v3465 = vmul.f32 %v3389, 1.442695
      %v3466 = vpow.pop %v3465
      %v3467 = vmul.f32 %v3390, 1.442695
      %v3468 = vpow.pop %v3467
      %v3469 = vmul.f32 %v3391, 1.442695
      %v3470 = vpow.pop %v3469
      %v3471 = vmul.f32 %v3392, 1.442695
      %v3472 = vpow.pop %v3471
      %v3473 = vmul.f32 %v3393, 1.442695
      %v3474 = vpow.pop %v3473
      %v3475 = vmul.f32 %v3394, 1.442695
      %v3476 = vpow.pop %v3475
      %v3477 = vmul.f32 %v3395, 1.442695
      %v3478 = vpow.pop %v3477
      %v3479 = vmul.f32 %v3396, 1.442695
      %v3480 = vpow.pop %v3479
      %v3481 = vmul.f32 %v3397, 1.442695
      %v3482 = vpow.pop %v3481
      %v3483 = vmul.f32 %v3398, 1.442695
      %v3484 = vpow.pop %v3483
      %v3485 = vmul.f32 %v3399, 1.442695
      %v3486 = vpow.pop %v3485
      %v3487 = vmul.f32 %v3400, 1.442695
      %v3488 = vpow.pop %v3487
      %v3489 = vmul.f32 %v3401, 1.442695
      %v3490 = vpow.pop %v3489
      %v3491 = vmul.f32 %v3402, 1.442695
      %v3492 = vpow.pop %v3491
      %v3493 = vmul.f32 %v3403, 1.442695
      %v3494 = vpow.pop %v3493
      %v3495 = vmul.f32 %v3404, 1.442695
      %v3496 = vpow.pop %v3495
      %v3497 = vmul.f32 %v3405, 1.442695
      %v3498 = vpow.pop %v3497
      %v3499 = vmul.f32 %v3406, 1.442695
      %v3500 = vpow.pop %v3499
      %v3501 = vmul.f32 %v3407, 1.442695
      %v3502 = vpow.pop %v3501
      %v3503 = vmul.f32 %v3408, 1.442695
      %v3504 = vpow.pop %v3503
      %v3505 = vmul.f32 %v3409, 1.442695
      %v3506 = vpow.pop %v3505
      %v3507 = vmul.f32 %v3410, 1.442695
      %v3508 = vpow.pop %v3507
      %v3509 = vmul.f32 %v3411, 1.442695
      %v3510 = vpow.pop %v3509
      %v3511 = vmul.f32 %v3412, 1.442695
      %v3512 = vpow.pop %v3511
      %v3513 = vmul.f32 %v3413, 1.442695
      %v3514 = vpow.pop %v3513
      %v3515 = vmul.f32 %v3414, 1.442695
      %v3516 = vpow.pop %v3515
      %v3517 = vmul.f32 %v3415, 1.442695
      %v3518 = vpow.pop %v3517
      %v3519 = vmul.f32 %v3416, 1.442695
      %v3520 = vpow.pop %v3519
      %v3521 = vmul.f32 %v3417, 1.442695
      %v3522 = vpow.pop %v3521
      %v3523 = vmul.f32 %v3418, 1.442695
      %v3524 = vpow.pop %v3523
      %v3525 = vmul.f32 %v3419, 1.442695
      %v3526 = vpow.pop %v3525
      %v3527 = vmul.f32 %v3420, 1.442695
      %v3528 = vpow.pop %v3527
      %v3529 = vmul.f32 %v3421, 1.442695
      %v3530 = vpow.pop %v3529
      %v3531 = vmul.f32 %v3422, 1.442695
      %v3532 = vpow.pop %v3531
      %v3533 = vmul.f32 %v3423, 1.442695
      %v3534 = vpow.pop %v3533
      %v3535 = vmul.f32 %v3424, 1.442695
      %v3536 = vpow.pop %v3535
      %v3537 = vmul.f32 %v3425, 1.442695
      %v3538 = vpow.pop %v3537
      %v3539 = vmul.f32 %v3426, 1.442695
      %v3540 = vpow.pop %v3539
      %v3541 = vmul.f32 %v3427, 1.442695
      %v3542 = vpow.pop %v3541
      %v3543 = vmul.f32 %v3428, 1.442695
      %v3544 = vpow.pop %v3543
      %v3545 = vmul.f32 %v3429, 1.442695
      %v3546 = vpow.pop %v3545
      %v3547 = vmul.f32 %v3430, 1.442695
      %v3548 = vpow.pop %v3547
      %v3549 = vmul.f32 %v3431, 1.442695
      %v3550 = vpow.pop %v3549
      %v3551 = vmul.f32 %v3432, 1.442695
      %v3552 = vpow.pop %v3551
      %v3553 = vmul.f32 %v3433, 1.442695
      %v3554 = vpow.pop %v3553
      %v3555 = vmul.f32 %v3434, 1.442695
      %v3556 = vpow.pop %v3555
      %v3557 = vmul.f32 %v3435, 1.442695
      %v3558 = vpow.pop %v3557
      %v3559 = vmul.f32 %v3436, 1.442695
      %v3560 = vpow.pop %v3559
      %v3561 = vmul.f32 %v3437, 1.442695
      %v3562 = vpow.pop %v3561
      %v3563 = vmul.f32 %v3438, 1.442695
      %v3564 = vpow.pop %v3563
      %v3565 = vmul.f32 %v3439, 1.442695
      %v3566 = vpow.pop %v3565
      %v3567 = vmul.f32 %v3440, 1.442695
      %v3568 = vpow.pop %v3567
      %v3569 = vadd.f32 %v3442, %v3446
      %v3570 = vadd.f32 %v3569, %v3450
      %v3571 = vadd.f32 %v3570, %v3454
      %v3572 = vadd.f32 %v3571, %v3458
      %v3573 = vadd.f32 %v3572, %v3462
      %v3574 = vadd.f32 %v3573, %v3466
      %v3575 = vadd.f32 %v3574, %v3470
      %v3576 = vadd.f32 %v3575, %v3474
      %v3577 = vadd.f32 %v3576, %v3478
      %v3578 = vadd.f32 %v3577, %v3482
      %v3579 = vadd.f32 %v3578, %v3486
      %v3580 = vadd.f32 %v3579, %v3490
      %v3581 = vadd.f32 %v3580, %v3494
      %v3582 = vadd.f32 %v3581, %v3498
      %v3583 = vadd.f32 %v3582, %v3502
      %v3584 = vadd.f32 %v3583, %v3506
      %v3585 = vadd.f32 %v3584, %v3510
      %v3586 = vadd.f32 %v3585, %v3514
      %v3587 = vadd.f32 %v3586, %v3518
      %v3588 = vadd.f32 %v3587, %v3522
      %v3589 = vadd.f32 %v3588, %v3526
      %v3590 = vadd.f32 %v3589, %v3530
      %v3591 = vadd.f32 %v3590, %v3534
      %v3592 = vadd.f32 %v3591, %v3538
      %v3593 = vadd.f32 %v3592, %v3542
      %v3594 = vadd.f32 %v3593, %v3546
      %v3595 = vadd.f32 %v3594, %v3550
      %v3596 = vadd.f32 %v3595, %v3554
      %v3597 = vadd.f32 %v3596, %v3558
      %v3598 = vadd.f32 %v3597, %v3562
      %v3599 = vadd.f32 %v3598, %v3566
      %v3600 = vrot.slane %v3599, 4
      %v3601 = vadd.f32 %v3599, %v3600
      %v3602 = vrot.slane %v3601, 2
      %v3603 = vadd.f32 %v3601, %v3602
      %v3604 = vrot.slane %v3603, 1
      %v3605 = vadd.f32 %v3603, %v3604
      %v3606 = vadd.f32 %v3444, %v3448
      %v3607 = vadd.f32 %v3606, %v3452
      %v3608 = vadd.f32 %v3607, %v3456
      %v3609 = vadd.f32 %v3608, %v3460
      %v3610 = vadd.f32 %v3609, %v3464
      %v3611 = vadd.f32 %v3610, %v3468
      %v3612 = vadd.f32 %v3611, %v3472
      %v3613 = vadd.f32 %v3612, %v3476
      %v3614 = vadd.f32 %v3613, %v3480
      %v3615 = vadd.f32 %v3614, %v3484
      %v3616 = vadd.f32 %v3615, %v3488
      %v3617 = vadd.f32 %v3616, %v3492
      %v3618 = vadd.f32 %v3617, %v3496
      %v3619 = vadd.f32 %v3618, %v3500
      %v3620 = vadd.f32 %v3619, %v3504
      %v3621 = vadd.f32 %v3620, %v3508
      %v3622 = vadd.f32 %v3621, %v3512
      %v3623 = vadd.f32 %v3622, %v3516
      %v3624 = vadd.f32 %v3623, %v3520
      %v3625 = vadd.f32 %v3624, %v3524
      %v3626 = vadd.f32 %v3625, %v3528
      %v3627 = vadd.f32 %v3626, %v3532
      %v3628 = vadd.f32 %v3627, %v3536
      %v3629 = vadd.f32 %v3628, %v3540
      %v3630 = vadd.f32 %v3629, %v3544
      %v3631 = vadd.f32 %v3630, %v3548
      %v3632 = vadd.f32 %v3631, %v3552
      %v3633 = vadd.f32 %v3632, %v3556
      %v3634 = vadd.f32 %v3633, %v3560
      %v3635 = vadd.f32 %v3634, %v3564
      %v3636 = vadd.f32 %v3635, %v3568
      %v3637 = vrot.slane %v3636, 4
      %v3638 = vadd.f32 %v3636, %v3637
      %v3639 = vrot.slane %v3638, 2
      %v3640 = vadd.f32 %v3638, %v3639
      %v3641 = vrot.slane %v3640, 1
      %v3642 = vadd.f32 %v3640, %v3641
      %v3643 = vpack.c.bf16 %v373, %v373
      %v3644 = vpack.c.bf16 %v375, %v375
      %v3645 = vpack.c.bf16 %v3446, %v3442
      %v3646 = vpack.c.bf16 %v3448, %v3444
      %v3647 = vpack.c.bf16 %v3454, %v3450
      %v3648 = vpack.c.bf16 %v3456, %v3452
      %v3649 = vpack.c.bf16 %v3462, %v3458
      %v3650 = vpack.c.bf16 %v3464, %v3460
      %v3651 = vpack.c.bf16 %v3470, %v3466
      %v3652 = vpack.c.bf16 %v3472, %v3468
      %v3653 = vpack.c.bf16 %v3478, %v3474
      %v3654 = vpack.c.bf16 %v3480, %v3476
      %v3655 = vpack.c.bf16 %v3486, %v3482
      %v3656 = vpack.c.bf16 %v3488, %v3484
      %v3657 = vpack.c.bf16 %v3494, %v3490
      %v3658 = vpack.c.bf16 %v3496, %v3492
      %v3659 = vpack.c.bf16 %v3502, %v3498
      %v3660 = vpack.c.bf16 %v3504, %v3500
      %v3661 = vpack.c.bf16 %v3510, %v3506
      %v3662 = vpack.c.bf16 %v3512, %v3508
      %v3663 = vpack.c.bf16 %v3518, %v3514
      %v3664 = vpack.c.bf16 %v3520, %v3516
      %v3665 = vpack.c.bf16 %v3526, %v3522
      %v3666 = vpack.c.bf16 %v3528, %v3524
      %v3667 = vpack.c.bf16 %v3534, %v3530
      %v3668 = vpack.c.bf16 %v3536, %v3532
      %v3669 = vpack.c.bf16 %v3542, %v3538
      %v3670 = vpack.c.bf16 %v3544, %v3540
      %v3671 = vpack.c.bf16 %v3550, %v3546
      %v3672 = vpack.c.bf16 %v3552, %v3548
      %v3673 = vpack.c.bf16 %v3558, %v3554
      %v3674 = vpack.c.bf16 %v3560, %v3556
      %v3675 = vpack.c.bf16 %v3566, %v3562
      %v3676 = vpack.c.bf16 %v3568, %v3564
      %3677 = vmatprep.subr.bf16.mxu0 %v3660
      %3678 = vmatpush1.bf16.msra.mxu0 %v3659
      %3679 = vmatprep.subr.bf16.mxu0 %v3658
      %3680 = vmatpush1.bf16.msra.mxu0 %v3657
      %3681 = vmatprep.subr.bf16.mxu0 %v3656
      %3682 = vmatpush1.bf16.msra.mxu0 %v3655
      %3683 = vmatprep.subr.bf16.mxu0 %v3654
      %3684 = vmatpush1.bf16.msra.mxu0 %v3653
      %3685 = vmatprep.subr.bf16.mxu0 %v3652
      %3686 = vmatpush1.bf16.msra.mxu0 %v3651
      %3687 = vmatprep.subr.bf16.mxu0 %v3650
      %3688 = vmatpush1.bf16.msra.mxu0 %v3649
      %3689 = vmatprep.subr.bf16.mxu0 %v3648
      %3690 = vmatpush1.bf16.msra.mxu0 %v3647
      %3691 = vmatprep.subr.bf16.mxu0 %v3646
      %3692 = vmatpush1.bf16.msra.mxu0 %v3645
      %3693 = vmatprep.subr.bf16.mxu0 %v3676
      %3694 = vmatpush2.bf16.msra.mxu0 %v3675
      %3695 = vmatprep.subr.bf16.mxu0 %v3674
      %3696 = vmatpush2.bf16.msra.mxu0 %v3673
      %3697 = vmatprep.subr.bf16.mxu0 %v3672
      %3698 = vmatpush2.bf16.msra.mxu0 %v3671
      %3699 = vmatprep.subr.bf16.mxu0 %v3670
      %3700 = vmatpush2.bf16.msra.mxu0 %v3669
      %3701 = vmatprep.subr.bf16.mxu0 %v3668
      %3702 = vmatpush2.bf16.msra.mxu0 %v3667
      %3703 = vmatprep.subr.bf16.mxu0 %v3666
      %3704 = vmatpush2.bf16.msra.mxu0 %v3665
      %3705 = vmatprep.subr.bf16.mxu0 %v3664
      %3706 = vmatpush2.bf16.msra.mxu0 %v3663
      %3707 = vmatprep.subr.bf16.mxu0 %v3662
      %3708 = vmatpush2.bf16.msra.mxu0 %v3661
      %3709 = vmatprep.mubr.bf16.mxu0 %v3644
      %3710 = vmatmul.mubr.bf16.gmra.mxu0 %v3643
      %v3711 = vpop.f32.mrf.mxu0
      %v3712 = vadd.f32 0.0, %v3711
      %v3713 = vpop.f32.mrf.mxu0
      %v3714 = vadd.f32 0.0, %v3713
      %v3715 = vpop.f32.mrf.mxu0
      %v3716 = vpop.f32.mrf.mxu0
      %3717 = vdwg.mxu0
      %v3718 = vrcp.pop %v3605
      %v3719 = vrcp.pop %v3642
      %v3720 = vmul.f32 %v3712, %v3718
      %v3721 = vmul.f32 %v3714, %v3719
      %v3722 = vld [vmem:[%s2] sm:$0xf]
      %v3723 = vld [vmem:[%s2 + $0x4] sm:$0xf]
      %v3724 = vld [vmem:[%s2 + $0x8] sm:$0xf]
      %v3725 = vld [vmem:[%s2 + $0xc] sm:$0xf]
      %v3726 = vpack.c.bf16 %v2048, %v1212
      %v3727 = vpack.c.bf16 %v2049, %v1213
      %v3728 = vpack.c.bf16 %v3720, %v2884
      %v3729 = vpack.c.bf16 %v3721, %v2885
      %v3730 = vld [vmem:[%s3] sm:$0xff]
      %v3731 = vld [vmem:[%s3 + $0x8] sm:$0xff]
      %v3732 = vld [vmem:[%s3 + $0x10] sm:$0xff]
      %v3733 = vld [vmem:[%s3 + $0x18] sm:$0xff]
      %3735 = vset.pattern.permute.xlu0 0
      %3736 = vperm.xlu0 %3735, %v3730
      %v3737 = vpop.permute.xlu0 %3736
      %3740 = vset.pattern.permute.xlu0 0
      %3741 = vperm.xlu0 %3740, %v3731
      %v3742 = vpop.permute.xlu0 %3741
      %3745 = vset.pattern.permute.xlu0 0
      %3746 = vperm.xlu0 %3745, %v3732
      %v3747 = vpop.permute.xlu0 %3746
      %3750 = vset.pattern.permute.xlu0 0
      %3751 = vperm.xlu0 %3750, %v3733
      %v3752 = vpop.permute.xlu0 %3751
      %v3758 = vunpack.c.l.b16 %v3722
      %v3759 = vunpack.c.l.b16 %v3723
      %v3760 = vunpack.c.l.b16 %v3724
      %v3761 = vunpack.c.l.b16 %v3725
      %v3762 = vpack.c.b16 %v3759, %v3758
      %v3763 = vpack.c.b16 %v3761, %v3760
      %v3765 = vsel %vm265, %v3762, 0
      %v3768 = vsel %vm265, %v3763, 0
      %3770 = vmatprep.subr.bf16.mxu0 0
      %3771 = vmatpush1.bf16.msra.mxu0 0
      %3772 = vmatprep.subr.bf16.mxu0 0
      %3773 = vmatpush1.bf16.msra.mxu0 0
      %3774 = vmatprep.subr.bf16.mxu0 0
      %3775 = vmatpush1.bf16.msra.mxu0 0
      %3776 = vmatprep.subr.bf16.mxu0 0
      %3777 = vmatpush1.bf16.msra.mxu0 0
      %3778 = vmatprep.subr.bf16.mxu0 0
      %3779 = vmatpush1.bf16.msra.mxu0 0
      %3780 = vmatprep.subr.bf16.mxu0 0
      %3781 = vmatpush1.bf16.msra.mxu0 0
      %3782 = vmatprep.subr.bf16.mxu0 %v3729
      %3783 = vmatpush1.bf16.msra.mxu0 %v3728
      %3784 = vmatprep.subr.bf16.mxu0 %v3727
      %3785 = vmatpush1.bf16.msra.mxu0 %v3726
      %3786 = vmatprep.subr.bf16.mxu0 0
      %3787 = vmatpush2.bf16.msra.mxu0 0
      %3788 = vmatprep.subr.bf16.mxu0 0
      %3789 = vmatpush2.bf16.msra.mxu0 0
      %3790 = vmatprep.subr.bf16.mxu0 0
      %3791 = vmatpush2.bf16.msra.mxu0 0
      %3792 = vmatprep.subr.bf16.mxu0 0
      %3793 = vmatpush2.bf16.msra.mxu0 0
      %3794 = vmatprep.subr.bf16.mxu0 0
      %3795 = vmatpush2.bf16.msra.mxu0 0
      %3796 = vmatprep.subr.bf16.mxu0 0
      %3797 = vmatpush2.bf16.msra.mxu0 0
      %3798 = vmatprep.subr.bf16.mxu0 0
      %3799 = vmatpush2.bf16.msra.mxu0 0
      %3800 = vmatprep.subr.bf16.mxu0 0
      %3801 = vmatpush2.bf16.msra.mxu0 0
      %3802 = vmatprep.mubr.bf16.mxu0 0
      %3803 = vmatmul.mubr.bf16.gmra.mxu0 %v3765
      %v3804 = vpop.f32.mrf.mxu0
      %v3805 = vadd.f32 %v3737, %v3804
      %v3806 = vpop.f32.mrf.mxu0
      %v3807 = vadd.f32 %v3737, %v3806
      %v3808 = vpop.f32.mrf.mxu0
      %v3809 = vadd.f32 %v3742, %v3808
      %v3810 = vpop.f32.mrf.mxu0
      %v3811 = vadd.f32 %v3742, %v3810
      %3812 = vmatprep.mubr.bf16.mxu0 0
      %3813 = vmatmul.mubr.bf16.gmra.mxu0 %v3768
      %v3814 = vpop.f32.mrf.mxu0
      %v3815 = vadd.f32 %v3747, %v3814
      %v3816 = vpop.f32.mrf.mxu0
      %v3817 = vadd.f32 %v3747, %v3816
      %v3818 = vpop.f32.mrf.mxu0
      %v3819 = vadd.f32 %v3752, %v3818
      %v3820 = vpop.f32.mrf.mxu0
      %v3821 = vadd.f32 %v3752, %v3820
      %3822 = vdwg.mxu0
      %3823 = vst [vmem:[%s197] sm:$0xff] %v3805
      %3824 = vst [vmem:[%s197 + $0x8] sm:$0xff] %v3807
      %3825 = vst [vmem:[%s197 + $0x10] sm:$0xff] %v3809
      %3826 = vst [vmem:[%s197 + $0x18] sm:$0xff] %v3811
      %3827 = vst [vmem:[%s197 + $0x20] sm:$0xff] %v3815
      %3828 = vst [vmem:[%s197 + $0x28] sm:$0xff] %v3817
      %3829 = vst [vmem:[%s197 + $0x30] sm:$0xff] %v3819
      %3830 = vst [vmem:[%s197 + $0x38] sm:$0xff] %v3821
      %p3831 = scmp.lt.s32.totalorder %s15, 1
      %s3832 = scalar_select %p3831, %s15, 1
      %s3833 = smul.addr %s3832, 8
      %s3834 = smul.addr %s3833, 8
      %s3835 = scalar_lea.vmem %s4, %s3834
      // Predicated region
      $region37: #{attention_forward.1} parent=35 // pred_check
        %p3836 = pneg %p122
      $region38: #{attention_forward.1} parent=35 // pred_check_branch
        %3838 = sbr.rel (%p3836) target = $region40
      $region39: #{attention_forward.1} parent=35 // pred_region
        _
      $region40: #{attention_forward.1} parent=35 // pred_fallthru
        _
    $region36: #{attention_forward.1} parent=5 // pred_fallthru
      _
    %p3839 = scmp.le.s32.totalorder 2, %s10
    // Predicated region
    $region41: #{attention_forward.1} parent=5 // pred_check
      %p3840 = pneg %p3839
    $region42: #{attention_forward.1} parent=5 // pred_check_branch
      %3842 = sbr.rel (%p3840) target = $region44
    $region43: #{attention_forward.1} parent=5 // pred_region
      %s3843 = ssub.s32 %s10, 2
      // Predicated region
      $region45: #{attention_forward.1} parent=43 // pred_check
        %p3844 = pneg %p128
      $region46: #{attention_forward.1} parent=43 // pred_check_branch
        %3846 = sbr.rel (%p3844) target = $region48
      $region47: #{attention_forward.1} parent=43 // pred_region
        %p3847 = scmp.lt.s32.totalorder %s16, 1
        %s3848 = scalar_select %p3847, %s16, 1
        %s3849 = smul.addr %s3848, 8
        %s3850 = smul.addr %s3849, 8
        %s3851 = scalar_lea.vmem %s4, %s3850
      $region48: #{attention_forward.1} parent=43 // pred_fallthru
        _
    $region44: #{attention_forward.1} parent=5 // pred_fallthru
      _
  $region6: #{attention_forward.1} parent=0 // loop_footer
    %s14 = sadd.s32 1, %s10
  $region7: #{attention_forward.1} parent=0 // loop_footer_branch
    %9 = sbr.rel target = $region3
  $region8: #{attention_forward.1} parent=0 // loop_exit
    _

</llo_original>
